<compile_context>
chip_gen: v5e
topology: v5e:2x2
jax: 0.10.0
libtpu: 0.0.40
codegen_flags: <defaults>
</compile_context>

<pallas_src>
import math
import functools

import jax
import jax.numpy as jnp
from jax.experimental import pallas as pl
from jax.experimental.pallas import tpu as pltpu


_MATMUL_DTYPE = jnp.bfloat16   # MXU operand dtype (accumulation is always f32)
_NEG = -1e30                   # finite "-inf" for masking (NaN-free padded rows)
_LN_EPS = 1e-5


# ----------------------------------------------------------------------------
# in-kernel helpers
# ----------------------------------------------------------------------------

def _mm(a, b):
    """(M, K) @ (K, N) on the MXU, bf16 operands, f32 accumulation."""
    return jax.lax.dot_general(
        a.astype(_MATMUL_DTYPE), b.astype(_MATMUL_DTYPE),
        (((1,), (0,)), ((), ())), preferred_element_type=jnp.float32)


def _mm_nt(a, b):
    """(M, K) @ (N, K)^T on the MXU, bf16 operands, f32 accumulation."""
    return jax.lax.dot_general(
        a.astype(_MATMUL_DTYPE), b.astype(_MATMUL_DTYPE),
        (((1,), (1,)), ((), ())), preferred_element_type=jnp.float32)


def _softmax_last(x):
    m = jnp.max(x, axis=-1, keepdims=True)
    e = jnp.exp(x - m)
    return e * pl.reciprocal(jnp.sum(e, axis=-1, keepdims=True), approx=True)


def _layer_norm(x, g, b):
    mu = jnp.mean(x, axis=-1, keepdims=True)
    d = x - mu
    var = jnp.mean(d * d, axis=-1, keepdims=True)
    return d * jax.lax.rsqrt(var + _LN_EPS) * g + b


# ----------------------------------------------------------------------------
# Pallas kernels (one batch element per grid step)
# ----------------------------------------------------------------------------

def _self_attn_block_kernel(tgt_ref, qpos_ref, mask_ref,
                            wqk_ref, bqk_ref, wv_ref, bv_ref,
                            wo_ref, bo_ref, g_ref, beta_ref,
                            out_ref, *, n_heads, scale):
    x = tgt_ref[0]                              # (Lq, D) f32
    qk_in = x + qpos_ref[0]                     # (Lq, D) : tgt + query_pos
    Lq, D = x.shape
    dph = D // n_heads

    qk = _mm(qk_in, wqk_ref[...]) + bqk_ref[...]   # fused Q|K proj -> (Lq, 2D)
    v = _mm(x, wv_ref[...]) + bv_ref[...]          # V proj from tgt -> (Lq, D)
    valid = mask_ref[0] > 0.5                      # (1, Lq) keys-valid
    wo = wo_ref[...]                               # (D, D) bf16, VMEM resident

    t2 = jnp.zeros((Lq, D), jnp.float32)
    for h in range(n_heads):                       # static, unrolled
        lo, hi = h * dph, (h + 1) * dph
        q_h = qk[:, lo:hi] * scale                 # (Lq, dph)  (scaled q)
        k_h = qk[:, D + lo:D + hi]                 # (Lq, dph)
        v_h = v[:, lo:hi]                          # (Lq, dph)
        s_h = jnp.where(valid, _mm_nt(q_h, k_h), _NEG)   # (Lq, Lq)
        w_h = _softmax_last(s_h)                   # dropout == identity (eval)
        ctx_h = _mm(w_h, v_h)                      # (Lq, dph)
        # out_lin distributes over head blocks: sum_h ctx_h @ Wo[h*dph:...]
        t2 = t2 + _mm(ctx_h, wo[lo:hi, :])
    t2 = t2 + bo_ref[...]
    out_ref[0] = _layer_norm(x + t2, g_ref[...], beta_ref[...])


def _cross_attn_block_kernel(tgt_ref, qpos_ref, mem_ref, pos_ref, mask_ref,
                             wq_ref, bq_ref, wk_ref, bk_ref, wv_ref, bv_ref,
                             wfck_ref, bfck_ref, wlg_ref, blg_ref,
                             wo_ref, bo_ref, g_ref, beta_ref,
                             out_ref, catt_ref, wword_ref, *, n_heads, scale):
    x = tgt_ref[0]                              # (Lq, D) : tgt after norm1
    q_in = x + qpos_ref[0]                      # query  = tgt + query_pos
    mem = mem_ref[0]                            # (Lk, D)
    k_in = mem + pos_ref[0]                     # key    = memory + pos
    Lq, D = x.shape
    Lk = mem.shape[0]
    dph = D // n_heads
    lin_den = 1.0 / max(Lq - 1, 1)              # guard q_length == 1

    q = _mm(q_in, wq_ref[...]) + bq_ref[...]    # (Lq, D)
    k = _mm(k_in, wk_ref[...]) + bk_ref[...]    # (Lk, D)
    v = _mm(mem, wv_ref[...]) + bv_ref[...]     # (Lk, D)
    valid = mask_ref[0] > 0.5                   # (1, Lk) keys-valid

    # ---- weights_token_K: hard (straight-through) softmax over keys of
    #      fc_k_dim(key); eval-mode forward value is the per-head one-hot.
    newk = _mm_nt(wfck_ref[...], k_in) + bfck_ref[...]       # (H, Lk)
    nk = jnp.where(valid, newk, _NEG)
    nk_max = jnp.max(nk, axis=-1, keepdims=True)
    kiota = jax.lax.broadcasted_iota(jnp.int32, nk.shape, 1)
    first_idx = jnp.min(jnp.where(nk == nk_max, kiota, Lk),
                        axis=-1, keepdims=True)              # torch-style argmax
    onehot = (kiota == first_idx).astype(jnp.float32)        # (H, Lk)
    s = jnp.sum(onehot, axis=0, keepdims=True)               # sum over heads
    wtk = s * pl.reciprocal(jnp.sum(s, axis=-1, keepdims=True) + 1e-6,
                            approx=True)                     # (1, Lk)
    wword_ref[0] = wtk

    # linspace(0, 1, Lq) as a column (matches weights' query-on-sublane layout)
    lin_col = (jax.lax.broadcasted_iota(jnp.int32, (Lq, 1), 0)
               .astype(jnp.float32) * lin_den)

    wo = wo_ref[...]                            # (D, D) bf16
    wlg = wlg_ref[...]                          # (2, Lq) bf16 (torch layout)
    blg = blg_ref[...]                          # (2, 1)  f32

    t2 = jnp.zeros((Lq, D), jnp.float32)
    catt = jnp.zeros((Lq, Lk), jnp.float32)
    for h in range(n_heads):                    # static, unrolled
        lo, hi = h * dph, (h + 1) * dph
        q_h = q[:, lo:hi] * scale
        k_h = k[:, lo:hi]
        v_h = v[:, lo:hi]
        s_h = jnp.where(valid, _mm_nt(q_h, k_h), _NEG)       # (Lq, Lk)
        w_h = _softmax_last(s_h)                             # softmax weights

        # new_weights = weights @ weights_token_K  -> (Lq, 1) column
        nw_h = jnp.sum(w_h * wtk, axis=-1, keepdims=True)
        # logit_gauss: Dropout(identity) -> Linear(Lq, 2) -> Sigmoid
        logit = jax.nn.sigmoid(
            jax.lax.dot_general(wlg, nw_h.astype(_MATMUL_DTYPE),
                                (((1,), (0,)), ((), ())),
                                preferred_element_type=jnp.float32) + blg)
        center = logit[0:1, 0:1]                             # (1, 1)
        width = jnp.maximum(logit[1:2, 0:1], 0.01) * (1.0 / 9.0)
        inv_w = pl.reciprocal(width, approx=True)
        dlt = lin_col - center
        gss = (0.3989422804014327 * inv_w) * jnp.exp(
            -(dlt * dlt) * (0.5 * inv_w * inv_w))            # (Lq, 1)
        gss = gss * pl.reciprocal(jnp.max(gss, axis=0, keepdims=True),
                                  approx=True)
        gm = jnp.max(gss, axis=0, keepdims=True)
        ge = jnp.exp(gss - gm)
        gauss = ge * pl.reciprocal(jnp.sum(ge, axis=0, keepdims=True),
                                   approx=True)              # softmax over Lq

        wre = w_h * (gauss + 1e-10)                          # re-weight
        wre = wre * pl.reciprocal(jnp.sum(wre, axis=-1, keepdims=True),
                                  approx=True)
        catt = catt + wre                                    # for weights.mean(1)
        ctx_h = _mm(wre, v_h)                                # (Lq, dph)
        t2 = t2 + _mm(ctx_h, wo[lo:hi, :])                   # out_lin per head
    t2 = t2 + bo_ref[...]
    catt_ref[0] = catt * (1.0 / n_heads)
    out_ref[0] = _layer_norm(x + t2, g_ref[...], beta_ref[...])


def _ffn_block_kernel(x_ref, w1_ref, b1_ref, w2_ref, b2_ref,
                      g_ref, beta_ref, out_ref):
    x = x_ref[0]                                             # (Lq, D)
    h = jnp.maximum(_mm(x, w1_ref[...]) + b1_ref[...], 0.0)  # relu
    y = _mm(h, w2_ref[...]) + b2_ref[...]
    out_ref[0] = _layer_norm(x + y, g_ref[...], beta_ref[...])


# ----------------------------------------------------------------------------
# wrapper (parameter plumbing + pallas_call setup only)
# ----------------------------------------------------------------------------

def q2v_decoder_layer(params, tgt, memory, tgt_key_padding_mask,
                      memory_key_padding_mask, pos, query_pos, *, nheads):
    B, Lq, D = tgt.shape
    Lk = memory.shape[1]
    H = nheads
    dph = D // H
    scale = 1.0 / math.sqrt(dph)
    mdt = _MATMUL_DTYPE
    f32 = jnp.float32

    cparams = pltpu.CompilerParams(dimension_semantics=("parallel",))

    def call(kernel, inputs, out_shape, out_specs):
        in_specs = []
        for a in inputs:
            if a.ndim == 3:   # per-batch tiled tensor / mask
                in_specs.append(
                    pl.BlockSpec((1,) + a.shape[1:], lambda b: (b, 0, 0)))
            else:             # replicated 2-D parameter, VMEM resident
                in_specs.append(pl.BlockSpec(a.shape, lambda b: (0, 0)))
        return pl.pallas_call(
            kernel,
            grid=(B,),
            in_specs=in_specs,
            out_specs=out_specs,
            out_shape=out_shape,
            compiler_params=cparams,
        )(*inputs)

    def wt(name):     # torch (out, in) -> (in, out), matmul dtype
        return params[name + '_w'].T.astype(mdt)

    def brow(name):
        b = params[name + '_b']
        return b.reshape(1, b.shape[0]).astype(f32)

    def nrm(name):
        return (params[name + '_g'].reshape(1, D).astype(f32),
                params[name + '_b'].reshape(1, D).astype(f32))

    def tile3(L, d):
        return pl.BlockSpec((1, L, d), lambda b: (b, 0, 0))

    tgt_mask = tgt_key_padding_mask.astype(f32).reshape(B, 1, Lq)   # 1 = valid
    mem_mask = memory_key_padding_mask.astype(f32).reshape(B, 1, Lk)

    # ---------------- self attention + residual + norm1 ----------------
    wqk = jnp.concatenate([params['sa_q_w'].T, params['sa_k_w'].T],
                          axis=1).astype(mdt)                       # (D, 2D)
    bqk = jnp.concatenate([params['sa_q_b'],
                           params['sa_k_b']]).reshape(1, 2 * D).astype(f32)
    g1, b1 = nrm('norm1')
    t1 = call(
        functools.partial(_self_attn_block_kernel, n_heads=H, scale=scale),
        (tgt, query_pos, tgt_mask,
         wqk, bqk, wt('sa_v'), brow('sa_v'), wt('sa_o'), brow('sa_o'), g1, b1),
        jax.ShapeDtypeStruct((B, Lq, D), f32),
        tile3(Lq, D))

    # ---------------- cross attention (Q2V) + residual + norm2 ----------------
    g2, b2 = nrm('norm2')
    t2, c_att, w_word3 = call(
        functools.partial(_cross_attn_block_kernel, n_heads=H, scale=scale),
        (t1, query_pos, memory, pos, mem_mask,
         wt('ca_q'), brow('ca_q'), wt('ca_k'), brow('ca_k'),
         wt('ca_v'), brow('ca_v'),
         params['ca_fck_w'].astype(mdt),
         params['ca_fck_b'].reshape(H, 1).astype(f32),
         params['ca_lg_w'].astype(mdt),
         params['ca_lg_b'].reshape(2, 1).astype(f32),
         wt('ca_o'), brow('ca_o'), g2, b2),
        (jax.ShapeDtypeStruct((B, Lq, D), f32),
         jax.ShapeDtypeStruct((B, Lq, Lk), f32),
         jax.ShapeDtypeStruct((B, 1, Lk), f32)),
        (tile3(Lq, D), tile3(Lq, Lk), tile3(1, Lk)))

    # ---------------- feed-forward + residual + norm3 ----------------
    FF = params['ffn_w1'].shape[0]
    g3, b3 = nrm('norm3')
    t3 = call(
        _ffn_block_kernel,
        (t2,
         params['ffn_w1'].T.astype(mdt),
         params['ffn_b1'].reshape(1, FF).astype(f32),
         params['ffn_w2'].T.astype(mdt),
         params['ffn_b2'].reshape(1, D).astype(f32),
         g3, b3),
        jax.ShapeDtypeStruct((B, Lq, D), f32),
        tile3(Lq, D))

    return t3, c_att, w_word3.reshape(B, Lk)


def init_params(key, d_model, nheads, dim_ff, q_length):
    ks = iter(jax.random.split(key, 32))

    def w(shape, s=0.08):
        return s * jax.random.normal(next(ks), shape, jnp.float32)

    p = {}
    for name in ('sa_q', 'sa_k', 'sa_v', 'sa_o', 'ca_q', 'ca_k', 'ca_v', 'ca_o'):
        p[name + '_w'] = w((d_model, d_model))     # torch layout (out, in)
        p[name + '_b'] = w((d_model,))
    p['ca_fck_w'] = w((nheads, d_model))
    p['ca_fck_b'] = w((nheads,))
    p['ca_lg_w'] = w((2, q_length))
    p['ca_lg_b'] = w((2,))
    p['ffn_w1'] = w((dim_ff, d_model))
    p['ffn_b1'] = w((dim_ff,))
    p['ffn_w2'] = w((d_model, dim_ff))
    p['ffn_b2'] = w((d_model,))
    for n in ('norm1', 'norm2', 'norm3'):
        p[n + '_g'] = jnp.ones((d_model,), jnp.float32)
        p[n + '_b'] = jnp.zeros((d_model,), jnp.float32)
    # NOTE: self.proj / self.proj_drop exist in __init__ but are unused in forward.
    return p


if __name__ == "__main__":
    B, Lq, Lk, D, H, FF = 2, 8, 16, 32, 4, 64
    key = jax.random.PRNGKey(0)
    kp, kt, km, kpos, kqpos = jax.random.split(key, 5)

    params = init_params(kp, D, H, FF, Lq)
    tgt = jax.random.normal(kt, (B, Lq, D), jnp.float32)
    memory = jax.random.normal(km, (B, Lk, D), jnp.float32)
    pos = 0.1 * jax.random.normal(kpos, (B, Lk, D), jnp.float32)
    query_pos = 0.1 * jax.random.normal(kqpos, (B, Lq, D), jnp.float32)
    tgt_kpm = jnp.ones((B, Lq), dtype=bool)                      # True = valid
    mem_valid_len = jnp.array([Lk, Lk - 4])
    mem_kpm = jnp.arange(Lk)[None, :] < mem_valid_len[:, None]   # True = valid

    layer = jax.jit(functools.partial(q2v_decoder_layer, nheads=H))
    out_tgt, c_att, w_word = layer(params, tgt, memory, tgt_kpm, mem_kpm,
                                   pos, query_pos)
    jax.block_until_ready((out_tgt, c_att, w_word))

    assert out_tgt.shape == (B, Lq, D)
    assert c_att.shape == (B, Lq, Lk)
    assert w_word.shape == (B, Lk)
    assert bool(jnp.all(jnp.isfinite(out_tgt)))
    assert bool(jnp.all(jnp.isfinite(c_att)))
    assert bool(jnp.all(jnp.isfinite(w_word)))
    print("KERNEL_OK")
</pallas_src>

<mosaic_0001>
module attributes {stable_mosaic.version = 11 : i64} {
  func.func @_self_attn_block_kernel(%arg0: i32, %arg1: memref<1x8x32xf32, #tpu.memory_space<vmem>>, %arg2: memref<1x8x32xf32, #tpu.memory_space<vmem>>, %arg3: memref<1x1x8xf32, #tpu.memory_space<vmem>>, %arg4: memref<32x64xbf16, #tpu.memory_space<vmem>>, %arg5: memref<1x64xf32, #tpu.memory_space<vmem>>, %arg6: memref<32x32xbf16, #tpu.memory_space<vmem>>, %arg7: memref<1x32xf32, #tpu.memory_space<vmem>>, %arg8: memref<32x32xbf16, #tpu.memory_space<vmem>>, %arg9: memref<1x32xf32, #tpu.memory_space<vmem>>, %arg10: memref<1x32xf32, #tpu.memory_space<vmem>>, %arg11: memref<1x32xf32, #tpu.memory_space<vmem>>, %arg12: memref<1x8x32xf32, #tpu.memory_space<vmem>>) attributes {dimension_semantics = [#tpu.dimension_semantics<parallel>], iteration_bounds = array<i64: 2>, scalar_prefetch = 0 : i64, scratch_operands = 0 : i64, tpu.core_type = #tpu.core_type<tc>, window_params = [{transform_indices = @transform_0, window_bounds = array<i64: 1, 8, 32>}, {transform_indices = @transform_1, window_bounds = array<i64: 1, 8, 32>}, {transform_indices = @transform_2, window_bounds = array<i64: 1, 1, 8>}, {pipeline_mode = #tpu.pipeline_mode<synchronous>, transform_indices = @transform_3, window_bounds = array<i64: 32, 64>}, {pipeline_mode = #tpu.pipeline_mode<synchronous>, transform_indices = @transform_4, window_bounds = array<i64: 1, 64>}, {pipeline_mode = #tpu.pipeline_mode<synchronous>, transform_indices = @transform_5, window_bounds = array<i64: 32, 32>}, {pipeline_mode = #tpu.pipeline_mode<synchronous>, transform_indices = @transform_6, window_bounds = array<i64: 1, 32>}, {pipeline_mode = #tpu.pipeline_mode<synchronous>, transform_indices = @transform_7, window_bounds = array<i64: 32, 32>}, {pipeline_mode = #tpu.pipeline_mode<synchronous>, transform_indices = @transform_8, window_bounds = array<i64: 1, 32>}, {pipeline_mode = #tpu.pipeline_mode<synchronous>, transform_indices = @transform_9, window_bounds = array<i64: 1, 32>}, {pipeline_mode = #tpu.pipeline_mode<synchronous>, transform_indices = @transform_10, window_bounds = array<i64: 1, 32>}, {transform_indices = @transform_11, window_bounds = array<i64: 1, 8, 32>}]} {
    %c0 = arith.constant 0 : index
    %c0_0 = arith.constant 0 : index
    %c0_1 = arith.constant 0 : index
    %0 = vector.load %arg1[%c0, %c0_0, %c0_1] : memref<1x8x32xf32, #tpu.memory_space<vmem>>, vector<1x8x32xf32>
    %1 = vector.shape_cast %0 : vector<1x8x32xf32> to vector<8x32xf32>
    %c0_2 = arith.constant 0 : index
    %c0_3 = arith.constant 0 : index
    %c0_4 = arith.constant 0 : index
    %2 = vector.load %arg2[%c0_2, %c0_3, %c0_4] : memref<1x8x32xf32, #tpu.memory_space<vmem>>, vector<1x8x32xf32>
    %3 = vector.shape_cast %2 : vector<1x8x32xf32> to vector<8x32xf32>
    %4 = arith.addf %1, %3 : vector<8x32xf32>
    %c0_5 = arith.constant 0 : index
    %c0_6 = arith.constant 0 : index
    %5 = vector.load %arg4[%c0_5, %c0_6] : memref<32x64xbf16, #tpu.memory_space<vmem>>, vector<32x64xbf16>
    %6 = arith.truncf %4 : vector<8x32xf32> to vector<8x32xbf16>
    %cst = arith.constant dense<0.000000e+00> : vector<8x64xf32>
    %7 = tpu.matmul %6, %5, %cst {dimension_numbers = #tpu.dot_dimension_numbers<[1], [0], [0], [1], [0, 0, 1, 1], [], []>} : vector<8x32xbf16>, vector<32x64xbf16>, vector<8x64xf32> -> vector<8x64xf32>
    %c0_7 = arith.constant 0 : index
    %c0_8 = arith.constant 0 : index
    %8 = vector.load %arg5[%c0_7, %c0_8] : memref<1x64xf32, #tpu.memory_space<vmem>>, vector<1x64xf32>
    %9 = vector.broadcast %8 : vector<1x64xf32> to vector<8x64xf32>
    %10 = arith.addf %7, %9 : vector<8x64xf32>
    %c0_9 = arith.constant 0 : index
    %c0_10 = arith.constant 0 : index
    %11 = vector.load %arg6[%c0_9, %c0_10] : memref<32x32xbf16, #tpu.memory_space<vmem>>, vector<32x32xbf16>
    %12 = arith.truncf %1 : vector<8x32xf32> to vector<8x32xbf16>
    %cst_11 = arith.constant dense<0.000000e+00> : vector<8x32xf32>
    %13 = tpu.matmul %12, %11, %cst_11 {dimension_numbers = #tpu.dot_dimension_numbers<[1], [0], [0], [1], [0, 0, 1, 1], [], []>} : vector<8x32xbf16>, vector<32x32xbf16>, vector<8x32xf32> -> vector<8x32xf32>
    %c0_12 = arith.constant 0 : index
    %c0_13 = arith.constant 0 : index
    %14 = vector.load %arg7[%c0_12, %c0_13] : memref<1x32xf32, #tpu.memory_space<vmem>>, vector<1x32xf32>
    %15 = vector.broadcast %14 : vector<1x32xf32> to vector<8x32xf32>
    %16 = arith.addf %13, %15 : vector<8x32xf32>
    %c0_14 = arith.constant 0 : index
    %c0_15 = arith.constant 0 : index
    %c0_16 = arith.constant 0 : index
    %17 = vector.load %arg3[%c0_14, %c0_15, %c0_16] : memref<1x1x8xf32, #tpu.memory_space<vmem>>, vector<1x1x8xf32>
    %18 = vector.shape_cast %17 : vector<1x1x8xf32> to vector<1x8xf32>
    %cst_17 = arith.constant 5.000000e-01 : f32
    %19 = vector.broadcast %cst_17 : f32 to vector<1x8xf32>
    %20 = arith.cmpf ogt, %18, %19 : vector<1x8xf32>
    %c0_18 = arith.constant 0 : index
    %c0_19 = arith.constant 0 : index
    %21 = vector.load %arg8[%c0_18, %c0_19] : memref<32x32xbf16, #tpu.memory_space<vmem>>, vector<32x32xbf16>
    %cst_20 = arith.constant 0.000000e+00 : f32
    %22 = vector.broadcast %cst_20 : f32 to vector<8x32xf32>
    %23 = vector.extract_strided_slice %10 {offsets = [0, 0], sizes = [8, 8], strides = [1, 1]} : vector<8x64xf32> to vector<8x8xf32>
    %cst_21 = arith.constant 0.353553385 : f32
    %24 = vector.broadcast %cst_21 : f32 to vector<8x8xf32>
    %25 = arith.mulf %23, %24 : vector<8x8xf32>
    %26 = vector.extract_strided_slice %10 {offsets = [0, 32], sizes = [8, 8], strides = [1, 1]} : vector<8x64xf32> to vector<8x8xf32>
    %27 = vector.extract_strided_slice %16 {offsets = [0, 0], sizes = [8, 8], strides = [1, 1]} : vector<8x32xf32> to vector<8x8xf32>
    %28 = arith.truncf %25 : vector<8x8xf32> to vector<8x8xbf16>
    %29 = arith.truncf %26 : vector<8x8xf32> to vector<8x8xbf16>
    %cst_22 = arith.constant dense<0.000000e+00> : vector<8x8xf32>
    %30 = tpu.matmul %28, %29, %cst_22 {dimension_numbers = #tpu.dot_dimension_numbers<[1], [1], [0], [0], [0, 0, 1, 0], [], []>} : vector<8x8xbf16>, vector<8x8xbf16>, vector<8x8xf32> -> vector<8x8xf32>
    %cst_23 = arith.constant -1.000000e+30 : f32
    %31 = vector.shape_cast %20 : vector<1x8xi1> to vector<1x8xi1>
    %32 = vector.broadcast %31 : vector<1x8xi1> to vector<8x8xi1>
    %33 = vector.broadcast %cst_23 : f32 to vector<8x8xf32>
    %34 = arith.select %32, %30, %33 : vector<8x8xi1>, vector<8x8xf32>
    %cst_24 = arith.constant dense<0xFF800000> : vector<8xf32>
    %35 = vector.multi_reduction <maximumf>, %34, %cst_24 [1] : vector<8x8xf32> to vector<8xf32>
    %36 = vector.shape_cast %35 : vector<8xf32> to vector<8x1xf32>
    %37 = vector.broadcast %36 : vector<8x1xf32> to vector<8x8xf32>
    %38 = arith.subf %34, %37 : vector<8x8xf32>
    %39 = math.exp %38 : vector<8x8xf32>
    %cst_25 = arith.constant dense<0.000000e+00> : vector<8xf32>
    %40 = vector.multi_reduction <add>, %39, %cst_25 [1] : vector<8x8xf32> to vector<8xf32>
    %41 = vector.shape_cast %40 : vector<8xf32> to vector<8x1xf32>
    %42 = tpu.reciprocal %41 {approx = true} : vector<8x1xf32> -> vector<8x1xf32>
    %43 = vector.broadcast %42 : vector<8x1xf32> to vector<8x8xf32>
    %44 = arith.mulf %39, %43 : vector<8x8xf32>
    %45 = arith.truncf %44 : vector<8x8xf32> to vector<8x8xbf16>
    %46 = arith.truncf %27 : vector<8x8xf32> to vector<8x8xbf16>
    %cst_26 = arith.constant dense<0.000000e+00> : vector<8x8xf32>
    %47 = tpu.matmul %45, %46, %cst_26 {dimension_numbers = #tpu.dot_dimension_numbers<[1], [0], [0], [1], [0, 0, 1, 1], [], []>} : vector<8x8xbf16>, vector<8x8xbf16>, vector<8x8xf32> -> vector<8x8xf32>
    %48 = vector.extract_strided_slice %21 {offsets = [0, 0], sizes = [8, 32], strides = [1, 1]} : vector<32x32xbf16> to vector<8x32xbf16>
    %49 = arith.truncf %47 : vector<8x8xf32> to vector<8x8xbf16>
    %cst_27 = arith.constant dense<0.000000e+00> : vector<8x32xf32>
    %50 = tpu.matmul %49, %48, %cst_27 {dimension_numbers = #tpu.dot_dimension_numbers<[1], [0], [0], [1], [0, 0, 1, 1], [], []>} : vector<8x8xbf16>, vector<8x32xbf16>, vector<8x32xf32> -> vector<8x32xf32>
    %51 = arith.addf %22, %50 : vector<8x32xf32>
    %52 = vector.extract_strided_slice %10 {offsets = [0, 8], sizes = [8, 8], strides = [1, 1]} : vector<8x64xf32> to vector<8x8xf32>
    %cst_28 = arith.constant 0.353553385 : f32
    %53 = vector.broadcast %cst_28 : f32 to vector<8x8xf32>
    %54 = arith.mulf %52, %53 : vector<8x8xf32>
    %55 = vector.extract_strided_slice %10 {offsets = [0, 40], sizes = [8, 8], strides = [1, 1]} : vector<8x64xf32> to vector<8x8xf32>
    %56 = vector.extract_strided_slice %16 {offsets = [0, 8], sizes = [8, 8], strides = [1, 1]} : vector<8x32xf32> to vector<8x8xf32>
    %57 = arith.truncf %54 : vector<8x8xf32> to vector<8x8xbf16>
    %58 = arith.truncf %55 : vector<8x8xf32> to vector<8x8xbf16>
    %cst_29 = arith.constant dense<0.000000e+00> : vector<8x8xf32>
    %59 = tpu.matmul %57, %58, %cst_29 {dimension_numbers = #tpu.dot_dimension_numbers<[1], [1], [0], [0], [0, 0, 1, 0], [], []>} : vector<8x8xbf16>, vector<8x8xbf16>, vector<8x8xf32> -> vector<8x8xf32>
    %cst_30 = arith.constant -1.000000e+30 : f32
    %60 = vector.shape_cast %20 : vector<1x8xi1> to vector<1x8xi1>
    %61 = vector.broadcast %60 : vector<1x8xi1> to vector<8x8xi1>
    %62 = vector.broadcast %cst_30 : f32 to vector<8x8xf32>
    %63 = arith.select %61, %59, %62 : vector<8x8xi1>, vector<8x8xf32>
    %cst_31 = arith.constant dense<0xFF800000> : vector<8xf32>
    %64 = vector.multi_reduction <maximumf>, %63, %cst_31 [1] : vector<8x8xf32> to vector<8xf32>
    %65 = vector.shape_cast %64 : vector<8xf32> to vector<8x1xf32>
    %66 = vector.broadcast %65 : vector<8x1xf32> to vector<8x8xf32>
    %67 = arith.subf %63, %66 : vector<8x8xf32>
    %68 = math.exp %67 : vector<8x8xf32>
    %cst_32 = arith.constant dense<0.000000e+00> : vector<8xf32>
    %69 = vector.multi_reduction <add>, %68, %cst_32 [1] : vector<8x8xf32> to vector<8xf32>
    %70 = vector.shape_cast %69 : vector<8xf32> to vector<8x1xf32>
    %71 = tpu.reciprocal %70 {approx = true} : vector<8x1xf32> -> vector<8x1xf32>
    %72 = vector.broadcast %71 : vector<8x1xf32> to vector<8x8xf32>
    %73 = arith.mulf %68, %72 : vector<8x8xf32>
    %74 = arith.truncf %73 : vector<8x8xf32> to vector<8x8xbf16>
    %75 = arith.truncf %56 : vector<8x8xf32> to vector<8x8xbf16>
    %cst_33 = arith.constant dense<0.000000e+00> : vector<8x8xf32>
    %76 = tpu.matmul %74, %75, %cst_33 {dimension_numbers = #tpu.dot_dimension_numbers<[1], [0], [0], [1], [0, 0, 1, 1], [], []>} : vector<8x8xbf16>, vector<8x8xbf16>, vector<8x8xf32> -> vector<8x8xf32>
    %77 = vector.extract_strided_slice %21 {offsets = [8, 0], sizes = [8, 32], strides = [1, 1]} : vector<32x32xbf16> to vector<8x32xbf16>
    %78 = arith.truncf %76 : vector<8x8xf32> to vector<8x8xbf16>
    %cst_34 = arith.constant dense<0.000000e+00> : vector<8x32xf32>
    %79 = tpu.matmul %78, %77, %cst_34 {dimension_numbers = #tpu.dot_dimension_numbers<[1], [0], [0], [1], [0, 0, 1, 1], [], []>} : vector<8x8xbf16>, vector<8x32xbf16>, vector<8x32xf32> -> vector<8x32xf32>
    %80 = arith.addf %51, %79 : vector<8x32xf32>
    %81 = vector.extract_strided_slice %10 {offsets = [0, 16], sizes = [8, 8], strides = [1, 1]} : vector<8x64xf32> to vector<8x8xf32>
    %cst_35 = arith.constant 0.353553385 : f32
    %82 = vector.broadcast %cst_35 : f32 to vector<8x8xf32>
    %83 = arith.mulf %81, %82 : vector<8x8xf32>
    %84 = vector.extract_strided_slice %10 {offsets = [0, 48], sizes = [8, 8], strides = [1, 1]} : vector<8x64xf32> to vector<8x8xf32>
    %85 = vector.extract_strided_slice %16 {offsets = [0, 16], sizes = [8, 8], strides = [1, 1]} : vector<8x32xf32> to vector<8x8xf32>
    %86 = arith.truncf %83 : vector<8x8xf32> to vector<8x8xbf16>
    %87 = arith.truncf %84 : vector<8x8xf32> to vector<8x8xbf16>
    %cst_36 = arith.constant dense<0.000000e+00> : vector<8x8xf32>
    %88 = tpu.matmul %86, %87, %cst_36 {dimension_numbers = #tpu.dot_dimension_numbers<[1], [1], [0], [0], [0, 0, 1, 0], [], []>} : vector<8x8xbf16>, vector<8x8xbf16>, vector<8x8xf32> -> vector<8x8xf32>
    %cst_37 = arith.constant -1.000000e+30 : f32
    %89 = vector.shape_cast %20 : vector<1x8xi1> to vector<1x8xi1>
    %90 = vector.broadcast %89 : vector<1x8xi1> to vector<8x8xi1>
    %91 = vector.broadcast %cst_37 : f32 to vector<8x8xf32>
    %92 = arith.select %90, %88, %91 : vector<8x8xi1>, vector<8x8xf32>
    %cst_38 = arith.constant dense<0xFF800000> : vector<8xf32>
    %93 = vector.multi_reduction <maximumf>, %92, %cst_38 [1] : vector<8x8xf32> to vector<8xf32>
    %94 = vector.shape_cast %93 : vector<8xf32> to vector<8x1xf32>
    %95 = vector.broadcast %94 : vector<8x1xf32> to vector<8x8xf32>
    %96 = arith.subf %92, %95 : vector<8x8xf32>
    %97 = math.exp %96 : vector<8x8xf32>
    %cst_39 = arith.constant dense<0.000000e+00> : vector<8xf32>
    %98 = vector.multi_reduction <add>, %97, %cst_39 [1] : vector<8x8xf32> to vector<8xf32>
    %99 = vector.shape_cast %98 : vector<8xf32> to vector<8x1xf32>
    %100 = tpu.reciprocal %99 {approx = true} : vector<8x1xf32> -> vector<8x1xf32>
    %101 = vector.broadcast %100 : vector<8x1xf32> to vector<8x8xf32>
    %102 = arith.mulf %97, %101 : vector<8x8xf32>
    %103 = arith.truncf %102 : vector<8x8xf32> to vector<8x8xbf16>
    %104 = arith.truncf %85 : vector<8x8xf32> to vector<8x8xbf16>
    %cst_40 = arith.constant dense<0.000000e+00> : vector<8x8xf32>
    %105 = tpu.matmul %103, %104, %cst_40 {dimension_numbers = #tpu.dot_dimension_numbers<[1], [0], [0], [1], [0, 0, 1, 1], [], []>} : vector<8x8xbf16>, vector<8x8xbf16>, vector<8x8xf32> -> vector<8x8xf32>
    %106 = vector.extract_strided_slice %21 {offsets = [16, 0], sizes = [8, 32], strides = [1, 1]} : vector<32x32xbf16> to vector<8x32xbf16>
    %107 = arith.truncf %105 : vector<8x8xf32> to vector<8x8xbf16>
    %cst_41 = arith.constant dense<0.000000e+00> : vector<8x32xf32>
    %108 = tpu.matmul %107, %106, %cst_41 {dimension_numbers = #tpu.dot_dimension_numbers<[1], [0], [0], [1], [0, 0, 1, 1], [], []>} : vector<8x8xbf16>, vector<8x32xbf16>, vector<8x32xf32> -> vector<8x32xf32>
    %109 = arith.addf %80, %108 : vector<8x32xf32>
    %110 = vector.extract_strided_slice %10 {offsets = [0, 24], sizes = [8, 8], strides = [1, 1]} : vector<8x64xf32> to vector<8x8xf32>
    %cst_42 = arith.constant 0.353553385 : f32
    %111 = vector.broadcast %cst_42 : f32 to vector<8x8xf32>
    %112 = arith.mulf %110, %111 : vector<8x8xf32>
    %113 = vector.extract_strided_slice %10 {offsets = [0, 56], sizes = [8, 8], strides = [1, 1]} : vector<8x64xf32> to vector<8x8xf32>
    %114 = vector.extract_strided_slice %16 {offsets = [0, 24], sizes = [8, 8], strides = [1, 1]} : vector<8x32xf32> to vector<8x8xf32>
    %115 = arith.truncf %112 : vector<8x8xf32> to vector<8x8xbf16>
    %116 = arith.truncf %113 : vector<8x8xf32> to vector<8x8xbf16>
    %cst_43 = arith.constant dense<0.000000e+00> : vector<8x8xf32>
    %117 = tpu.matmul %115, %116, %cst_43 {dimension_numbers = #tpu.dot_dimension_numbers<[1], [1], [0], [0], [0, 0, 1, 0], [], []>} : vector<8x8xbf16>, vector<8x8xbf16>, vector<8x8xf32> -> vector<8x8xf32>
    %cst_44 = arith.constant -1.000000e+30 : f32
    %118 = vector.shape_cast %20 : vector<1x8xi1> to vector<1x8xi1>
    %119 = vector.broadcast %118 : vector<1x8xi1> to vector<8x8xi1>
    %120 = vector.broadcast %cst_44 : f32 to vector<8x8xf32>
    %121 = arith.select %119, %117, %120 : vector<8x8xi1>, vector<8x8xf32>
    %cst_45 = arith.constant dense<0xFF800000> : vector<8xf32>
    %122 = vector.multi_reduction <maximumf>, %121, %cst_45 [1] : vector<8x8xf32> to vector<8xf32>
    %123 = vector.shape_cast %122 : vector<8xf32> to vector<8x1xf32>
    %124 = vector.broadcast %123 : vector<8x1xf32> to vector<8x8xf32>
    %125 = arith.subf %121, %124 : vector<8x8xf32>
    %126 = math.exp %125 : vector<8x8xf32>
    %cst_46 = arith.constant dense<0.000000e+00> : vector<8xf32>
    %127 = vector.multi_reduction <add>, %126, %cst_46 [1] : vector<8x8xf32> to vector<8xf32>
    %128 = vector.shape_cast %127 : vector<8xf32> to vector<8x1xf32>
    %129 = tpu.reciprocal %128 {approx = true} : vector<8x1xf32> -> vector<8x1xf32>
    %130 = vector.broadcast %129 : vector<8x1xf32> to vector<8x8xf32>
    %131 = arith.mulf %126, %130 : vector<8x8xf32>
    %132 = arith.truncf %131 : vector<8x8xf32> to vector<8x8xbf16>
    %133 = arith.truncf %114 : vector<8x8xf32> to vector<8x8xbf16>
    %cst_47 = arith.constant dense<0.000000e+00> : vector<8x8xf32>
    %134 = tpu.matmul %132, %133, %cst_47 {dimension_numbers = #tpu.dot_dimension_numbers<[1], [0], [0], [1], [0, 0, 1, 1], [], []>} : vector<8x8xbf16>, vector<8x8xbf16>, vector<8x8xf32> -> vector<8x8xf32>
    %135 = vector.extract_strided_slice %21 {offsets = [24, 0], sizes = [8, 32], strides = [1, 1]} : vector<32x32xbf16> to vector<8x32xbf16>
    %136 = arith.truncf %134 : vector<8x8xf32> to vector<8x8xbf16>
    %cst_48 = arith.constant dense<0.000000e+00> : vector<8x32xf32>
    %137 = tpu.matmul %136, %135, %cst_48 {dimension_numbers = #tpu.dot_dimension_numbers<[1], [0], [0], [1], [0, 0, 1, 1], [], []>} : vector<8x8xbf16>, vector<8x32xbf16>, vector<8x32xf32> -> vector<8x32xf32>
    %138 = arith.addf %109, %137 : vector<8x32xf32>
    %c0_49 = arith.constant 0 : index
    %c0_50 = arith.constant 0 : index
    %139 = vector.load %arg9[%c0_49, %c0_50] : memref<1x32xf32, #tpu.memory_space<vmem>>, vector<1x32xf32>
    %140 = vector.broadcast %139 : vector<1x32xf32> to vector<8x32xf32>
    %141 = arith.addf %138, %140 : vector<8x32xf32>
    %142 = arith.addf %1, %141 : vector<8x32xf32>
    %c0_51 = arith.constant 0 : index
    %c0_52 = arith.constant 0 : index
    %143 = vector.load %arg10[%c0_51, %c0_52] : memref<1x32xf32, #tpu.memory_space<vmem>>, vector<1x32xf32>
    %c0_53 = arith.constant 0 : index
    %c0_54 = arith.constant 0 : index
    %144 = vector.load %arg11[%c0_53, %c0_54] : memref<1x32xf32, #tpu.memory_space<vmem>>, vector<1x32xf32>
    %cst_55 = arith.constant dense<0.000000e+00> : vector<8xf32>
    %145 = vector.multi_reduction <add>, %142, %cst_55 [1] : vector<8x32xf32> to vector<8xf32>
    %146 = vector.shape_cast %145 : vector<8xf32> to vector<8x1xf32>
    %cst_56 = arith.constant 3.200000e+01 : f32
    %147 = vector.broadcast %cst_56 : f32 to vector<8x1xf32>
    %148 = arith.divf %146, %147 : vector<8x1xf32>
    %149 = vector.broadcast %148 : vector<8x1xf32> to vector<8x32xf32>
    %150 = arith.subf %142, %149 : vector<8x32xf32>
    %151 = arith.mulf %150, %150 : vector<8x32xf32>
    %cst_57 = arith.constant dense<0.000000e+00> : vector<8xf32>
    %152 = vector.multi_reduction <add>, %151, %cst_57 [1] : vector<8x32xf32> to vector<8xf32>
    %153 = vector.shape_cast %152 : vector<8xf32> to vector<8x1xf32>
    %cst_58 = arith.constant 3.200000e+01 : f32
    %154 = vector.broadcast %cst_58 : f32 to vector<8x1xf32>
    %155 = arith.divf %153, %154 : vector<8x1xf32>
    %cst_59 = arith.constant 9.99999974E-6 : f32
    %156 = vector.broadcast %cst_59 : f32 to vector<8x1xf32>
    %157 = arith.addf %155, %156 : vector<8x1xf32>
    %158 = math.rsqrt %157 : vector<8x1xf32>
    %159 = vector.broadcast %158 : vector<8x1xf32> to vector<8x32xf32>
    %160 = arith.mulf %150, %159 : vector<8x32xf32>
    %161 = vector.broadcast %143 : vector<1x32xf32> to vector<8x32xf32>
    %162 = arith.mulf %160, %161 : vector<8x32xf32>
    %163 = vector.broadcast %144 : vector<1x32xf32> to vector<8x32xf32>
    %164 = arith.addf %162, %163 : vector<8x32xf32>
    %c0_60 = arith.constant 0 : index
    %c0_61 = arith.constant 0 : index
    %c0_62 = arith.constant 0 : index
    %165 = vector.load %arg12[%c0_60, %c0_61, %c0_62] : memref<1x8x32xf32, #tpu.memory_space<vmem>>, vector<1x8x32xf32>
    %166 = vector.shape_cast %165 : vector<1x8x32xf32> to vector<8x32xf32>
    %167 = vector.shape_cast %164 : vector<8x32xf32> to vector<1x8x32xf32>
    tpu.vector_store %arg12[%c0_60, %c0_61, %c0_62], %167 {strides = array<i32>} : memref<1x8x32xf32, #tpu.memory_space<vmem>>, vector<1x8x32xf32>,
    return
  }
  func.func @transform_0(%arg0: i32) -> (i32, i32, i32) {
    %c0_i32 = arith.constant 0 : i32
    %c0_i32_0 = arith.constant 0 : i32
    %c0_i32_1 = arith.constant 0 : i32
    return %arg0, %c0_i32, %c0_i32_0 : i32, i32, i32
  }
  func.func @transform_1(%arg0: i32) -> (i32, i32, i32) {
    %c0_i32 = arith.constant 0 : i32
    %c0_i32_0 = arith.constant 0 : i32
    %c0_i32_1 = arith.constant 0 : i32
    return %arg0, %c0_i32, %c0_i32_0 : i32, i32, i32
  }
  func.func @transform_2(%arg0: i32) -> (i32, i32, i32) {
    %c0_i32 = arith.constant 0 : i32
    %c0_i32_0 = arith.constant 0 : i32
    %c0_i32_1 = arith.constant 0 : i32
    return %arg0, %c0_i32, %c0_i32_0 : i32, i32, i32
  }
  func.func @transform_3(%arg0: i32) -> (i32, i32) {
    %c0_i32 = arith.constant 0 : i32
    %c0_i32_0 = arith.constant 0 : i32
    %c0_i32_1 = arith.constant 0 : i32
    return %c0_i32, %c0_i32_0 : i32, i32
  }
  func.func @transform_4(%arg0: i32) -> (i32, i32) {
    %c0_i32 = arith.constant 0 : i32
    %c0_i32_0 = arith.constant 0 : i32
    %c0_i32_1 = arith.constant 0 : i32
    return %c0_i32, %c0_i32_0 : i32, i32
  }
  func.func @transform_5(%arg0: i32) -> (i32, i32) {
    %c0_i32 = arith.constant 0 : i32
    %c0_i32_0 = arith.constant 0 : i32
    %c0_i32_1 = arith.constant 0 : i32
    return %c0_i32, %c0_i32_0 : i32, i32
  }
  func.func @transform_6(%arg0: i32) -> (i32, i32) {
    %c0_i32 = arith.constant 0 : i32
    %c0_i32_0 = arith.constant 0 : i32
    %c0_i32_1 = arith.constant 0 : i32
    return %c0_i32, %c0_i32_0 : i32, i32
  }
  func.func @transform_7(%arg0: i32) -> (i32, i32) {
    %c0_i32 = arith.constant 0 : i32
    %c0_i32_0 = arith.constant 0 : i32
    %c0_i32_1 = arith.constant 0 : i32
    return %c0_i32, %c0_i32_0 : i32, i32
  }
  func.func @transform_8(%arg0: i32) -> (i32, i32) {
    %c0_i32 = arith.constant 0 : i32
    %c0_i32_0 = arith.constant 0 : i32
    %c0_i32_1 = arith.constant 0 : i32
    return %c0_i32, %c0_i32_0 : i32, i32
  }
  func.func @transform_9(%arg0: i32) -> (i32, i32) {
    %c0_i32 = arith.constant 0 : i32
    %c0_i32_0 = arith.constant 0 : i32
    %c0_i32_1 = arith.constant 0 : i32
    return %c0_i32, %c0_i32_0 : i32, i32
  }
  func.func @transform_10(%arg0: i32) -> (i32, i32) {
    %c0_i32 = arith.constant 0 : i32
    %c0_i32_0 = arith.constant 0 : i32
    %c0_i32_1 = arith.constant 0 : i32
    return %c0_i32, %c0_i32_0 : i32, i32
  }
  func.func @transform_11(%arg0: i32) -> (i32, i32, i32) {
    %c0_i32 = arith.constant 0 : i32
    %c0_i32_0 = arith.constant 0 : i32
    %c0_i32_1 = arith.constant 0 : i32
    return %arg0, %c0_i32, %c0_i32_0 : i32, i32, i32
  }
}

module attributes {stable_mosaic.version = 11 : i64} {
  func.func @_ffn_block_kernel(%arg0: i32, %arg1: memref<1x8x32xf32, #tpu.memory_space<vmem>>, %arg2: memref<32x64xbf16, #tpu.memory_space<vmem>>, %arg3: memref<1x64xf32, #tpu.memory_space<vmem>>, %arg4: memref<64x32xbf16, #tpu.memory_space<vmem>>, %arg5: memref<1x32xf32, #tpu.memory_space<vmem>>, %arg6: memref<1x32xf32, #tpu.memory_space<vmem>>, %arg7: memref<1x32xf32, #tpu.memory_space<vmem>>, %arg8: memref<1x8x32xf32, #tpu.memory_space<vmem>>) attributes {dimension_semantics = [#tpu.dimension_semantics<parallel>], iteration_bounds = array<i64: 2>, scalar_prefetch = 0 : i64, scratch_operands = 0 : i64, tpu.core_type = #tpu.core_type<tc>, window_params = [{transform_indices = @transform_0, window_bounds = array<i64: 1, 8, 32>}, {pipeline_mode = #tpu.pipeline_mode<synchronous>, transform_indices = @transform_1, window_bounds = array<i64: 32, 64>}, {pipeline_mode = #tpu.pipeline_mode<synchronous>, transform_indices = @transform_2, window_bounds = array<i64: 1, 64>}, {pipeline_mode = #tpu.pipeline_mode<synchronous>, transform_indices = @transform_3, window_bounds = array<i64: 64, 32>}, {pipeline_mode = #tpu.pipeline_mode<synchronous>, transform_indices = @transform_4, window_bounds = array<i64: 1, 32>}, {pipeline_mode = #tpu.pipeline_mode<synchronous>, transform_indices = @transform_5, window_bounds = array<i64: 1, 32>}, {pipeline_mode = #tpu.pipeline_mode<synchronous>, transform_indices = @transform_6, window_bounds = array<i64: 1, 32>}, {transform_indices = @transform_7, window_bounds = array<i64: 1, 8, 32>}]} {
    %c0 = arith.constant 0 : index
    %c0_0 = arith.constant 0 : index
    %c0_1 = arith.constant 0 : index
    %0 = vector.load %arg1[%c0, %c0_0, %c0_1] : memref<1x8x32xf32, #tpu.memory_space<vmem>>, vector<1x8x32xf32>
    %1 = vector.shape_cast %0 : vector<1x8x32xf32> to vector<8x32xf32>
    %c0_2 = arith.constant 0 : index
    %c0_3 = arith.constant 0 : index
    %2 = vector.load %arg2[%c0_2, %c0_3] : memref<32x64xbf16, #tpu.memory_space<vmem>>, vector<32x64xbf16>
    %3 = arith.truncf %1 : vector<8x32xf32> to vector<8x32xbf16>
    %cst = arith.constant dense<0.000000e+00> : vector<8x64xf32>
    %4 = tpu.matmul %3, %2, %cst {dimension_numbers = #tpu.dot_dimension_numbers<[1], [0], [0], [1], [0, 0, 1, 1], [], []>} : vector<8x32xbf16>, vector<32x64xbf16>, vector<8x64xf32> -> vector<8x64xf32>
    %c0_4 = arith.constant 0 : index
    %c0_5 = arith.constant 0 : index
    %5 = vector.load %arg3[%c0_4, %c0_5] : memref<1x64xf32, #tpu.memory_space<vmem>>, vector<1x64xf32>
    %6 = vector.broadcast %5 : vector<1x64xf32> to vector<8x64xf32>
    %7 = arith.addf %4, %6 : vector<8x64xf32>
    %cst_6 = arith.constant 0.000000e+00 : f32
    %8 = vector.broadcast %cst_6 : f32 to vector<8x64xf32>
    %9 = arith.maximumf %7, %8 : vector<8x64xf32>
    %c0_7 = arith.constant 0 : index
    %c0_8 = arith.constant 0 : index
    %10 = vector.load %arg4[%c0_7, %c0_8] : memref<64x32xbf16, #tpu.memory_space<vmem>>, vector<64x32xbf16>
    %11 = arith.truncf %9 : vector<8x64xf32> to vector<8x64xbf16>
    %cst_9 = arith.constant dense<0.000000e+00> : vector<8x32xf32>
    %12 = tpu.matmul %11, %10, %cst_9 {dimension_numbers = #tpu.dot_dimension_numbers<[1], [0], [0], [1], [0, 0, 1, 1], [], []>} : vector<8x64xbf16>, vector<64x32xbf16>, vector<8x32xf32> -> vector<8x32xf32>
    %c0_10 = arith.constant 0 : index
    %c0_11 = arith.constant 0 : index
    %13 = vector.load %arg5[%c0_10, %c0_11] : memref<1x32xf32, #tpu.memory_space<vmem>>, vector<1x32xf32>
    %14 = vector.broadcast %13 : vector<1x32xf32> to vector<8x32xf32>
    %15 = arith.addf %12, %14 : vector<8x32xf32>
    %16 = arith.addf %1, %15 : vector<8x32xf32>
    %c0_12 = arith.constant 0 : index
    %c0_13 = arith.constant 0 : index
    %17 = vector.load %arg6[%c0_12, %c0_13] : memref<1x32xf32, #tpu.memory_space<vmem>>, vector<1x32xf32>
    %c0_14 = arith.constant 0 : index
    %c0_15 = arith.constant 0 : index
    %18 = vector.load %arg7[%c0_14, %c0_15] : memref<1x32xf32, #tpu.memory_space<vmem>>, vector<1x32xf32>
    %cst_16 = arith.constant dense<0.000000e+00> : vector<8xf32>
    %19 = vector.multi_reduction <add>, %16, %cst_16 [1] : vector<8x32xf32> to vector<8xf32>
    %20 = vector.shape_cast %19 : vector<8xf32> to vector<8x1xf32>
    %cst_17 = arith.constant 3.200000e+01 : f32
    %21 = vector.broadcast %cst_17 : f32 to vector<8x1xf32>
    %22 = arith.divf %20, %21 : vector<8x1xf32>
    %23 = vector.broadcast %22 : vector<8x1xf32> to vector<8x32xf32>
    %24 = arith.subf %16, %23 : vector<8x32xf32>
    %25 = arith.mulf %24, %24 : vector<8x32xf32>
    %cst_18 = arith.constant dense<0.000000e+00> : vector<8xf32>
    %26 = vector.multi_reduction <add>, %25, %cst_18 [1] : vector<8x32xf32> to vector<8xf32>
    %27 = vector.shape_cast %26 : vector<8xf32> to vector<8x1xf32>
    %cst_19 = arith.constant 3.200000e+01 : f32
    %28 = vector.broadcast %cst_19 : f32 to vector<8x1xf32>
    %29 = arith.divf %27, %28 : vector<8x1xf32>
    %cst_20 = arith.constant 9.99999974E-6 : f32
    %30 = vector.broadcast %cst_20 : f32 to vector<8x1xf32>
    %31 = arith.addf %29, %30 : vector<8x1xf32>
    %32 = math.rsqrt %31 : vector<8x1xf32>
    %33 = vector.broadcast %32 : vector<8x1xf32> to vector<8x32xf32>
    %34 = arith.mulf %24, %33 : vector<8x32xf32>
    %35 = vector.broadcast %17 : vector<1x32xf32> to vector<8x32xf32>
    %36 = arith.mulf %34, %35 : vector<8x32xf32>
    %37 = vector.broadcast %18 : vector<1x32xf32> to vector<8x32xf32>
    %38 = arith.addf %36, %37 : vector<8x32xf32>
    %c0_21 = arith.constant 0 : index
    %c0_22 = arith.constant 0 : index
    %c0_23 = arith.constant 0 : index
    %39 = vector.load %arg8[%c0_21, %c0_22, %c0_23] : memref<1x8x32xf32, #tpu.memory_space<vmem>>, vector<1x8x32xf32>
    %40 = vector.shape_cast %39 : vector<1x8x32xf32> to vector<8x32xf32>
    %41 = vector.shape_cast %38 : vector<8x32xf32> to vector<1x8x32xf32>
    tpu.vector_store %arg8[%c0_21, %c0_22, %c0_23], %41 {strides = array<i32>} : memref<1x8x32xf32, #tpu.memory_space<vmem>>, vector<1x8x32xf32>,
    return
  }
  func.func @transform_0(%arg0: i32) -> (i32, i32, i32) {
    %c0_i32 = arith.constant 0 : i32
    %c0_i32_0 = arith.constant 0 : i32
    %c0_i32_1 = arith.constant 0 : i32
    return %arg0, %c0_i32, %c0_i32_0 : i32, i32, i32
  }
  func.func @transform_1(%arg0: i32) -> (i32, i32) {
    %c0_i32 = arith.constant 0 : i32
    %c0_i32_0 = arith.constant 0 : i32
    %c0_i32_1 = arith.constant 0 : i32
    return %c0_i32, %c0_i32_0 : i32, i32
  }
  func.func @transform_2(%arg0: i32) -> (i32, i32) {
    %c0_i32 = arith.constant 0 : i32
    %c0_i32_0 = arith.constant 0 : i32
    %c0_i32_1 = arith.constant 0 : i32
    return %c0_i32, %c0_i32_0 : i32, i32
  }
  func.func @transform_3(%arg0: i32) -> (i32, i32) {
    %c0_i32 = arith.constant 0 : i32
    %c0_i32_0 = arith.constant 0 : i32
    %c0_i32_1 = arith.constant 0 : i32
    return %c0_i32, %c0_i32_0 : i32, i32
  }
  func.func @transform_4(%arg0: i32) -> (i32, i32) {
    %c0_i32 = arith.constant 0 : i32
    %c0_i32_0 = arith.constant 0 : i32
    %c0_i32_1 = arith.constant 0 : i32
    return %c0_i32, %c0_i32_0 : i32, i32
  }
  func.func @transform_5(%arg0: i32) -> (i32, i32) {
    %c0_i32 = arith.constant 0 : i32
    %c0_i32_0 = arith.constant 0 : i32
    %c0_i32_1 = arith.constant 0 : i32
    return %c0_i32, %c0_i32_0 : i32, i32
  }
  func.func @transform_6(%arg0: i32) -> (i32, i32) {
    %c0_i32 = arith.constant 0 : i32
    %c0_i32_0 = arith.constant 0 : i32
    %c0_i32_1 = arith.constant 0 : i32
    return %c0_i32, %c0_i32_0 : i32, i32
  }
  func.func @transform_7(%arg0: i32) -> (i32, i32, i32) {
    %c0_i32 = arith.constant 0 : i32
    %c0_i32_0 = arith.constant 0 : i32
    %c0_i32_1 = arith.constant 0 : i32
    return %arg0, %c0_i32, %c0_i32_0 : i32, i32, i32
  }
}

module attributes {stable_mosaic.version = 11 : i64} {
  func.func @_cross_attn_block_kernel(%arg0: i32, %arg1: memref<1x8x32xf32, #tpu.memory_space<vmem>>, %arg2: memref<1x8x32xf32, #tpu.memory_space<vmem>>, %arg3: memref<1x16x32xf32, #tpu.memory_space<vmem>>, %arg4: memref<1x16x32xf32, #tpu.memory_space<vmem>>, %arg5: memref<1x1x16xf32, #tpu.memory_space<vmem>>, %arg6: memref<32x32xbf16, #tpu.memory_space<vmem>>, %arg7: memref<1x32xf32, #tpu.memory_space<vmem>>, %arg8: memref<32x32xbf16, #tpu.memory_space<vmem>>, %arg9: memref<1x32xf32, #tpu.memory_space<vmem>>, %arg10: memref<32x32xbf16, #tpu.memory_space<vmem>>, %arg11: memref<1x32xf32, #tpu.memory_space<vmem>>, %arg12: memref<4x32xbf16, #tpu.memory_space<vmem>>, %arg13: memref<4x1xf32, #tpu.memory_space<vmem>>, %arg14: memref<2x8xbf16, #tpu.memory_space<vmem>>, %arg15: memref<2x1xf32, #tpu.memory_space<vmem>>, %arg16: memref<32x32xbf16, #tpu.memory_space<vmem>>, %arg17: memref<1x32xf32, #tpu.memory_space<vmem>>, %arg18: memref<1x32xf32, #tpu.memory_space<vmem>>, %arg19: memref<1x32xf32, #tpu.memory_space<vmem>>, %arg20: memref<1x8x32xf32, #tpu.memory_space<vmem>>, %arg21: memref<1x8x16xf32, #tpu.memory_space<vmem>>, %arg22: memref<1x1x16xf32, #tpu.memory_space<vmem>>) attributes {dimension_semantics = [#tpu.dimension_semantics<parallel>], iteration_bounds = array<i64: 2>, scalar_prefetch = 0 : i64, scratch_operands = 0 : i64, tpu.core_type = #tpu.core_type<tc>, window_params = [{transform_indices = @transform_0, window_bounds = array<i64: 1, 8, 32>}, {transform_indices = @transform_1, window_bounds = array<i64: 1, 8, 32>}, {transform_indices = @transform_2, window_bounds = array<i64: 1, 16, 32>}, {transform_indices = @transform_3, window_bounds = array<i64: 1, 16, 32>}, {transform_indices = @transform_4, window_bounds = array<i64: 1, 1, 16>}, {pipeline_mode = #tpu.pipeline_mode<synchronous>, transform_indices = @transform_5, window_bounds = array<i64: 32, 32>}, {pipeline_mode = #tpu.pipeline_mode<synchronous>, transform_indices = @transform_6, window_bounds = array<i64: 1, 32>}, {pipeline_mode = #tpu.pipeline_mode<synchronous>, transform_indices = @transform_7, window_bounds = array<i64: 32, 32>}, {pipeline_mode = #tpu.pipeline_mode<synchronous>, transform_indices = @transform_8, window_bounds = array<i64: 1, 32>}, {pipeline_mode = #tpu.pipeline_mode<synchronous>, transform_indices = @transform_9, window_bounds = array<i64: 32, 32>}, {pipeline_mode = #tpu.pipeline_mode<synchronous>, transform_indices = @transform_10, window_bounds = array<i64: 1, 32>}, {pipeline_mode = #tpu.pipeline_mode<synchronous>, transform_indices = @transform_11, window_bounds = array<i64: 4, 32>}, {pipeline_mode = #tpu.pipeline_mode<synchronous>, transform_indices = @transform_12, window_bounds = array<i64: 4, 1>}, {pipeline_mode = #tpu.pipeline_mode<synchronous>, transform_indices = @transform_13, window_bounds = array<i64: 2, 8>}, {pipeline_mode = #tpu.pipeline_mode<synchronous>, transform_indices = @transform_14, window_bounds = array<i64: 2, 1>}, {pipeline_mode = #tpu.pipeline_mode<synchronous>, transform_indices = @transform_15, window_bounds = array<i64: 32, 32>}, {pipeline_mode = #tpu.pipeline_mode<synchronous>, transform_indices = @transform_16, window_bounds = array<i64: 1, 32>}, {pipeline_mode = #tpu.pipeline_mode<synchronous>, transform_indices = @transform_17, window_bounds = array<i64: 1, 32>}, {pipeline_mode = #tpu.pipeline_mode<synchronous>, transform_indices = @transform_18, window_bounds = array<i64: 1, 32>}, {transform_indices = @transform_19, window_bounds = array<i64: 1, 8, 32>}, {transform_indices = @transform_20, window_bounds = array<i64: 1, 8, 16>}, {transform_indices = @transform_21, window_bounds = array<i64: 1, 1, 16>}]} {
    %c0 = arith.constant 0 : index
    %c0_0 = arith.constant 0 : index
    %c0_1 = arith.constant 0 : index
    %0 = vector.load %arg1[%c0, %c0_0, %c0_1] : memref<1x8x32xf32, #tpu.memory_space<vmem>>, vector<1x8x32xf32>
    %1 = vector.shape_cast %0 : vector<1x8x32xf32> to vector<8x32xf32>
    %c0_2 = arith.constant 0 : index
    %c0_3 = arith.constant 0 : index
    %c0_4 = arith.constant 0 : index
    %2 = vector.load %arg2[%c0_2, %c0_3, %c0_4] : memref<1x8x32xf32, #tpu.memory_space<vmem>>, vector<1x8x32xf32>
    %3 = vector.shape_cast %2 : vector<1x8x32xf32> to vector<8x32xf32>
    %4 = arith.addf %1, %3 : vector<8x32xf32>
    %c0_5 = arith.constant 0 : index
    %c0_6 = arith.constant 0 : index
    %c0_7 = arith.constant 0 : index
    %5 = vector.load %arg3[%c0_5, %c0_6, %c0_7] : memref<1x16x32xf32, #tpu.memory_space<vmem>>, vector<1x16x32xf32>
    %6 = vector.shape_cast %5 : vector<1x16x32xf32> to vector<16x32xf32>
    %c0_8 = arith.constant 0 : index
    %c0_9 = arith.constant 0 : index
    %c0_10 = arith.constant 0 : index
    %7 = vector.load %arg4[%c0_8, %c0_9, %c0_10] : memref<1x16x32xf32, #tpu.memory_space<vmem>>, vector<1x16x32xf32>
    %8 = vector.shape_cast %7 : vector<1x16x32xf32> to vector<16x32xf32>
    %9 = arith.addf %6, %8 : vector<16x32xf32>
    %c0_11 = arith.constant 0 : index
    %c0_12 = arith.constant 0 : index
    %10 = vector.load %arg6[%c0_11, %c0_12] : memref<32x32xbf16, #tpu.memory_space<vmem>>, vector<32x32xbf16>
    %11 = arith.truncf %4 : vector<8x32xf32> to vector<8x32xbf16>
    %cst = arith.constant dense<0.000000e+00> : vector<8x32xf32>
    %12 = tpu.matmul %11, %10, %cst {dimension_numbers = #tpu.dot_dimension_numbers<[1], [0], [0], [1], [0, 0, 1, 1], [], []>} : vector<8x32xbf16>, vector<32x32xbf16>, vector<8x32xf32> -> vector<8x32xf32>
    %c0_13 = arith.constant 0 : index
    %c0_14 = arith.constant 0 : index
    %13 = vector.load %arg7[%c0_13, %c0_14] : memref<1x32xf32, #tpu.memory_space<vmem>>, vector<1x32xf32>
    %14 = vector.broadcast %13 : vector<1x32xf32> to vector<8x32xf32>
    %15 = arith.addf %12, %14 : vector<8x32xf32>
    %c0_15 = arith.constant 0 : index
    %c0_16 = arith.constant 0 : index
    %16 = vector.load %arg8[%c0_15, %c0_16] : memref<32x32xbf16, #tpu.memory_space<vmem>>, vector<32x32xbf16>
    %17 = arith.truncf %9 : vector<16x32xf32> to vector<16x32xbf16>
    %cst_17 = arith.constant dense<0.000000e+00> : vector<16x32xf32>
    %18 = tpu.matmul %17, %16, %cst_17 {dimension_numbers = #tpu.dot_dimension_numbers<[1], [0], [0], [1], [0, 0, 1, 1], [], []>} : vector<16x32xbf16>, vector<32x32xbf16>, vector<16x32xf32> -> vector<16x32xf32>
    %c0_18 = arith.constant 0 : index
    %c0_19 = arith.constant 0 : index
    %19 = vector.load %arg9[%c0_18, %c0_19] : memref<1x32xf32, #tpu.memory_space<vmem>>, vector<1x32xf32>
    %20 = vector.broadcast %19 : vector<1x32xf32> to vector<16x32xf32>
    %21 = arith.addf %18, %20 : vector<16x32xf32>
    %c0_20 = arith.constant 0 : index
    %c0_21 = arith.constant 0 : index
    %22 = vector.load %arg10[%c0_20, %c0_21] : memref<32x32xbf16, #tpu.memory_space<vmem>>, vector<32x32xbf16>
    %23 = arith.truncf %6 : vector<16x32xf32> to vector<16x32xbf16>
    %cst_22 = arith.constant dense<0.000000e+00> : vector<16x32xf32>
    %24 = tpu.matmul %23, %22, %cst_22 {dimension_numbers = #tpu.dot_dimension_numbers<[1], [0], [0], [1], [0, 0, 1, 1], [], []>} : vector<16x32xbf16>, vector<32x32xbf16>, vector<16x32xf32> -> vector<16x32xf32>
    %c0_23 = arith.constant 0 : index
    %c0_24 = arith.constant 0 : index
    %25 = vector.load %arg11[%c0_23, %c0_24] : memref<1x32xf32, #tpu.memory_space<vmem>>, vector<1x32xf32>
    %26 = vector.broadcast %25 : vector<1x32xf32> to vector<16x32xf32>
    %27 = arith.addf %24, %26 : vector<16x32xf32>
    %c0_25 = arith.constant 0 : index
    %c0_26 = arith.constant 0 : index
    %c0_27 = arith.constant 0 : index
    %28 = vector.load %arg5[%c0_25, %c0_26, %c0_27] : memref<1x1x16xf32, #tpu.memory_space<vmem>>, vector<1x1x16xf32>
    %29 = vector.shape_cast %28 : vector<1x1x16xf32> to vector<1x16xf32>
    %cst_28 = arith.constant 5.000000e-01 : f32
    %30 = vector.broadcast %cst_28 : f32 to vector<1x16xf32>
    %31 = arith.cmpf ogt, %29, %30 : vector<1x16xf32>
    %c0_29 = arith.constant 0 : index
    %c0_30 = arith.constant 0 : index
    %32 = vector.load %arg12[%c0_29, %c0_30] : memref<4x32xbf16, #tpu.memory_space<vmem>>, vector<4x32xbf16>
    %33 = arith.truncf %9 : vector<16x32xf32> to vector<16x32xbf16>
    %cst_31 = arith.constant dense<0.000000e+00> : vector<4x16xf32>
    %34 = tpu.matmul %32, %33, %cst_31 {dimension_numbers = #tpu.dot_dimension_numbers<[1], [1], [0], [0], [0, 0, 1, 0], [], []>} : vector<4x32xbf16>, vector<16x32xbf16>, vector<4x16xf32> -> vector<4x16xf32>
    %c0_32 = arith.constant 0 : index
    %c0_33 = arith.constant 0 : index
    %35 = vector.load %arg13[%c0_32, %c0_33] : memref<4x1xf32, #tpu.memory_space<vmem>>, vector<4x1xf32>
    %36 = vector.broadcast %35 : vector<4x1xf32> to vector<4x16xf32>
    %37 = arith.addf %34, %36 : vector<4x16xf32>
    %cst_34 = arith.constant -1.000000e+30 : f32
    %38 = vector.shape_cast %31 : vector<1x16xi1> to vector<1x16xi1>
    %39 = vector.broadcast %38 : vector<1x16xi1> to vector<4x16xi1>
    %40 = vector.broadcast %cst_34 : f32 to vector<4x16xf32>
    %41 = arith.select %39, %37, %40 : vector<4x16xi1>, vector<4x16xf32>
    %cst_35 = arith.constant dense<0xFF800000> : vector<4xf32>
    %42 = vector.multi_reduction <maximumf>, %41, %cst_35 [1] : vector<4x16xf32> to vector<4xf32>
    %43 = vector.shape_cast %42 : vector<4xf32> to vector<4x1xf32>
    %44 = tpu.iota {dimensions = array<i32: 1>} : vector<4x16xi32>
    %45 = vector.broadcast %43 : vector<4x1xf32> to vector<4x16xf32>
    %46 = arith.cmpf oeq, %41, %45 : vector<4x16xf32>
    %c16_i32 = arith.constant 16 : i32
    %47 = vector.broadcast %c16_i32 : i32 to vector<4x16xi32>
    %48 = arith.select %46, %44, %47 : vector<4x16xi1>, vector<4x16xi32>
    %cst_36 = arith.constant dense<2147483647> : vector<4xi32>
    %49 = vector.multi_reduction <minsi>, %48, %cst_36 [1] : vector<4x16xi32> to vector<4xi32>
    %50 = vector.shape_cast %49 : vector<4xi32> to vector<4x1xi32>
    %51 = vector.broadcast %50 : vector<4x1xi32> to vector<4x16xi32>
    %52 = arith.cmpi eq, %44, %51 : vector<4x16xi32>
    %53 = arith.extui %52 : vector<4x16xi1> to vector<4x16xi32>
    %54 = arith.sitofp %53 : vector<4x16xi32> to vector<4x16xf32>
    %cst_37 = arith.constant dense<0.000000e+00> : vector<16xf32>
    %55 = vector.multi_reduction <add>, %54, %cst_37 [0] : vector<4x16xf32> to vector<16xf32>
    %56 = vector.shape_cast %55 : vector<16xf32> to vector<1x16xf32>
    %cst_38 = arith.constant dense<0.000000e+00> : vector<1xf32>
    %57 = vector.multi_reduction <add>, %56, %cst_38 [1] : vector<1x16xf32> to vector<1xf32>
    %58 = vector.shape_cast %57 : vector<1xf32> to vector<1x1xf32>
    %cst_39 = arith.constant 9.99999997E-7 : f32
    %59 = vector.broadcast %cst_39 : f32 to vector<1x1xf32>
    %60 = arith.addf %58, %59 : vector<1x1xf32>
    %61 = tpu.reciprocal %60 {approx = true} : vector<1x1xf32> -> vector<1x1xf32>
    %62 = vector.broadcast %61 : vector<1x1xf32> to vector<1x16xf32>
    %63 = arith.mulf %56, %62 : vector<1x16xf32>
    %c0_40 = arith.constant 0 : index
    %c0_41 = arith.constant 0 : index
    %c0_42 = arith.constant 0 : index
    %64 = vector.load %arg22[%c0_40, %c0_41, %c0_42] : memref<1x1x16xf32, #tpu.memory_space<vmem>>, vector<1x1x16xf32>
    %65 = vector.shape_cast %64 : vector<1x1x16xf32> to vector<1x16xf32>
    %66 = vector.shape_cast %63 : vector<1x16xf32> to vector<1x1x16xf32>
    tpu.vector_store %arg22[%c0_40, %c0_41, %c0_42], %66 {strides = array<i32>} : memref<1x1x16xf32, #tpu.memory_space<vmem>>, vector<1x1x16xf32>,
    %67 = tpu.iota {dimensions = array<i32: 0>} : vector<8x1xi32>
    %68 = arith.sitofp %67 : vector<8x1xi32> to vector<8x1xf32>
    %cst_43 = arith.constant 0.142857149 : f32
    %69 = vector.broadcast %cst_43 : f32 to vector<8x1xf32>
    %70 = arith.mulf %68, %69 : vector<8x1xf32>
    %c0_44 = arith.constant 0 : index
    %c0_45 = arith.constant 0 : index
    %71 = vector.load %arg16[%c0_44, %c0_45] : memref<32x32xbf16, #tpu.memory_space<vmem>>, vector<32x32xbf16>
    %c0_46 = arith.constant 0 : index
    %c0_47 = arith.constant 0 : index
    %72 = vector.load %arg14[%c0_46, %c0_47] : memref<2x8xbf16, #tpu.memory_space<vmem>>, vector<2x8xbf16>
    %c0_48 = arith.constant 0 : index
    %c0_49 = arith.constant 0 : index
    %73 = vector.load %arg15[%c0_48, %c0_49] : memref<2x1xf32, #tpu.memory_space<vmem>>, vector<2x1xf32>
    %cst_50 = arith.constant 0.000000e+00 : f32
    %74 = vector.broadcast %cst_50 : f32 to vector<8x32xf32>
    %cst_51 = arith.constant 0.000000e+00 : f32
    %75 = vector.broadcast %cst_51 : f32 to vector<8x16xf32>
    %76 = vector.extract_strided_slice %15 {offsets = [0, 0], sizes = [8, 8], strides = [1, 1]} : vector<8x32xf32> to vector<8x8xf32>
    %cst_52 = arith.constant 0.353553385 : f32
    %77 = vector.broadcast %cst_52 : f32 to vector<8x8xf32>
    %78 = arith.mulf %76, %77 : vector<8x8xf32>
    %79 = vector.extract_strided_slice %21 {offsets = [0, 0], sizes = [16, 8], strides = [1, 1]} : vector<16x32xf32> to vector<16x8xf32>
    %80 = vector.extract_strided_slice %27 {offsets = [0, 0], sizes = [16, 8], strides = [1, 1]} : vector<16x32xf32> to vector<16x8xf32>
    %81 = arith.truncf %78 : vector<8x8xf32> to vector<8x8xbf16>
    %82 = arith.truncf %79 : vector<16x8xf32> to vector<16x8xbf16>
    %cst_53 = arith.constant dense<0.000000e+00> : vector<8x16xf32>
    %83 = tpu.matmul %81, %82, %cst_53 {dimension_numbers = #tpu.dot_dimension_numbers<[1], [1], [0], [0], [0, 0, 1, 0], [], []>} : vector<8x8xbf16>, vector<16x8xbf16>, vector<8x16xf32> -> vector<8x16xf32>
    %cst_54 = arith.constant -1.000000e+30 : f32
    %84 = vector.shape_cast %31 : vector<1x16xi1> to vector<1x16xi1>
    %85 = vector.broadcast %84 : vector<1x16xi1> to vector<8x16xi1>
    %86 = vector.broadcast %cst_54 : f32 to vector<8x16xf32>
    %87 = arith.select %85, %83, %86 : vector<8x16xi1>, vector<8x16xf32>
    %cst_55 = arith.constant dense<0xFF800000> : vector<8xf32>
    %88 = vector.multi_reduction <maximumf>, %87, %cst_55 [1] : vector<8x16xf32> to vector<8xf32>
    %89 = vector.shape_cast %88 : vector<8xf32> to vector<8x1xf32>
    %90 = vector.broadcast %89 : vector<8x1xf32> to vector<8x16xf32>
    %91 = arith.subf %87, %90 : vector<8x16xf32>
    %92 = math.exp %91 : vector<8x16xf32>
    %cst_56 = arith.constant dense<0.000000e+00> : vector<8xf32>
    %93 = vector.multi_reduction <add>, %92, %cst_56 [1] : vector<8x16xf32> to vector<8xf32>
    %94 = vector.shape_cast %93 : vector<8xf32> to vector<8x1xf32>
    %95 = tpu.reciprocal %94 {approx = true} : vector<8x1xf32> -> vector<8x1xf32>
    %96 = vector.broadcast %95 : vector<8x1xf32> to vector<8x16xf32>
    %97 = arith.mulf %92, %96 : vector<8x16xf32>
    %98 = vector.broadcast %63 : vector<1x16xf32> to vector<8x16xf32>
    %99 = arith.mulf %97, %98 : vector<8x16xf32>
    %cst_57 = arith.constant dense<0.000000e+00> : vector<8xf32>
    %100 = vector.multi_reduction <add>, %99, %cst_57 [1] : vector<8x16xf32> to vector<8xf32>
    %101 = vector.shape_cast %100 : vector<8xf32> to vector<8x1xf32>
    %102 = arith.truncf %101 : vector<8x1xf32> to vector<8x1xbf16>
    %cst_58 = arith.constant dense<0.000000e+00> : vector<2x1xf32>
    %103 = tpu.matmul %72, %102, %cst_58 {dimension_numbers = #tpu.dot_dimension_numbers<[1], [0], [0], [1], [0, 0, 1, 1], [], []>} : vector<2x8xbf16>, vector<8x1xbf16>, vector<2x1xf32> -> vector<2x1xf32>
    %104 = arith.addf %103, %73 : vector<2x1xf32>
    %105 = arith.negf %104 : vector<2x1xf32>
    %106 = math.exp %105 : vector<2x1xf32>
    %cst_59 = arith.constant 1.000000e+00 : f32
    %107 = vector.broadcast %cst_59 : f32 to vector<2x1xf32>
    %108 = arith.addf %107, %106 : vector<2x1xf32>
    %109 = arith.divf %107, %108 : vector<2x1xf32>
    %110 = vector.extract_strided_slice %109 {offsets = [0, 0], sizes = [1, 1], strides = [1, 1]} : vector<2x1xf32> to vector<1x1xf32>
    %111 = vector.extract_strided_slice %109 {offsets = [1, 0], sizes = [1, 1], strides = [1, 1]} : vector<2x1xf32> to vector<1x1xf32>
    %cst_60 = arith.constant 0.00999999977 : f32
    %112 = vector.broadcast %cst_60 : f32 to vector<1x1xf32>
    %113 = arith.maximumf %111, %112 : vector<1x1xf32>
    %cst_61 = arith.constant 0.111111112 : f32
    %114 = vector.broadcast %cst_61 : f32 to vector<1x1xf32>
    %115 = arith.mulf %113, %114 : vector<1x1xf32>
    %116 = tpu.reciprocal %115 {approx = true} : vector<1x1xf32> -> vector<1x1xf32>
    %117 = vector.broadcast %110 : vector<1x1xf32> to vector<8x1xf32>
    %118 = arith.subf %70, %117 : vector<8x1xf32>
    %cst_62 = arith.constant 0.398942292 : f32
    %119 = vector.broadcast %cst_62 : f32 to vector<1x1xf32>
    %120 = arith.mulf %119, %116 : vector<1x1xf32>
    %121 = arith.mulf %118, %118 : vector<8x1xf32>
    %cst_63 = arith.constant 0.000000e+00 : f32
    %122 = vector.broadcast %cst_63 : f32 to vector<8x1xf32>
    %123 = arith.subf %122, %121 : vector<8x1xf32>
    %cst_64 = arith.constant 5.000000e-01 : f32
    %124 = vector.broadcast %cst_64 : f32 to vector<1x1xf32>
    %125 = arith.mulf %124, %116 : vector<1x1xf32>
    %126 = arith.mulf %125, %116 : vector<1x1xf32>
    %127 = vector.broadcast %126 : vector<1x1xf32> to vector<8x1xf32>
    %128 = arith.mulf %123, %127 : vector<8x1xf32>
    %129 = math.exp %128 : vector<8x1xf32>
    %130 = vector.broadcast %120 : vector<1x1xf32> to vector<8x1xf32>
    %131 = arith.mulf %130, %129 : vector<8x1xf32>
    %cst_65 = arith.constant dense<0xFF800000> : vector<1xf32>
    %132 = vector.multi_reduction <maximumf>, %131, %cst_65 [0] : vector<8x1xf32> to vector<1xf32>
    %133 = vector.shape_cast %132 : vector<1xf32> to vector<1x1xf32>
    %134 = tpu.reciprocal %133 {approx = true} : vector<1x1xf32> -> vector<1x1xf32>
    %135 = vector.broadcast %134 : vector<1x1xf32> to vector<8x1xf32>
    %136 = arith.mulf %131, %135 : vector<8x1xf32>
    %cst_66 = arith.constant dense<0xFF800000> : vector<1xf32>
    %137 = vector.multi_reduction <maximumf>, %136, %cst_66 [0] : vector<8x1xf32> to vector<1xf32>
    %138 = vector.shape_cast %137 : vector<1xf32> to vector<1x1xf32>
    %139 = vector.broadcast %138 : vector<1x1xf32> to vector<8x1xf32>
    %140 = arith.subf %136, %139 : vector<8x1xf32>
    %141 = math.exp %140 : vector<8x1xf32>
    %cst_67 = arith.constant dense<0.000000e+00> : vector<1xf32>
    %142 = vector.multi_reduction <add>, %141, %cst_67 [0] : vector<8x1xf32> to vector<1xf32>
    %143 = vector.shape_cast %142 : vector<1xf32> to vector<1x1xf32>
    %144 = tpu.reciprocal %143 {approx = true} : vector<1x1xf32> -> vector<1x1xf32>
    %145 = vector.broadcast %144 : vector<1x1xf32> to vector<8x1xf32>
    %146 = arith.mulf %141, %145 : vector<8x1xf32>
    %cst_68 = arith.constant 1.000000e-10 : f32
    %147 = vector.broadcast %cst_68 : f32 to vector<8x1xf32>
    %148 = arith.addf %146, %147 : vector<8x1xf32>
    %149 = vector.broadcast %148 : vector<8x1xf32> to vector<8x16xf32>
    %150 = arith.mulf %97, %149 : vector<8x16xf32>
    %cst_69 = arith.constant dense<0.000000e+00> : vector<8xf32>
    %151 = vector.multi_reduction <add>, %150, %cst_69 [1] : vector<8x16xf32> to vector<8xf32>
    %152 = vector.shape_cast %151 : vector<8xf32> to vector<8x1xf32>
    %153 = tpu.reciprocal %152 {approx = true} : vector<8x1xf32> -> vector<8x1xf32>
    %154 = vector.broadcast %153 : vector<8x1xf32> to vector<8x16xf32>
    %155 = arith.mulf %150, %154 : vector<8x16xf32>
    %156 = arith.addf %75, %155 : vector<8x16xf32>
    %157 = arith.truncf %155 : vector<8x16xf32> to vector<8x16xbf16>
    %158 = arith.truncf %80 : vector<16x8xf32> to vector<16x8xbf16>
    %cst_70 = arith.constant dense<0.000000e+00> : vector<8x8xf32>
    %159 = tpu.matmul %157, %158, %cst_70 {dimension_numbers = #tpu.dot_dimension_numbers<[1], [0], [0], [1], [0, 0, 1, 1], [], []>} : vector<8x16xbf16>, vector<16x8xbf16>, vector<8x8xf32> -> vector<8x8xf32>
    %160 = vector.extract_strided_slice %71 {offsets = [0, 0], sizes = [8, 32], strides = [1, 1]} : vector<32x32xbf16> to vector<8x32xbf16>
    %161 = arith.truncf %159 : vector<8x8xf32> to vector<8x8xbf16>
    %cst_71 = arith.constant dense<0.000000e+00> : vector<8x32xf32>
    %162 = tpu.matmul %161, %160, %cst_71 {dimension_numbers = #tpu.dot_dimension_numbers<[1], [0], [0], [1], [0, 0, 1, 1], [], []>} : vector<8x8xbf16>, vector<8x32xbf16>, vector<8x32xf32> -> vector<8x32xf32>
    %163 = arith.addf %74, %162 : vector<8x32xf32>
    %164 = vector.extract_strided_slice %15 {offsets = [0, 8], sizes = [8, 8], strides = [1, 1]} : vector<8x32xf32> to vector<8x8xf32>
    %cst_72 = arith.constant 0.353553385 : f32
    %165 = vector.broadcast %cst_72 : f32 to vector<8x8xf32>
    %166 = arith.mulf %164, %165 : vector<8x8xf32>
    %167 = vector.extract_strided_slice %21 {offsets = [0, 8], sizes = [16, 8], strides = [1, 1]} : vector<16x32xf32> to vector<16x8xf32>
    %168 = vector.extract_strided_slice %27 {offsets = [0, 8], sizes = [16, 8], strides = [1, 1]} : vector<16x32xf32> to vector<16x8xf32>
    %169 = arith.truncf %166 : vector<8x8xf32> to vector<8x8xbf16>
    %170 = arith.truncf %167 : vector<16x8xf32> to vector<16x8xbf16>
    %cst_73 = arith.constant dense<0.000000e+00> : vector<8x16xf32>
    %171 = tpu.matmul %169, %170, %cst_73 {dimension_numbers = #tpu.dot_dimension_numbers<[1], [1], [0], [0], [0, 0, 1, 0], [], []>} : vector<8x8xbf16>, vector<16x8xbf16>, vector<8x16xf32> -> vector<8x16xf32>
    %cst_74 = arith.constant -1.000000e+30 : f32
    %172 = vector.shape_cast %31 : vector<1x16xi1> to vector<1x16xi1>
    %173 = vector.broadcast %172 : vector<1x16xi1> to vector<8x16xi1>
    %174 = vector.broadcast %cst_74 : f32 to vector<8x16xf32>
    %175 = arith.select %173, %171, %174 : vector<8x16xi1>, vector<8x16xf32>
    %cst_75 = arith.constant dense<0xFF800000> : vector<8xf32>
    %176 = vector.multi_reduction <maximumf>, %175, %cst_75 [1] : vector<8x16xf32> to vector<8xf32>
    %177 = vector.shape_cast %176 : vector<8xf32> to vector<8x1xf32>
    %178 = vector.broadcast %177 : vector<8x1xf32> to vector<8x16xf32>
    %179 = arith.subf %175, %178 : vector<8x16xf32>
    %180 = math.exp %179 : vector<8x16xf32>
    %cst_76 = arith.constant dense<0.000000e+00> : vector<8xf32>
    %181 = vector.multi_reduction <add>, %180, %cst_76 [1] : vector<8x16xf32> to vector<8xf32>
    %182 = vector.shape_cast %181 : vector<8xf32> to vector<8x1xf32>
    %183 = tpu.reciprocal %182 {approx = true} : vector<8x1xf32> -> vector<8x1xf32>
    %184 = vector.broadcast %183 : vector<8x1xf32> to vector<8x16xf32>
    %185 = arith.mulf %180, %184 : vector<8x16xf32>
    %186 = vector.broadcast %63 : vector<1x16xf32> to vector<8x16xf32>
    %187 = arith.mulf %185, %186 : vector<8x16xf32>
    %cst_77 = arith.constant dense<0.000000e+00> : vector<8xf32>
    %188 = vector.multi_reduction <add>, %187, %cst_77 [1] : vector<8x16xf32> to vector<8xf32>
    %189 = vector.shape_cast %188 : vector<8xf32> to vector<8x1xf32>
    %190 = arith.truncf %189 : vector<8x1xf32> to vector<8x1xbf16>
    %cst_78 = arith.constant dense<0.000000e+00> : vector<2x1xf32>
    %191 = tpu.matmul %72, %190, %cst_78 {dimension_numbers = #tpu.dot_dimension_numbers<[1], [0], [0], [1], [0, 0, 1, 1], [], []>} : vector<2x8xbf16>, vector<8x1xbf16>, vector<2x1xf32> -> vector<2x1xf32>
    %192 = arith.addf %191, %73 : vector<2x1xf32>
    %193 = arith.negf %192 : vector<2x1xf32>
    %194 = math.exp %193 : vector<2x1xf32>
    %cst_79 = arith.constant 1.000000e+00 : f32
    %195 = vector.broadcast %cst_79 : f32 to vector<2x1xf32>
    %196 = arith.addf %195, %194 : vector<2x1xf32>
    %197 = arith.divf %195, %196 : vector<2x1xf32>
    %198 = vector.extract_strided_slice %197 {offsets = [0, 0], sizes = [1, 1], strides = [1, 1]} : vector<2x1xf32> to vector<1x1xf32>
    %199 = vector.extract_strided_slice %197 {offsets = [1, 0], sizes = [1, 1], strides = [1, 1]} : vector<2x1xf32> to vector<1x1xf32>
    %cst_80 = arith.constant 0.00999999977 : f32
    %200 = vector.broadcast %cst_80 : f32 to vector<1x1xf32>
    %201 = arith.maximumf %199, %200 : vector<1x1xf32>
    %cst_81 = arith.constant 0.111111112 : f32
    %202 = vector.broadcast %cst_81 : f32 to vector<1x1xf32>
    %203 = arith.mulf %201, %202 : vector<1x1xf32>
    %204 = tpu.reciprocal %203 {approx = true} : vector<1x1xf32> -> vector<1x1xf32>
    %205 = vector.broadcast %198 : vector<1x1xf32> to vector<8x1xf32>
    %206 = arith.subf %70, %205 : vector<8x1xf32>
    %cst_82 = arith.constant 0.398942292 : f32
    %207 = vector.broadcast %cst_82 : f32 to vector<1x1xf32>
    %208 = arith.mulf %207, %204 : vector<1x1xf32>
    %209 = arith.mulf %206, %206 : vector<8x1xf32>
    %cst_83 = arith.constant 0.000000e+00 : f32
    %210 = vector.broadcast %cst_83 : f32 to vector<8x1xf32>
    %211 = arith.subf %210, %209 : vector<8x1xf32>
    %cst_84 = arith.constant 5.000000e-01 : f32
    %212 = vector.broadcast %cst_84 : f32 to vector<1x1xf32>
    %213 = arith.mulf %212, %204 : vector<1x1xf32>
    %214 = arith.mulf %213, %204 : vector<1x1xf32>
    %215 = vector.broadcast %214 : vector<1x1xf32> to vector<8x1xf32>
    %216 = arith.mulf %211, %215 : vector<8x1xf32>
    %217 = math.exp %216 : vector<8x1xf32>
    %218 = vector.broadcast %208 : vector<1x1xf32> to vector<8x1xf32>
    %219 = arith.mulf %218, %217 : vector<8x1xf32>
    %cst_85 = arith.constant dense<0xFF800000> : vector<1xf32>
    %220 = vector.multi_reduction <maximumf>, %219, %cst_85 [0] : vector<8x1xf32> to vector<1xf32>
    %221 = vector.shape_cast %220 : vector<1xf32> to vector<1x1xf32>
    %222 = tpu.reciprocal %221 {approx = true} : vector<1x1xf32> -> vector<1x1xf32>
    %223 = vector.broadcast %222 : vector<1x1xf32> to vector<8x1xf32>
    %224 = arith.mulf %219, %223 : vector<8x1xf32>
    %cst_86 = arith.constant dense<0xFF800000> : vector<1xf32>
    %225 = vector.multi_reduction <maximumf>, %224, %cst_86 [0] : vector<8x1xf32> to vector<1xf32>
    %226 = vector.shape_cast %225 : vector<1xf32> to vector<1x1xf32>
    %227 = vector.broadcast %226 : vector<1x1xf32> to vector<8x1xf32>
    %228 = arith.subf %224, %227 : vector<8x1xf32>
    %229 = math.exp %228 : vector<8x1xf32>
    %cst_87 = arith.constant dense<0.000000e+00> : vector<1xf32>
    %230 = vector.multi_reduction <add>, %229, %cst_87 [0] : vector<8x1xf32> to vector<1xf32>
    %231 = vector.shape_cast %230 : vector<1xf32> to vector<1x1xf32>
    %232 = tpu.reciprocal %231 {approx = true} : vector<1x1xf32> -> vector<1x1xf32>
    %233 = vector.broadcast %232 : vector<1x1xf32> to vector<8x1xf32>
    %234 = arith.mulf %229, %233 : vector<8x1xf32>
    %cst_88 = arith.constant 1.000000e-10 : f32
    %235 = vector.broadcast %cst_88 : f32 to vector<8x1xf32>
    %236 = arith.addf %234, %235 : vector<8x1xf32>
    %237 = vector.broadcast %236 : vector<8x1xf32> to vector<8x16xf32>
    %238 = arith.mulf %185, %237 : vector<8x16xf32>
    %cst_89 = arith.constant dense<0.000000e+00> : vector<8xf32>
    %239 = vector.multi_reduction <add>, %238, %cst_89 [1] : vector<8x16xf32> to vector<8xf32>
    %240 = vector.shape_cast %239 : vector<8xf32> to vector<8x1xf32>
    %241 = tpu.reciprocal %240 {approx = true} : vector<8x1xf32> -> vector<8x1xf32>
    %242 = vector.broadcast %241 : vector<8x1xf32> to vector<8x16xf32>
    %243 = arith.mulf %238, %242 : vector<8x16xf32>
    %244 = arith.addf %156, %243 : vector<8x16xf32>
    %245 = arith.truncf %243 : vector<8x16xf32> to vector<8x16xbf16>
    %246 = arith.truncf %168 : vector<16x8xf32> to vector<16x8xbf16>
    %cst_90 = arith.constant dense<0.000000e+00> : vector<8x8xf32>
    %247 = tpu.matmul %245, %246, %cst_90 {dimension_numbers = #tpu.dot_dimension_numbers<[1], [0], [0], [1], [0, 0, 1, 1], [], []>} : vector<8x16xbf16>, vector<16x8xbf16>, vector<8x8xf32> -> vector<8x8xf32>
    %248 = vector.extract_strided_slice %71 {offsets = [8, 0], sizes = [8, 32], strides = [1, 1]} : vector<32x32xbf16> to vector<8x32xbf16>
    %249 = arith.truncf %247 : vector<8x8xf32> to vector<8x8xbf16>
    %cst_91 = arith.constant dense<0.000000e+00> : vector<8x32xf32>
    %250 = tpu.matmul %249, %248, %cst_91 {dimension_numbers = #tpu.dot_dimension_numbers<[1], [0], [0], [1], [0, 0, 1, 1], [], []>} : vector<8x8xbf16>, vector<8x32xbf16>, vector<8x32xf32> -> vector<8x32xf32>
    %251 = arith.addf %163, %250 : vector<8x32xf32>
    %252 = vector.extract_strided_slice %15 {offsets = [0, 16], sizes = [8, 8], strides = [1, 1]} : vector<8x32xf32> to vector<8x8xf32>
    %cst_92 = arith.constant 0.353553385 : f32
    %253 = vector.broadcast %cst_92 : f32 to vector<8x8xf32>
    %254 = arith.mulf %252, %253 : vector<8x8xf32>
    %255 = vector.extract_strided_slice %21 {offsets = [0, 16], sizes = [16, 8], strides = [1, 1]} : vector<16x32xf32> to vector<16x8xf32>
    %256 = vector.extract_strided_slice %27 {offsets = [0, 16], sizes = [16, 8], strides = [1, 1]} : vector<16x32xf32> to vector<16x8xf32>
    %257 = arith.truncf %254 : vector<8x8xf32> to vector<8x8xbf16>
    %258 = arith.truncf %255 : vector<16x8xf32> to vector<16x8xbf16>
    %cst_93 = arith.constant dense<0.000000e+00> : vector<8x16xf32>
    %259 = tpu.matmul %257, %258, %cst_93 {dimension_numbers = #tpu.dot_dimension_numbers<[1], [1], [0], [0], [0, 0, 1, 0], [], []>} : vector<8x8xbf16>, vector<16x8xbf16>, vector<8x16xf32> -> vector<8x16xf32>
    %cst_94 = arith.constant -1.000000e+30 : f32
    %260 = vector.shape_cast %31 : vector<1x16xi1> to vector<1x16xi1>
    %261 = vector.broadcast %260 : vector<1x16xi1> to vector<8x16xi1>
    %262 = vector.broadcast %cst_94 : f32 to vector<8x16xf32>
    %263 = arith.select %261, %259, %262 : vector<8x16xi1>, vector<8x16xf32>
    %cst_95 = arith.constant dense<0xFF800000> : vector<8xf32>
    %264 = vector.multi_reduction <maximumf>, %263, %cst_95 [1] : vector<8x16xf32> to vector<8xf32>
    %265 = vector.shape_cast %264 : vector<8xf32> to vector<8x1xf32>
    %266 = vector.broadcast %265 : vector<8x1xf32> to vector<8x16xf32>
    %267 = arith.subf %263, %266 : vector<8x16xf32>
    %268 = math.exp %267 : vector<8x16xf32>
    %cst_96 = arith.constant dense<0.000000e+00> : vector<8xf32>
    %269 = vector.multi_reduction <add>, %268, %cst_96 [1] : vector<8x16xf32> to vector<8xf32>
    %270 = vector.shape_cast %269 : vector<8xf32> to vector<8x1xf32>
    %271 = tpu.reciprocal %270 {approx = true} : vector<8x1xf32> -> vector<8x1xf32>
    %272 = vector.broadcast %271 : vector<8x1xf32> to vector<8x16xf32>
    %273 = arith.mulf %268, %272 : vector<8x16xf32>
    %274 = vector.broadcast %63 : vector<1x16xf32> to vector<8x16xf32>
    %275 = arith.mulf %273, %274 : vector<8x16xf32>
    %cst_97 = arith.constant dense<0.000000e+00> : vector<8xf32>
    %276 = vector.multi_reduction <add>, %275, %cst_97 [1] : vector<8x16xf32> to vector<8xf32>
    %277 = vector.shape_cast %276 : vector<8xf32> to vector<8x1xf32>
    %278 = arith.truncf %277 : vector<8x1xf32> to vector<8x1xbf16>
    %cst_98 = arith.constant dense<0.000000e+00> : vector<2x1xf32>
    %279 = tpu.matmul %72, %278, %cst_98 {dimension_numbers = #tpu.dot_dimension_numbers<[1], [0], [0], [1], [0, 0, 1, 1], [], []>} : vector<2x8xbf16>, vector<8x1xbf16>, vector<2x1xf32> -> vector<2x1xf32>
    %280 = arith.addf %279, %73 : vector<2x1xf32>
    %281 = arith.negf %280 : vector<2x1xf32>
    %282 = math.exp %281 : vector<2x1xf32>
    %cst_99 = arith.constant 1.000000e+00 : f32
    %283 = vector.broadcast %cst_99 : f32 to vector<2x1xf32>
    %284 = arith.addf %283, %282 : vector<2x1xf32>
    %285 = arith.divf %283, %284 : vector<2x1xf32>
    %286 = vector.extract_strided_slice %285 {offsets = [0, 0], sizes = [1, 1], strides = [1, 1]} : vector<2x1xf32> to vector<1x1xf32>
    %287 = vector.extract_strided_slice %285 {offsets = [1, 0], sizes = [1, 1], strides = [1, 1]} : vector<2x1xf32> to vector<1x1xf32>
    %cst_100 = arith.constant 0.00999999977 : f32
    %288 = vector.broadcast %cst_100 : f32 to vector<1x1xf32>
    %289 = arith.maximumf %287, %288 : vector<1x1xf32>
    %cst_101 = arith.constant 0.111111112 : f32
    %290 = vector.broadcast %cst_101 : f32 to vector<1x1xf32>
    %291 = arith.mulf %289, %290 : vector<1x1xf32>
    %292 = tpu.reciprocal %291 {approx = true} : vector<1x1xf32> -> vector<1x1xf32>
    %293 = vector.broadcast %286 : vector<1x1xf32> to vector<8x1xf32>
    %294 = arith.subf %70, %293 : vector<8x1xf32>
    %cst_102 = arith.constant 0.398942292 : f32
    %295 = vector.broadcast %cst_102 : f32 to vector<1x1xf32>
    %296 = arith.mulf %295, %292 : vector<1x1xf32>
    %297 = arith.mulf %294, %294 : vector<8x1xf32>
    %cst_103 = arith.constant 0.000000e+00 : f32
    %298 = vector.broadcast %cst_103 : f32 to vector<8x1xf32>
    %299 = arith.subf %298, %297 : vector<8x1xf32>
    %cst_104 = arith.constant 5.000000e-01 : f32
    %300 = vector.broadcast %cst_104 : f32 to vector<1x1xf32>
    %301 = arith.mulf %300, %292 : vector<1x1xf32>
    %302 = arith.mulf %301, %292 : vector<1x1xf32>
    %303 = vector.broadcast %302 : vector<1x1xf32> to vector<8x1xf32>
    %304 = arith.mulf %299, %303 : vector<8x1xf32>
    %305 = math.exp %304 : vector<8x1xf32>
    %306 = vector.broadcast %296 : vector<1x1xf32> to vector<8x1xf32>
    %307 = arith.mulf %306, %305 : vector<8x1xf32>
    %cst_105 = arith.constant dense<0xFF800000> : vector<1xf32>
    %308 = vector.multi_reduction <maximumf>, %307, %cst_105 [0] : vector<8x1xf32> to vector<1xf32>
    %309 = vector.shape_cast %308 : vector<1xf32> to vector<1x1xf32>
    %310 = tpu.reciprocal %309 {approx = true} : vector<1x1xf32> -> vector<1x1xf32>
    %311 = vector.broadcast %310 : vector<1x1xf32> to vector<8x1xf32>
    %312 = arith.mulf %307, %311 : vector<8x1xf32>
    %cst_106 = arith.constant dense<0xFF800000> : vector<1xf32>
    %313 = vector.multi_reduction <maximumf>, %312, %cst_106 [0] : vector<8x1xf32> to vector<1xf32>
    %314 = vector.shape_cast %313 : vector<1xf32> to vector<1x1xf32>
    %315 = vector.broadcast %314 : vector<1x1xf32> to vector<8x1xf32>
    %316 = arith.subf %312, %315 : vector<8x1xf32>
    %317 = math.exp %316 : vector<8x1xf32>
    %cst_107 = arith.constant dense<0.000000e+00> : vector<1xf32>
    %318 = vector.multi_reduction <add>, %317, %cst_107 [0] : vector<8x1xf32> to vector<1xf32>
    %319 = vector.shape_cast %318 : vector<1xf32> to vector<1x1xf32>
    %320 = tpu.reciprocal %319 {approx = true} : vector<1x1xf32> -> vector<1x1xf32>
    %321 = vector.broadcast %320 : vector<1x1xf32> to vector<8x1xf32>
    %322 = arith.mulf %317, %321 : vector<8x1xf32>
    %cst_108 = arith.constant 1.000000e-10 : f32
    %323 = vector.broadcast %cst_108 : f32 to vector<8x1xf32>
    %324 = arith.addf %322, %323 : vector<8x1xf32>
    %325 = vector.broadcast %324 : vector<8x1xf32> to vector<8x16xf32>
    %326 = arith.mulf %273, %325 : vector<8x16xf32>
    %cst_109 = arith.constant dense<0.000000e+00> : vector<8xf32>
    %327 = vector.multi_reduction <add>, %326, %cst_109 [1] : vector<8x16xf32> to vector<8xf32>
    %328 = vector.shape_cast %327 : vector<8xf32> to vector<8x1xf32>
    %329 = tpu.reciprocal %328 {approx = true} : vector<8x1xf32> -> vector<8x1xf32>
    %330 = vector.broadcast %329 : vector<8x1xf32> to vector<8x16xf32>
    %331 = arith.mulf %326, %330 : vector<8x16xf32>
    %332 = arith.addf %244, %331 : vector<8x16xf32>
    %333 = arith.truncf %331 : vector<8x16xf32> to vector<8x16xbf16>
    %334 = arith.truncf %256 : vector<16x8xf32> to vector<16x8xbf16>
    %cst_110 = arith.constant dense<0.000000e+00> : vector<8x8xf32>
    %335 = tpu.matmul %333, %334, %cst_110 {dimension_numbers = #tpu.dot_dimension_numbers<[1], [0], [0], [1], [0, 0, 1, 1], [], []>} : vector<8x16xbf16>, vector<16x8xbf16>, vector<8x8xf32> -> vector<8x8xf32>
    %336 = vector.extract_strided_slice %71 {offsets = [16, 0], sizes = [8, 32], strides = [1, 1]} : vector<32x32xbf16> to vector<8x32xbf16>
    %337 = arith.truncf %335 : vector<8x8xf32> to vector<8x8xbf16>
    %cst_111 = arith.constant dense<0.000000e+00> : vector<8x32xf32>
    %338 = tpu.matmul %337, %336, %cst_111 {dimension_numbers = #tpu.dot_dimension_numbers<[1], [0], [0], [1], [0, 0, 1, 1], [], []>} : vector<8x8xbf16>, vector<8x32xbf16>, vector<8x32xf32> -> vector<8x32xf32>
    %339 = arith.addf %251, %338 : vector<8x32xf32>
    %340 = vector.extract_strided_slice %15 {offsets = [0, 24], sizes = [8, 8], strides = [1, 1]} : vector<8x32xf32> to vector<8x8xf32>
    %cst_112 = arith.constant 0.353553385 : f32
    %341 = vector.broadcast %cst_112 : f32 to vector<8x8xf32>
    %342 = arith.mulf %340, %341 : vector<8x8xf32>
    %343 = vector.extract_strided_slice %21 {offsets = [0, 24], sizes = [16, 8], strides = [1, 1]} : vector<16x32xf32> to vector<16x8xf32>
    %344 = vector.extract_strided_slice %27 {offsets = [0, 24], sizes = [16, 8], strides = [1, 1]} : vector<16x32xf32> to vector<16x8xf32>
    %345 = arith.truncf %342 : vector<8x8xf32> to vector<8x8xbf16>
    %346 = arith.truncf %343 : vector<16x8xf32> to vector<16x8xbf16>
    %cst_113 = arith.constant dense<0.000000e+00> : vector<8x16xf32>
    %347 = tpu.matmul %345, %346, %cst_113 {dimension_numbers = #tpu.dot_dimension_numbers<[1], [1], [0], [0], [0, 0, 1, 0], [], []>} : vector<8x8xbf16>, vector<16x8xbf16>, vector<8x16xf32> -> vector<8x16xf32>
    %cst_114 = arith.constant -1.000000e+30 : f32
    %348 = vector.shape_cast %31 : vector<1x16xi1> to vector<1x16xi1>
    %349 = vector.broadcast %348 : vector<1x16xi1> to vector<8x16xi1>
    %350 = vector.broadcast %cst_114 : f32 to vector<8x16xf32>
    %351 = arith.select %349, %347, %350 : vector<8x16xi1>, vector<8x16xf32>
    %cst_115 = arith.constant dense<0xFF800000> : vector<8xf32>
    %352 = vector.multi_reduction <maximumf>, %351, %cst_115 [1] : vector<8x16xf32> to vector<8xf32>
    %353 = vector.shape_cast %352 : vector<8xf32> to vector<8x1xf32>
    %354 = vector.broadcast %353 : vector<8x1xf32> to vector<8x16xf32>
    %355 = arith.subf %351, %354 : vector<8x16xf32>
    %356 = math.exp %355 : vector<8x16xf32>
    %cst_116 = arith.constant dense<0.000000e+00> : vector<8xf32>
    %357 = vector.multi_reduction <add>, %356, %cst_116 [1] : vector<8x16xf32> to vector<8xf32>
    %358 = vector.shape_cast %357 : vector<8xf32> to vector<8x1xf32>
    %359 = tpu.reciprocal %358 {approx = true} : vector<8x1xf32> -> vector<8x1xf32>
    %360 = vector.broadcast %359 : vector<8x1xf32> to vector<8x16xf32>
    %361 = arith.mulf %356, %360 : vector<8x16xf32>
    %362 = vector.broadcast %63 : vector<1x16xf32> to vector<8x16xf32>
    %363 = arith.mulf %361, %362 : vector<8x16xf32>
    %cst_117 = arith.constant dense<0.000000e+00> : vector<8xf32>
    %364 = vector.multi_reduction <add>, %363, %cst_117 [1] : vector<8x16xf32> to vector<8xf32>
    %365 = vector.shape_cast %364 : vector<8xf32> to vector<8x1xf32>
    %366 = arith.truncf %365 : vector<8x1xf32> to vector<8x1xbf16>
    %cst_118 = arith.constant dense<0.000000e+00> : vector<2x1xf32>
    %367 = tpu.matmul %72, %366, %cst_118 {dimension_numbers = #tpu.dot_dimension_numbers<[1], [0], [0], [1], [0, 0, 1, 1], [], []>} : vector<2x8xbf16>, vector<8x1xbf16>, vector<2x1xf32> -> vector<2x1xf32>
    %368 = arith.addf %367, %73 : vector<2x1xf32>
    %369 = arith.negf %368 : vector<2x1xf32>
    %370 = math.exp %369 : vector<2x1xf32>
    %cst_119 = arith.constant 1.000000e+00 : f32
    %371 = vector.broadcast %cst_119 : f32 to vector<2x1xf32>
    %372 = arith.addf %371, %370 : vector<2x1xf32>
    %373 = arith.divf %371, %372 : vector<2x1xf32>
    %374 = vector.extract_strided_slice %373 {offsets = [0, 0], sizes = [1, 1], strides = [1, 1]} : vector<2x1xf32> to vector<1x1xf32>
    %375 = vector.extract_strided_slice %373 {offsets = [1, 0], sizes = [1, 1], strides = [1, 1]} : vector<2x1xf32> to vector<1x1xf32>
    %cst_120 = arith.constant 0.00999999977 : f32
    %376 = vector.broadcast %cst_120 : f32 to vector<1x1xf32>
    %377 = arith.maximumf %375, %376 : vector<1x1xf32>
    %cst_121 = arith.constant 0.111111112 : f32
    %378 = vector.broadcast %cst_121 : f32 to vector<1x1xf32>
    %379 = arith.mulf %377, %378 : vector<1x1xf32>
    %380 = tpu.reciprocal %379 {approx = true} : vector<1x1xf32> -> vector<1x1xf32>
    %381 = vector.broadcast %374 : vector<1x1xf32> to vector<8x1xf32>
    %382 = arith.subf %70, %381 : vector<8x1xf32>
    %cst_122 = arith.constant 0.398942292 : f32
    %383 = vector.broadcast %cst_122 : f32 to vector<1x1xf32>
    %384 = arith.mulf %383, %380 : vector<1x1xf32>
    %385 = arith.mulf %382, %382 : vector<8x1xf32>
    %cst_123 = arith.constant 0.000000e+00 : f32
    %386 = vector.broadcast %cst_123 : f32 to vector<8x1xf32>
    %387 = arith.subf %386, %385 : vector<8x1xf32>
    %cst_124 = arith.constant 5.000000e-01 : f32
    %388 = vector.broadcast %cst_124 : f32 to vector<1x1xf32>
    %389 = arith.mulf %388, %380 : vector<1x1xf32>
    %390 = arith.mulf %389, %380 : vector<1x1xf32>
    %391 = vector.broadcast %390 : vector<1x1xf32> to vector<8x1xf32>
    %392 = arith.mulf %387, %391 : vector<8x1xf32>
    %393 = math.exp %392 : vector<8x1xf32>
    %394 = vector.broadcast %384 : vector<1x1xf32> to vector<8x1xf32>
    %395 = arith.mulf %394, %393 : vector<8x1xf32>
    %cst_125 = arith.constant dense<0xFF800000> : vector<1xf32>
    %396 = vector.multi_reduction <maximumf>, %395, %cst_125 [0] : vector<8x1xf32> to vector<1xf32>
    %397 = vector.shape_cast %396 : vector<1xf32> to vector<1x1xf32>
    %398 = tpu.reciprocal %397 {approx = true} : vector<1x1xf32> -> vector<1x1xf32>
    %399 = vector.broadcast %398 : vector<1x1xf32> to vector<8x1xf32>
    %400 = arith.mulf %395, %399 : vector<8x1xf32>
    %cst_126 = arith.constant dense<0xFF800000> : vector<1xf32>
    %401 = vector.multi_reduction <maximumf>, %400, %cst_126 [0] : vector<8x1xf32> to vector<1xf32>
    %402 = vector.shape_cast %401 : vector<1xf32> to vector<1x1xf32>
    %403 = vector.broadcast %402 : vector<1x1xf32> to vector<8x1xf32>
    %404 = arith.subf %400, %403 : vector<8x1xf32>
    %405 = math.exp %404 : vector<8x1xf32>
    %cst_127 = arith.constant dense<0.000000e+00> : vector<1xf32>
    %406 = vector.multi_reduction <add>, %405, %cst_127 [0] : vector<8x1xf32> to vector<1xf32>
    %407 = vector.shape_cast %406 : vector<1xf32> to vector<1x1xf32>
    %408 = tpu.reciprocal %407 {approx = true} : vector<1x1xf32> -> vector<1x1xf32>
    %409 = vector.broadcast %408 : vector<1x1xf32> to vector<8x1xf32>
    %410 = arith.mulf %405, %409 : vector<8x1xf32>
    %cst_128 = arith.constant 1.000000e-10 : f32
    %411 = vector.broadcast %cst_128 : f32 to vector<8x1xf32>
    %412 = arith.addf %410, %411 : vector<8x1xf32>
    %413 = vector.broadcast %412 : vector<8x1xf32> to vector<8x16xf32>
    %414 = arith.mulf %361, %413 : vector<8x16xf32>
    %cst_129 = arith.constant dense<0.000000e+00> : vector<8xf32>
    %415 = vector.multi_reduction <add>, %414, %cst_129 [1] : vector<8x16xf32> to vector<8xf32>
    %416 = vector.shape_cast %415 : vector<8xf32> to vector<8x1xf32>
    %417 = tpu.reciprocal %416 {approx = true} : vector<8x1xf32> -> vector<8x1xf32>
    %418 = vector.broadcast %417 : vector<8x1xf32> to vector<8x16xf32>
    %419 = arith.mulf %414, %418 : vector<8x16xf32>
    %420 = arith.addf %332, %419 : vector<8x16xf32>
    %421 = arith.truncf %419 : vector<8x16xf32> to vector<8x16xbf16>
    %422 = arith.truncf %344 : vector<16x8xf32> to vector<16x8xbf16>
    %cst_130 = arith.constant dense<0.000000e+00> : vector<8x8xf32>
    %423 = tpu.matmul %421, %422, %cst_130 {dimension_numbers = #tpu.dot_dimension_numbers<[1], [0], [0], [1], [0, 0, 1, 1], [], []>} : vector<8x16xbf16>, vector<16x8xbf16>, vector<8x8xf32> -> vector<8x8xf32>
    %424 = vector.extract_strided_slice %71 {offsets = [24, 0], sizes = [8, 32], strides = [1, 1]} : vector<32x32xbf16> to vector<8x32xbf16>
    %425 = arith.truncf %423 : vector<8x8xf32> to vector<8x8xbf16>
    %cst_131 = arith.constant dense<0.000000e+00> : vector<8x32xf32>
    %426 = tpu.matmul %425, %424, %cst_131 {dimension_numbers = #tpu.dot_dimension_numbers<[1], [0], [0], [1], [0, 0, 1, 1], [], []>} : vector<8x8xbf16>, vector<8x32xbf16>, vector<8x32xf32> -> vector<8x32xf32>
    %427 = arith.addf %339, %426 : vector<8x32xf32>
    %c0_132 = arith.constant 0 : index
    %c0_133 = arith.constant 0 : index
    %428 = vector.load %arg17[%c0_132, %c0_133] : memref<1x32xf32, #tpu.memory_space<vmem>>, vector<1x32xf32>
    %429 = vector.broadcast %428 : vector<1x32xf32> to vector<8x32xf32>
    %430 = arith.addf %427, %429 : vector<8x32xf32>
    %cst_134 = arith.constant 2.500000e-01 : f32
    %431 = vector.broadcast %cst_134 : f32 to vector<8x16xf32>
    %432 = arith.mulf %420, %431 : vector<8x16xf32>
    %c0_135 = arith.constant 0 : index
    %c0_136 = arith.constant 0 : index
    %c0_137 = arith.constant 0 : index
    %433 = vector.load %arg21[%c0_135, %c0_136, %c0_137] : memref<1x8x16xf32, #tpu.memory_space<vmem>>, vector<1x8x16xf32>
    %434 = vector.shape_cast %433 : vector<1x8x16xf32> to vector<8x16xf32>
    %435 = vector.shape_cast %432 : vector<8x16xf32> to vector<1x8x16xf32>
    tpu.vector_store %arg21[%c0_135, %c0_136, %c0_137], %435 {strides = array<i32>} : memref<1x8x16xf32, #tpu.memory_space<vmem>>, vector<1x8x16xf32>,
    %436 = arith.addf %1, %430 : vector<8x32xf32>
    %c0_138 = arith.constant 0 : index
    %c0_139 = arith.constant 0 : index
    %437 = vector.load %arg18[%c0_138, %c0_139] : memref<1x32xf32, #tpu.memory_space<vmem>>, vector<1x32xf32>
    %c0_140 = arith.constant 0 : index
    %c0_141 = arith.constant 0 : index
    %438 = vector.load %arg19[%c0_140, %c0_141] : memref<1x32xf32, #tpu.memory_space<vmem>>, vector<1x32xf32>
    %cst_142 = arith.constant dense<0.000000e+00> : vector<8xf32>
    %439 = vector.multi_reduction <add>, %436, %cst_142 [1] : vector<8x32xf32> to vector<8xf32>
    %440 = vector.shape_cast %439 : vector<8xf32> to vector<8x1xf32>
    %cst_143 = arith.constant 3.200000e+01 : f32
    %441 = vector.broadcast %cst_143 : f32 to vector<8x1xf32>
    %442 = arith.divf %440, %441 : vector<8x1xf32>
    %443 = vector.broadcast %442 : vector<8x1xf32> to vector<8x32xf32>
    %444 = arith.subf %436, %443 : vector<8x32xf32>
    %445 = arith.mulf %444, %444 : vector<8x32xf32>
    %cst_144 = arith.constant dense<0.000000e+00> : vector<8xf32>
    %446 = vector.multi_reduction <add>, %445, %cst_144 [1] : vector<8x32xf32> to vector<8xf32>
    %447 = vector.shape_cast %446 : vector<8xf32> to vector<8x1xf32>
    %cst_145 = arith.constant 3.200000e+01 : f32
    %448 = vector.broadcast %cst_145 : f32 to vector<8x1xf32>
    %449 = arith.divf %447, %448 : vector<8x1xf32>
    %cst_146 = arith.constant 9.99999974E-6 : f32
    %450 = vector.broadcast %cst_146 : f32 to vector<8x1xf32>
    %451 = arith.addf %449, %450 : vector<8x1xf32>
    %452 = math.rsqrt %451 : vector<8x1xf32>
    %453 = vector.broadcast %452 : vector<8x1xf32> to vector<8x32xf32>
    %454 = arith.mulf %444, %453 : vector<8x32xf32>
    %455 = vector.broadcast %437 : vector<1x32xf32> to vector<8x32xf32>
    %456 = arith.mulf %454, %455 : vector<8x32xf32>
    %457 = vector.broadcast %438 : vector<1x32xf32> to vector<8x32xf32>
    %458 = arith.addf %456, %457 : vector<8x32xf32>
    %c0_147 = arith.constant 0 : index
    %c0_148 = arith.constant 0 : index
    %c0_149 = arith.constant 0 : index
    %459 = vector.load %arg20[%c0_147, %c0_148, %c0_149] : memref<1x8x32xf32, #tpu.memory_space<vmem>>, vector<1x8x32xf32>
    %460 = vector.shape_cast %459 : vector<1x8x32xf32> to vector<8x32xf32>
    %461 = vector.shape_cast %458 : vector<8x32xf32> to vector<1x8x32xf32>
    tpu.vector_store %arg20[%c0_147, %c0_148, %c0_149], %461 {strides = array<i32>} : memref<1x8x32xf32, #tpu.memory_space<vmem>>, vector<1x8x32xf32>,
    return
  }
  func.func @transform_0(%arg0: i32) -> (i32, i32, i32) {
    %c0_i32 = arith.constant 0 : i32
    %c0_i32_0 = arith.constant 0 : i32
    %c0_i32_1 = arith.constant 0 : i32
    return %arg0, %c0_i32, %c0_i32_0 : i32, i32, i32
  }
  func.func @transform_1(%arg0: i32) -> (i32, i32, i32) {
    %c0_i32 = arith.constant 0 : i32
    %c0_i32_0 = arith.constant 0 : i32
    %c0_i32_1 = arith.constant 0 : i32
    return %arg0, %c0_i32, %c0_i32_0 : i32, i32, i32
  }
  func.func @transform_2(%arg0: i32) -> (i32, i32, i32) {
    %c0_i32 = arith.constant 0 : i32
    %c0_i32_0 = arith.constant 0 : i32
    %c0_i32_1 = arith.constant 0 : i32
    return %arg0, %c0_i32, %c0_i32_0 : i32, i32, i32
  }
  func.func @transform_3(%arg0: i32) -> (i32, i32, i32) {
    %c0_i32 = arith.constant 0 : i32
    %c0_i32_0 = arith.constant 0 : i32
    %c0_i32_1 = arith.constant 0 : i32
    return %arg0, %c0_i32, %c0_i32_0 : i32, i32, i32
  }
  func.func @transform_4(%arg0: i32) -> (i32, i32, i32) {
    %c0_i32 = arith.constant 0 : i32
    %c0_i32_0 = arith.constant 0 : i32
    %c0_i32_1 = arith.constant 0 : i32
    return %arg0, %c0_i32, %c0_i32_0 : i32, i32, i32
  }
  func.func @transform_5(%arg0: i32) -> (i32, i32) {
    %c0_i32 = arith.constant 0 : i32
    %c0_i32_0 = arith.constant 0 : i32
    %c0_i32_1 = arith.constant 0 : i32
    return %c0_i32, %c0_i32_0 : i32, i32
  }
  func.func @transform_6(%arg0: i32) -> (i32, i32) {
    %c0_i32 = arith.constant 0 : i32
    %c0_i32_0 = arith.constant 0 : i32
    %c0_i32_1 = arith.constant 0 : i32
    return %c0_i32, %c0_i32_0 : i32, i32
  }
  func.func @transform_7(%arg0: i32) -> (i32, i32) {
    %c0_i32 = arith.constant 0 : i32
    %c0_i32_0 = arith.constant 0 : i32
    %c0_i32_1 = arith.constant 0 : i32
    return %c0_i32, %c0_i32_0 : i32, i32
  }
  func.func @transform_8(%arg0: i32) -> (i32, i32) {
    %c0_i32 = arith.constant 0 : i32
    %c0_i32_0 = arith.constant 0 : i32
    %c0_i32_1 = arith.constant 0 : i32
    return %c0_i32, %c0_i32_0 : i32, i32
  }
  func.func @transform_9(%arg0: i32) -> (i32, i32) {
    %c0_i32 = arith.constant 0 : i32
    %c0_i32_0 = arith.constant 0 : i32
    %c0_i32_1 = arith.constant 0 : i32
    return %c0_i32, %c0_i32_0 : i32, i32
  }
  func.func @transform_10(%arg0: i32) -> (i32, i32) {
    %c0_i32 = arith.constant 0 : i32
    %c0_i32_0 = arith.constant 0 : i32
    %c0_i32_1 = arith.constant 0 : i32
    return %c0_i32, %c0_i32_0 : i32, i32
  }
  func.func @transform_11(%arg0: i32) -> (i32, i32) {
    %c0_i32 = arith.constant 0 : i32
    %c0_i32_0 = arith.constant 0 : i32
    %c0_i32_1 = arith.constant 0 : i32
    return %c0_i32, %c0_i32_0 : i32, i32
  }
  func.func @transform_12(%arg0: i32) -> (i32, i32) {
    %c0_i32 = arith.constant 0 : i32
    %c0_i32_0 = arith.constant 0 : i32
    %c0_i32_1 = arith.constant 0 : i32
    return %c0_i32, %c0_i32_0 : i32, i32
  }
  func.func @transform_13(%arg0: i32) -> (i32, i32) {
    %c0_i32 = arith.constant 0 : i32
    %c0_i32_0 = arith.constant 0 : i32
    %c0_i32_1 = arith.constant 0 : i32
    return %c0_i32, %c0_i32_0 : i32, i32
  }
  func.func @transform_14(%arg0: i32) -> (i32, i32) {
    %c0_i32 = arith.constant 0 : i32
    %c0_i32_0 = arith.constant 0 : i32
    %c0_i32_1 = arith.constant 0 : i32
    return %c0_i32, %c0_i32_0 : i32, i32
  }
  func.func @transform_15(%arg0: i32) -> (i32, i32) {
    %c0_i32 = arith.constant 0 : i32
    %c0_i32_0 = arith.constant 0 : i32
    %c0_i32_1 = arith.constant 0 : i32
    return %c0_i32, %c0_i32_0 : i32, i32
  }
  func.func @transform_16(%arg0: i32) -> (i32, i32) {
    %c0_i32 = arith.constant 0 : i32
    %c0_i32_0 = arith.constant 0 : i32
    %c0_i32_1 = arith.constant 0 : i32
    return %c0_i32, %c0_i32_0 : i32, i32
  }
  func.func @transform_17(%arg0: i32) -> (i32, i32) {
    %c0_i32 = arith.constant 0 : i32
    %c0_i32_0 = arith.constant 0 : i32
    %c0_i32_1 = arith.constant 0 : i32
    return %c0_i32, %c0_i32_0 : i32, i32
  }
  func.func @transform_18(%arg0: i32) -> (i32, i32) {
    %c0_i32 = arith.constant 0 : i32
    %c0_i32_0 = arith.constant 0 : i32
    %c0_i32_1 = arith.constant 0 : i32
    return %c0_i32, %c0_i32_0 : i32, i32
  }
  func.func @transform_19(%arg0: i32) -> (i32, i32, i32) {
    %c0_i32 = arith.constant 0 : i32
    %c0_i32_0 = arith.constant 0 : i32
    %c0_i32_1 = arith.constant 0 : i32
    return %arg0, %c0_i32, %c0_i32_0 : i32, i32, i32
  }
  func.func @transform_20(%arg0: i32) -> (i32, i32, i32) {
    %c0_i32 = arith.constant 0 : i32
    %c0_i32_0 = arith.constant 0 : i32
    %c0_i32_1 = arith.constant 0 : i32
    return %arg0, %c0_i32, %c0_i32_0 : i32, i32, i32
  }
  func.func @transform_21(%arg0: i32) -> (i32, i32, i32) {
    %c0_i32 = arith.constant 0 : i32
    %c0_i32_0 = arith.constant 0 : i32
    %c0_i32_1 = arith.constant 0 : i32
    return %arg0, %c0_i32, %c0_i32_0 : i32, i32, i32
  }
}

</mosaic_0001>

<llo_original>
// kernel: q2v_decoder_layer.5
$region0: #{q2v_decoder_layer.5}
  #allocation0 [shape = 'u32[]', space=smem, size = 0x4, offset = 0x4, fixed_abs, tag = 'smem constant byte address 0x4 - core index']
  #allocation1 [shape = 'u32[72,128]{1,0:T(1,128)}', space=vmem, size = 0x9000, scoped, tag = 'internal scratch']
  %s0 = inlined_call_operand.vmem [shape: f32[2,8,32], index: 0, kind: input, shape index: {}]
  %s1 = inlined_call_operand.vmem [shape: bf16[32,64], index: 1, kind: input, shape index: {}]
  %s2 = inlined_call_operand.vmem [shape: f32[1,64], index: 2, kind: input, shape index: {}]
  %s3 = inlined_call_operand.vmem [shape: bf16[64,32], index: 3, kind: input, shape index: {}]
  %s4 = inlined_call_operand.vmem [shape: f32[1,32], index: 4, kind: input, shape index: {}]
  %s5 = inlined_call_operand.vmem [shape: f32[1,32], index: 5, kind: input, shape index: {}]
  %s6 = inlined_call_operand.vmem [shape: f32[1,32], index: 6, kind: input, shape index: {}]
  %s7 = inlined_call_operand.hbm [shape: f32[2,8,32], index: 7, kind: output, shape index: {}]
  %s8 = sld [smem:[#allocation0]]
  $region61: #{q2v_decoder_layer.5} parent=0
    _
  %s10 = ssub.s32 1, %s8
  %s11 = scalar_select 0, %s10, %s8
  $region1: #{q2v_decoder_layer.5} parent=0
    #allocation2 [shape = 'u8[8192]{0}', space=vmem, size = 0x2000, scoped, tag = 'output window, operand 0']
    #allocation3 [shape = 's32[2]{0}', space=sflag, size = 0x8, scoped, tag = 'scoped memory for q2v_decoder_layer.5']
    %12 = vsyncpa [#allocation3], 0
    %s13 = scalar_lea.sflag [#allocation3], 1
    %14 = vsyncpa %s13, 0
    loop: start=0, step=1, limit=4
    $region2: #{q2v_decoder_layer.5} parent=1 // loop_pre_header
      _
    $region3: #{q2v_decoder_layer.5} parent=1 // loop_header
      %s16 = sphi 0, %s20
      %p17 = scmp.ge.s32.totalorder %s16, 4
      %s26 = sphi 0, %s28
      %s29 = sphi 0, %s26
      %s30 = sphi 0, %s29
      %s46 = sphi 0, %s30
      %s50 = sphi 0, %s50
      %s52 = sphi 0, %s50
      %s53 = sphi 0, %s52
      %s67 = sphi 0, %s53
      %s71 = sphi 0, %s71
      %s73 = sphi 0, %s71
      %s74 = sphi 0, %s73
      %s88 = sphi 0, %s74
      %s92 = sphi 0, %s92
      %s94 = sphi 0, %s92
      %s95 = sphi 0, %s94
      %s109 = sphi 0, %s95
      %s113 = sphi 0, %s113
      %s115 = sphi 0, %s113
      %s116 = sphi 0, %s115
      %s130 = sphi 0, %s116
      %s134 = sphi 0, %s134
      %s136 = sphi 0, %s134
      %s137 = sphi 0, %s136
      %s151 = sphi 0, %s137
      %s155 = sphi 0, %s155
      %s157 = sphi 0, %s155
      %s158 = sphi 0, %s157
      %s172 = sphi 0, %s158
      %s178 = sphi 0, %s180
      %s181 = sphi 0, %s178
      %s182 = sphi 0, %s181
      %s198 = sphi 0, %s182
    $region4: #{q2v_decoder_layer.5} parent=1 // loop_header_branch
      %19 = sbr.rel (%p17) target = $region8
    $region5: #{q2v_decoder_layer.5} parent=1 // loop_body
      %s21 = ssub.s32 %s16, 1
      %s22 = ssub.s32 %s16, 2
      %s23 = sadd.s32 %s16, 1
      %s24 = ssub.s32 %s16, %s23
      %p25 = scmp.eq.s32.totalorder %s24, 0
      %s27 = sadd.s32 %s26, 1
      %s28 = scalar_select %p25, %s26, %s27
      %p31 = pneg %p25
      %p32 = scmp.eq.s32.totalorder %s16, 1
      %p33 = por %p31, %p32
      %p34 = scmp.ne.s32.totalorder %s26, %s29
      %p35 = scmp.eq.s32.totalorder %s16, 0
      %p36 = por %p34, %p35
      %p37 = scmp.ne.s32.totalorder %s26, %s29
      %p38 = scmp.eq.s32.totalorder %s21, 1
      %p39 = por %p37, %p38
      %p40 = scmp.ne.s32.totalorder %s29, %s30
      %p41 = scmp.eq.s32.totalorder %s21, 0
      %p42 = por %p40, %p41
      %p43 = scmp.ne.s32.totalorder %s29, %s30
      %p44 = scmp.eq.s32.totalorder %s22, 1
      %p45 = por %p43, %p44
      %p47 = scmp.ne.s32.totalorder %s30, %s46
      %p48 = scmp.eq.s32.totalorder %s22, 0
      %p49 = por %p47, %p48
      %s51 = sadd.s32 %s50, 1
      %p54 = scmp.eq.s32.totalorder %s16, 1
      %p55 = scmp.ne.s32.totalorder %s50, %s52
      %p56 = scmp.eq.s32.totalorder %s16, 0
      %p57 = por %p55, %p56
      %p58 = scmp.ne.s32.totalorder %s50, %s52
      %p59 = scmp.eq.s32.totalorder %s21, 1
      %p60 = por %p58, %p59
      %p61 = scmp.ne.s32.totalorder %s52, %s53
      %p62 = scmp.eq.s32.totalorder %s21, 0
      %p63 = por %p61, %p62
      %p64 = scmp.ne.s32.totalorder %s52, %s53
      %p65 = scmp.eq.s32.totalorder %s22, 1
      %p66 = por %p64, %p65
      %p68 = scmp.ne.s32.totalorder %s53, %s67
      %p69 = scmp.eq.s32.totalorder %s22, 0
      %p70 = por %p68, %p69
      %s72 = sadd.s32 %s71, 1
      %p75 = scmp.eq.s32.totalorder %s16, 1
      %p76 = scmp.ne.s32.totalorder %s71, %s73
      %p77 = scmp.eq.s32.totalorder %s16, 0
      %p78 = por %p76, %p77
      %p79 = scmp.ne.s32.totalorder %s71, %s73
      %p80 = scmp.eq.s32.totalorder %s21, 1
      %p81 = por %p79, %p80
      %p82 = scmp.ne.s32.totalorder %s73, %s74
      %p83 = scmp.eq.s32.totalorder %s21, 0
      %p84 = por %p82, %p83
      %p85 = scmp.ne.s32.totalorder %s73, %s74
      %p86 = scmp.eq.s32.totalorder %s22, 1
      %p87 = por %p85, %p86
      %p89 = scmp.ne.s32.totalorder %s74, %s88
      %p90 = scmp.eq.s32.totalorder %s22, 0
      %p91 = por %p89, %p90
      %s93 = sadd.s32 %s92, 1
      %p96 = scmp.eq.s32.totalorder %s16, 1
      %p97 = scmp.ne.s32.totalorder %s92, %s94
      %p98 = scmp.eq.s32.totalorder %s16, 0
      %p99 = por %p97, %p98
      %p100 = scmp.ne.s32.totalorder %s92, %s94
      %p101 = scmp.eq.s32.totalorder %s21, 1
      %p102 = por %p100, %p101
      %p103 = scmp.ne.s32.totalorder %s94, %s95
      %p104 = scmp.eq.s32.totalorder %s21, 0
      %p105 = por %p103, %p104
      %p106 = scmp.ne.s32.totalorder %s94, %s95
      %p107 = scmp.eq.s32.totalorder %s22, 1
      %p108 = por %p106, %p107
      %p110 = scmp.ne.s32.totalorder %s95, %s109
      %p111 = scmp.eq.s32.totalorder %s22, 0
      %p112 = por %p110, %p111
      %s114 = sadd.s32 %s113, 1
      %p117 = scmp.eq.s32.totalorder %s16, 1
      %p118 = scmp.ne.s32.totalorder %s113, %s115
      %p119 = scmp.eq.s32.totalorder %s16, 0
      %p120 = por %p118, %p119
      %p121 = scmp.ne.s32.totalorder %s113, %s115
      %p122 = scmp.eq.s32.totalorder %s21, 1
      %p123 = por %p121, %p122
      %p124 = scmp.ne.s32.totalorder %s115, %s116
      %p125 = scmp.eq.s32.totalorder %s21, 0
      %p126 = por %p124, %p125
      %p127 = scmp.ne.s32.totalorder %s115, %s116
      %p128 = scmp.eq.s32.totalorder %s22, 1
      %p129 = por %p127, %p128
      %p131 = scmp.ne.s32.totalorder %s116, %s130
      %p132 = scmp.eq.s32.totalorder %s22, 0
      %p133 = por %p131, %p132
      %s135 = sadd.s32 %s134, 1
      %p138 = scmp.eq.s32.totalorder %s16, 1
      %p139 = scmp.ne.s32.totalorder %s134, %s136
      %p140 = scmp.eq.s32.totalorder %s16, 0
      %p141 = por %p139, %p140
      %p142 = scmp.ne.s32.totalorder %s134, %s136
      %p143 = scmp.eq.s32.totalorder %s21, 1
      %p144 = por %p142, %p143
      %p145 = scmp.ne.s32.totalorder %s136, %s137
      %p146 = scmp.eq.s32.totalorder %s21, 0
      %p147 = por %p145, %p146
      %p148 = scmp.ne.s32.totalorder %s136, %s137
      %p149 = scmp.eq.s32.totalorder %s22, 1
      %p150 = por %p148, %p149
      %p152 = scmp.ne.s32.totalorder %s137, %s151
      %p153 = scmp.eq.s32.totalorder %s22, 0
      %p154 = por %p152, %p153
      %s156 = sadd.s32 %s155, 1
      %p159 = scmp.eq.s32.totalorder %s16, 1
      %p160 = scmp.ne.s32.totalorder %s155, %s157
      %p161 = scmp.eq.s32.totalorder %s16, 0
      %p162 = por %p160, %p161
      %p163 = scmp.ne.s32.totalorder %s155, %s157
      %p164 = scmp.eq.s32.totalorder %s21, 1
      %p165 = por %p163, %p164
      %p166 = scmp.ne.s32.totalorder %s157, %s158
      %p167 = scmp.eq.s32.totalorder %s21, 0
      %p168 = por %p166, %p167
      %p169 = scmp.ne.s32.totalorder %s157, %s158
      %p170 = scmp.eq.s32.totalorder %s22, 1
      %p171 = por %p169, %p170
      %p173 = scmp.ne.s32.totalorder %s158, %s172
      %p174 = scmp.eq.s32.totalorder %s22, 0
      %p175 = por %p173, %p174
      %s176 = ssub.s32 %s16, %s23
      %p177 = scmp.eq.s32.totalorder %s176, 0
      %s179 = sadd.s32 %s178, 1
      %s180 = scalar_select %p177, %s178, %s179
      %p183 = pneg %p177
      %p184 = scmp.eq.s32.totalorder %s16, 1
      %p185 = por %p183, %p184
      %p186 = scmp.ne.s32.totalorder %s178, %s181
      %p187 = scmp.eq.s32.totalorder %s16, 0
      %p188 = por %p186, %p187
      %p189 = scmp.ne.s32.totalorder %s178, %s181
      %p190 = scmp.eq.s32.totalorder %s21, 1
      %p191 = por %p189, %p190
      %p192 = scmp.ne.s32.totalorder %s181, %s182
      %p193 = scmp.eq.s32.totalorder %s21, 0
      %p194 = por %p192, %p193
      %p195 = scmp.ne.s32.totalorder %s181, %s182
      %p196 = scmp.eq.s32.totalorder %s22, 1
      %p197 = por %p195, %p196
      %p199 = scmp.ne.s32.totalorder %s182, %s198
      %p200 = scmp.eq.s32.totalorder %s22, 0
      %p201 = por %p199, %p200
      %p202 = scmp.le.s32.totalorder 1, %s16
      %p203 = scmp.lt.s32.totalorder %s16, 3
      %p204 = pnand %p202, %p203
      %p205 = pneg %p204
      // Predicated region
      $region9: #{q2v_decoder_layer.5} parent=5 // pred_check
        _
      $region10: #{q2v_decoder_layer.5} parent=5 // pred_check_branch
        %207 = sbr.rel (%p204) target = $region12
      $region11: #{q2v_decoder_layer.5} parent=5 // pred_region
        %s208 = ssub.s32 %s16, 1
        // Predicated region
        $region13: #{q2v_decoder_layer.5} parent=11 // pred_check
          %p209 = pneg %p63
        $region14: #{q2v_decoder_layer.5} parent=11 // pred_check_branch
          %211 = sbr.rel (%p209) target = $region16
        $region15: #{q2v_decoder_layer.5} parent=11 // pred_region
          _
        $region16: #{q2v_decoder_layer.5} parent=11 // pred_fallthru
          _
        // Predicated region
        $region17: #{q2v_decoder_layer.5} parent=11 // pred_check
          %p212 = pneg %p84
        $region18: #{q2v_decoder_layer.5} parent=11 // pred_check_branch
          %214 = sbr.rel (%p212) target = $region20
        $region19: #{q2v_decoder_layer.5} parent=11 // pred_region
          _
        $region20: #{q2v_decoder_layer.5} parent=11 // pred_fallthru
          _
        // Predicated region
        $region21: #{q2v_decoder_layer.5} parent=11 // pred_check
          %p215 = pneg %p105
        $region22: #{q2v_decoder_layer.5} parent=11 // pred_check_branch
          %217 = sbr.rel (%p215) target = $region24
        $region23: #{q2v_decoder_layer.5} parent=11 // pred_region
          _
        $region24: #{q2v_decoder_layer.5} parent=11 // pred_fallthru
          _
        // Predicated region
        $region25: #{q2v_decoder_layer.5} parent=11 // pred_check
          %p218 = pneg %p126
        $region26: #{q2v_decoder_layer.5} parent=11 // pred_check_branch
          %220 = sbr.rel (%p218) target = $region28
        $region27: #{q2v_decoder_layer.5} parent=11 // pred_region
          _
        $region28: #{q2v_decoder_layer.5} parent=11 // pred_fallthru
          _
        // Predicated region
        $region29: #{q2v_decoder_layer.5} parent=11 // pred_check
          %p221 = pneg %p147
        $region30: #{q2v_decoder_layer.5} parent=11 // pred_check_branch
          %223 = sbr.rel (%p221) target = $region32
        $region31: #{q2v_decoder_layer.5} parent=11 // pred_region
          _
        $region32: #{q2v_decoder_layer.5} parent=11 // pred_fallthru
          _
        // Predicated region
        $region33: #{q2v_decoder_layer.5} parent=11 // pred_check
          %p224 = pneg %p168
        $region34: #{q2v_decoder_layer.5} parent=11 // pred_check_branch
          %226 = sbr.rel (%p224) target = $region36
        $region35: #{q2v_decoder_layer.5} parent=11 // pred_region
          _
        $region36: #{q2v_decoder_layer.5} parent=11 // pred_fallthru
          _
      $region12: #{q2v_decoder_layer.5} parent=5 // pred_fallthru
        _
      %p227 = scmp.lt.s32.totalorder %s16, 2
      // Predicated region
      $region37: #{q2v_decoder_layer.5} parent=5 // pred_check
        %p228 = pneg %p227
      $region38: #{q2v_decoder_layer.5} parent=5 // pred_check_branch
        %230 = sbr.rel (%p228) target = $region40
      $region39: #{q2v_decoder_layer.5} parent=5 // pred_region
        // Predicated region
        $region41: #{q2v_decoder_layer.5} parent=39 // pred_check
          %p231 = pneg %p36
        $region42: #{q2v_decoder_layer.5} parent=39 // pred_check_branch
          %233 = sbr.rel (%p231) target = $region44
        $region43: #{q2v_decoder_layer.5} parent=39 // pred_region
          %p234 = scmp.lt.s32.totalorder %s16, 1
          %s235 = scalar_select %p234, %s16, 1
          %s236 = smul.addr %s235, 8
          %s237 = scalar_lea.vmem %s0, %s236
        $region44: #{q2v_decoder_layer.5} parent=39 // pred_fallthru
          _
      $region40: #{q2v_decoder_layer.5} parent=5 // pred_fallthru
        _
      %p238 = scmp.le.s32.totalorder 1, %s16
      %p239 = scmp.lt.s32.totalorder %s16, 3
      %p240 = pnand %p238, %p239
      %p241 = pneg %p240
      // Predicated region
      $region45: #{q2v_decoder_layer.5} parent=5 // pred_check
        _
      $region46: #{q2v_decoder_layer.5} parent=5 // pred_check_branch
        %243 = sbr.rel (%p240) target = $region48
      $region47: #{q2v_decoder_layer.5} parent=5 // pred_region
        %s244 = ssub.s32 %s16, 1
        %p245 = scmp.lt.s32.totalorder %s21, 1
        %s246 = scalar_select %p245, %s21, 1
        %s247 = smul.addr %s246, 8
        %s248 = scalar_lea.vmem %s0, %s247
        %p249 = pneg %p42
        %p250 = pneg %p39
        %p251 = pneg %p63
        %p252 = pneg %p60
        %p253 = pneg %p84
        %p254 = pneg %p81
        %p255 = pneg %p105
        %p256 = pneg %p102
        %p257 = pneg %p126
        %p258 = pneg %p123
        %p259 = pneg %p147
        %p260 = pneg %p144
        %p261 = pneg %p168
        %p262 = pneg %p165
        %p263 = pneg %p194
        %p264 = pneg %p191
        %s265 = sand.u32 %s181, 1
        %s266 = scalar_lea.sflag [#allocation3], %s265
        %s267 = sand.u32 %s181, 1
        %s268 = smul.addr %s267, 8
        %s269 = scalar_lea.vmem [#allocation2], %s268
        %p270 = scmp.lt.s32.totalorder %s21, 1
        %s271 = scalar_select %p270, %s21, 1
        %s272 = smul.addr %s271, 8
        %s273 = scalar_lea.vmem %s0, %s272
        %v275 = vld [vmem:[%s273] sm:$0xff]
        %v276 = vld [vmem:[%s1] sm:$0xf]
        %v277 = vld [vmem:[%s1 + $0x4] sm:$0xf]
        %v278 = vld [vmem:[%s1 + $0x8] sm:$0xf]
        %v279 = vld [vmem:[%s1 + $0xc] sm:$0xf]
        %v280 = vpack.c.bf16 %v275, %v275
        %v281 = vld [vmem:[%s2] sm:$0x1]
        %v283 = vperm.slane %v281, 0
        %v289 = vunpack.c.l.b16 %v276
        %v290 = vunpack.c.l.b16 %v277
        %v291 = vunpack.c.l.b16 %v278
        %v292 = vunpack.c.l.b16 %v279
        %v293 = vpack.c.b16 %v290, %v289
        %v294 = vpack.c.b16 %v292, %v291
        %vm297 = vcmask 261120
        %v299 = vsel %vm297, %v280, 0
        %301 = vmatpush.bf16.msra.mxu0 0
        %302 = vmatpush.bf16.msra.mxu0 0
        %303 = vmatpush.bf16.msra.mxu0 0
        %304 = vmatpush.bf16.msra.mxu0 0
        %305 = vmatpush.bf16.msra.mxu0 0
        %306 = vmatpush.bf16.msra.mxu0 0
        %307 = vmatpush.bf16.msra.mxu0 %v294
        %308 = vmatpush.bf16.msra.mxu0 %v293
        %309 = vmatmul.bf16.gmra.mxu0 %v299
        %v310 = vpop.f32.mrf.mxu0
        %v311 = vadd.f32 %v283, %v310
        %v312 = vpop.f32.mrf.mxu0
        %313 = vdwg.mxu0
        %v314 = vmax.f32 %v311, 0.0
        %v315 = vld [vmem:[%s3] sm:$0xf]
        %v316 = vld [vmem:[%s3 + $0x4] sm:$0xf]
        %v317 = vld [vmem:[%s3 + $0x8] sm:$0xf]
        %v318 = vld [vmem:[%s3 + $0xc] sm:$0xf]
        %v319 = vld [vmem:[%s3 + $0x10] sm:$0xf]
        %v320 = vld [vmem:[%s3 + $0x14] sm:$0xf]
        %v321 = vld [vmem:[%s3 + $0x18] sm:$0xf]
        %v322 = vld [vmem:[%s3 + $0x1c] sm:$0xf]
        %v323 = vpack.c.bf16 %v314, %v314
        %v324 = vld [vmem:[%s4] sm:$0x1]
        %v326 = vperm.slane %v324, 0
        %v336 = vunpack.c.l.b16 %v315
        %v337 = vunpack.c.l.b16 %v316
        %v338 = vunpack.c.l.b16 %v317
        %v339 = vunpack.c.l.b16 %v318
        %v340 = vunpack.c.l.b16 %v319
        %v341 = vunpack.c.l.b16 %v320
        %v342 = vunpack.c.l.b16 %v321
        %v343 = vunpack.c.l.b16 %v322
        %v344 = vpack.c.b16 %v337, %v336
        %v345 = vpack.c.b16 %v339, %v338
        %v346 = vpack.c.b16 %v341, %v340
        %v347 = vpack.c.b16 %v343, %v342
        %vm352 = vcmask 523264
        %v354 = vsel %vm352, %v323, 0
        %356 = vmatpush.bf16.msra.mxu0 0
        %357 = vmatpush.bf16.msra.mxu0 0
        %358 = vmatpush.bf16.msra.mxu0 0
        %359 = vmatpush.bf16.msra.mxu0 0
        %360 = vmatpush.bf16.msra.mxu0 %v347
        %361 = vmatpush.bf16.msra.mxu0 %v346
        %362 = vmatpush.bf16.msra.mxu0 %v345
        %363 = vmatpush.bf16.msra.mxu0 %v344
        %364 = vmatmul.bf16.gmra.mxu0 %v354
        %v365 = vpop.f32.mrf.mxu0
        %v366 = vadd.f32 %v326, %v365
        %v367 = vpop.f32.mrf.mxu0
        %368 = vdwg.mxu0
        %v369 = vadd.f32 %v275, %v366
        %v370 = vld [vmem:[%s5] sm:$0x1]
        %v371 = vld [vmem:[%s6] sm:$0x1]
        %v372 = vsel %vm297, %v369, 0.0
        %373 = vadd.xlane.f32.xlu0 %v372
        %v374 = vpop.xlane.xlu0 %373
        %v375 = vrcp.pop 32.0
        %v376 = vmul.f32 32.0, %v375
        %v377 = vsub.f32 1.0, %v376
        %v378 = vmul.f32 %v375, %v377
        %v379 = vadd.f32 %v375, %v378
        %vm380 = vweird.f32 %v375
        %v381 = vsel %vm380, %v375, %v379
        %v382 = vmul.f32 %v374, %v381
        %v383 = vsub.f32 %v369, %v382
        %v384 = vmul.f32 %v383, %v383
        %v385 = vsel %vm297, %v384, 0.0
        %386 = vadd.xlane.f32.xlu0 %v385
        %v387 = vpop.xlane.xlu0 %386
        %v388 = vmul.f32 %v387, %v381
        %v389 = vadd.f32 %v388, 1e-05
        %v390 = vrsqrt.pop %v389
        %v391 = vmul.f32 %v390, %v389
        %v392 = vmul.f32 %v391, %v390
        %v393 = vmul.f32 0.5, %v392
        %v394 = vsub.f32 1.5, %v393
        %v395 = vmul.f32 %v390, %v394
        %vm396 = vweird.f32 %v389
        %vm397 = vweird.f32 %v390
        %vm398 = vmor %vm396, %vm397
        %v399 = vsel %vm398, %v390, %v395
        %v400 = vmul.f32 %v383, %v399
        %v402 = vperm.slane %v370, 0
        %v404 = vmul.f32 %v400, %v402
        %v406 = vperm.slane %v371, 0
        %v408 = vadd.f32 %v404, %v406
        %409 = vst.msk [vmem:[%s269] sm:$0xff] %vm297, %v408
        %s410 = sand.u32 %s181, 1
        %s411 = scalar_lea.sflag [#allocation3], %s410
        %s412 = sand.u32 %s181, 1
        %s413 = smul.addr %s412, 8
        %s414 = scalar_lea.vmem [#allocation2], %s413
        // Predicated region
        $region49: #{q2v_decoder_layer.5} parent=47 // pred_check
          %p415 = pneg %p191
        $region50: #{q2v_decoder_layer.5} parent=47 // pred_check_branch
          %417 = sbr.rel (%p415) target = $region52
        $region51: #{q2v_decoder_layer.5} parent=47 // pred_region
          %419 = vsyncadd %s411, 0
          %s420 = smul.addr %s21, 8
          %s421 = scalar_lea.hbm %s7, %s420
          %s423 = sshll.u32 %s414, 4
          %s424 = int_to_ptr.vmem [resolvable:$true] %s423
          %s425 = sshll.u32 %s421, 4
          %s426 = int_to_ptr.hbm [resolvable:$true] %s425
          %428 = dma.vmem_to_hbm [thread:$0]  %s424, 128, %s426, %s411
        $region52: #{q2v_decoder_layer.5} parent=47 // pred_fallthru
          _
      $region48: #{q2v_decoder_layer.5} parent=5 // pred_fallthru
        _
      %p429 = scmp.le.s32.totalorder 2, %s16
      // Predicated region
      $region53: #{q2v_decoder_layer.5} parent=5 // pred_check
        %p430 = pneg %p429
      $region54: #{q2v_decoder_layer.5} parent=5 // pred_check_branch
        %432 = sbr.rel (%p430) target = $region56
      $region55: #{q2v_decoder_layer.5} parent=5 // pred_region
        %s433 = ssub.s32 %s16, 2
        // Predicated region
        $region57: #{q2v_decoder_layer.5} parent=55 // pred_check
          %p434 = pneg %p197
        $region58: #{q2v_decoder_layer.5} parent=55 // pred_check_branch
          %436 = sbr.rel (%p434) target = $region60
        $region59: #{q2v_decoder_layer.5} parent=55 // pred_region
          %s437 = sand.u32 %s182, 1
          %s438 = scalar_lea.sflag [#allocation3], %s437
          %s439 = sand.u32 %s182, 1
          %s440 = smul.addr %s439, 8
          %s441 = scalar_lea.vmem [#allocation2], %s440
          %443 = dma.done %s438, 128
        $region60: #{q2v_decoder_layer.5} parent=55 // pred_fallthru
          _
      $region56: #{q2v_decoder_layer.5} parent=5 // pred_fallthru
        _
    $region6: #{q2v_decoder_layer.5} parent=1 // loop_footer
      %s20 = sadd.s32 1, %s16
    $region7: #{q2v_decoder_layer.5} parent=1 // loop_footer_branch
      %15 = sbr.rel target = $region3
    $region8: #{q2v_decoder_layer.5} parent=1 // loop_exit
      _
    %444 = vsyncpa [#allocation3], 1
    %s445 = scalar_lea.sflag [#allocation3], 1
    %446 = vsyncpa %s445, 1

// kernel: q2v_decoder_layer.3
$region0: #{q2v_decoder_layer.3}
  #allocation0 [shape = 'u32[]', space=smem, size = 0x4, offset = 0x4, fixed_abs, tag = 'smem constant byte address 0x4 - core index']
  #allocation1 [shape = 'u32[72,128]{1,0:T(1,128)}', space=vmem, size = 0x9000, scoped, tag = 'internal scratch']
  %s0 = inlined_call_operand.vmem [shape: f32[2,8,32], index: 0, kind: input, shape index: {}]
  %s1 = inlined_call_operand.vmem [shape: f32[2,8,32], index: 1, kind: input, shape index: {}]
  %s2 = inlined_call_operand.vmem [shape: f32[2,1,8], index: 2, kind: input, shape index: {}]
  %s3 = inlined_call_operand.vmem [shape: bf16[32,64], index: 3, kind: input, shape index: {}]
  %s4 = inlined_call_operand.vmem [shape: f32[1,64], index: 4, kind: input, shape index: {}]
  %s5 = inlined_call_operand.vmem [shape: bf16[32,32], index: 5, kind: input, shape index: {}]
  %s6 = inlined_call_operand.vmem [shape: f32[1,32], index: 6, kind: input, shape index: {}]
  %s7 = inlined_call_operand.vmem [shape: bf16[32,32], index: 7, kind: input, shape index: {}]
  %s8 = inlined_call_operand.vmem [shape: f32[1,32], index: 8, kind: input, shape index: {}]
  %s9 = inlined_call_operand.vmem [shape: f32[1,32], index: 9, kind: input, shape index: {}]
  %s10 = inlined_call_operand.vmem [shape: f32[1,32], index: 10, kind: input, shape index: {}]
  %s11 = inlined_call_operand.vmem [shape: f32[2,8,32], index: 11, kind: output, shape index: {}]
  %s12 = sld [smem:[#allocation0]]
  $region77: #{q2v_decoder_layer.3} parent=0
    _
  %s14 = ssub.s32 1, %s12
  %s15 = scalar_select 0, %s14, %s12
  loop: start=0, step=1, limit=4
  $region2: #{q2v_decoder_layer.3} parent=0 // loop_pre_header
    _
  $region3: #{q2v_decoder_layer.3} parent=0 // loop_header
    %s17 = sphi 0, %s21
    %p18 = scmp.ge.s32.totalorder %s17, 4
    %s27 = sphi 0, %s29
    %s30 = sphi 0, %s27
    %s31 = sphi 0, %s30
    %s47 = sphi 0, %s31
    %s53 = sphi 0, %s55
    %s56 = sphi 0, %s53
    %s57 = sphi 0, %s56
    %s73 = sphi 0, %s57
    %s79 = sphi 0, %s81
    %s82 = sphi 0, %s79
    %s83 = sphi 0, %s82
    %s99 = sphi 0, %s83
    %s103 = sphi 0, %s103
    %s105 = sphi 0, %s103
    %s106 = sphi 0, %s105
    %s120 = sphi 0, %s106
    %s124 = sphi 0, %s124
    %s126 = sphi 0, %s124
    %s127 = sphi 0, %s126
    %s141 = sphi 0, %s127
    %s145 = sphi 0, %s145
    %s147 = sphi 0, %s145
    %s148 = sphi 0, %s147
    %s162 = sphi 0, %s148
    %s166 = sphi 0, %s166
    %s168 = sphi 0, %s166
    %s169 = sphi 0, %s168
    %s183 = sphi 0, %s169
    %s187 = sphi 0, %s187
    %s189 = sphi 0, %s187
    %s190 = sphi 0, %s189
    %s204 = sphi 0, %s190
    %s208 = sphi 0, %s208
    %s210 = sphi 0, %s208
    %s211 = sphi 0, %s210
    %s225 = sphi 0, %s211
    %s229 = sphi 0, %s229
    %s231 = sphi 0, %s229
    %s232 = sphi 0, %s231
    %s246 = sphi 0, %s232
    %s250 = sphi 0, %s250
    %s252 = sphi 0, %s250
    %s253 = sphi 0, %s252
    %s267 = sphi 0, %s253
    %s273 = sphi 0, %s275
    %s276 = sphi 0, %s273
    %s277 = sphi 0, %s276
    %s293 = sphi 0, %s277
  $region4: #{q2v_decoder_layer.3} parent=0 // loop_header_branch
    %20 = sbr.rel (%p18) target = $region8
  $region5: #{q2v_decoder_layer.3} parent=0 // loop_body
    %s22 = ssub.s32 %s17, 1
    %s23 = ssub.s32 %s17, 2
    %s24 = sadd.s32 %s17, 1
    %s25 = ssub.s32 %s17, %s24
    %p26 = scmp.eq.s32.totalorder %s25, 0
    %s28 = sadd.s32 %s27, 1
    %s29 = scalar_select %p26, %s27, %s28
    %p32 = pneg %p26
    %p33 = scmp.eq.s32.totalorder %s17, 1
    %p34 = por %p32, %p33
    %p35 = scmp.ne.s32.totalorder %s27, %s30
    %p36 = scmp.eq.s32.totalorder %s17, 0
    %p37 = por %p35, %p36
    %p38 = scmp.ne.s32.totalorder %s27, %s30
    %p39 = scmp.eq.s32.totalorder %s22, 1
    %p40 = por %p38, %p39
    %p41 = scmp.ne.s32.totalorder %s30, %s31
    %p42 = scmp.eq.s32.totalorder %s22, 0
    %p43 = por %p41, %p42
    %p44 = scmp.ne.s32.totalorder %s30, %s31
    %p45 = scmp.eq.s32.totalorder %s23, 1
    %p46 = por %p44, %p45
    %p48 = scmp.ne.s32.totalorder %s31, %s47
    %p49 = scmp.eq.s32.totalorder %s23, 0
    %p50 = por %p48, %p49
    %s51 = ssub.s32 %s17, %s24
    %p52 = scmp.eq.s32.totalorder %s51, 0
    %s54 = sadd.s32 %s53, 1
    %s55 = scalar_select %p52, %s53, %s54
    %p58 = pneg %p52
    %p59 = scmp.eq.s32.totalorder %s17, 1
    %p60 = por %p58, %p59
    %p61 = scmp.ne.s32.totalorder %s53, %s56
    %p62 = scmp.eq.s32.totalorder %s17, 0
    %p63 = por %p61, %p62
    %p64 = scmp.ne.s32.totalorder %s53, %s56
    %p65 = scmp.eq.s32.totalorder %s22, 1
    %p66 = por %p64, %p65
    %p67 = scmp.ne.s32.totalorder %s56, %s57
    %p68 = scmp.eq.s32.totalorder %s22, 0
    %p69 = por %p67, %p68
    %p70 = scmp.ne.s32.totalorder %s56, %s57
    %p71 = scmp.eq.s32.totalorder %s23, 1
    %p72 = por %p70, %p71
    %p74 = scmp.ne.s32.totalorder %s57, %s73
    %p75 = scmp.eq.s32.totalorder %s23, 0
    %p76 = por %p74, %p75
    %s77 = ssub.s32 %s17, %s24
    %p78 = scmp.eq.s32.totalorder %s77, 0
    %s80 = sadd.s32 %s79, 1
    %s81 = scalar_select %p78, %s79, %s80
    %p84 = pneg %p78
    %p85 = scmp.eq.s32.totalorder %s17, 1
    %p86 = por %p84, %p85
    %p87 = scmp.ne.s32.totalorder %s79, %s82
    %p88 = scmp.eq.s32.totalorder %s17, 0
    %p89 = por %p87, %p88
    %p90 = scmp.ne.s32.totalorder %s79, %s82
    %p91 = scmp.eq.s32.totalorder %s22, 1
    %p92 = por %p90, %p91
    %p93 = scmp.ne.s32.totalorder %s82, %s83
    %p94 = scmp.eq.s32.totalorder %s22, 0
    %p95 = por %p93, %p94
    %p96 = scmp.ne.s32.totalorder %s82, %s83
    %p97 = scmp.eq.s32.totalorder %s23, 1
    %p98 = por %p96, %p97
    %p100 = scmp.ne.s32.totalorder %s83, %s99
    %p101 = scmp.eq.s32.totalorder %s23, 0
    %p102 = por %p100, %p101
    %s104 = sadd.s32 %s103, 1
    %p107 = scmp.eq.s32.totalorder %s17, 1
    %p108 = scmp.ne.s32.totalorder %s103, %s105
    %p109 = scmp.eq.s32.totalorder %s17, 0
    %p110 = por %p108, %p109
    %p111 = scmp.ne.s32.totalorder %s103, %s105
    %p112 = scmp.eq.s32.totalorder %s22, 1
    %p113 = por %p111, %p112
    %p114 = scmp.ne.s32.totalorder %s105, %s106
    %p115 = scmp.eq.s32.totalorder %s22, 0
    %p116 = por %p114, %p115
    %p117 = scmp.ne.s32.totalorder %s105, %s106
    %p118 = scmp.eq.s32.totalorder %s23, 1
    %p119 = por %p117, %p118
    %p121 = scmp.ne.s32.totalorder %s106, %s120
    %p122 = scmp.eq.s32.totalorder %s23, 0
    %p123 = por %p121, %p122
    %s125 = sadd.s32 %s124, 1
    %p128 = scmp.eq.s32.totalorder %s17, 1
    %p129 = scmp.ne.s32.totalorder %s124, %s126
    %p130 = scmp.eq.s32.totalorder %s17, 0
    %p131 = por %p129, %p130
    %p132 = scmp.ne.s32.totalorder %s124, %s126
    %p133 = scmp.eq.s32.totalorder %s22, 1
    %p134 = por %p132, %p133
    %p135 = scmp.ne.s32.totalorder %s126, %s127
    %p136 = scmp.eq.s32.totalorder %s22, 0
    %p137 = por %p135, %p136
    %p138 = scmp.ne.s32.totalorder %s126, %s127
    %p139 = scmp.eq.s32.totalorder %s23, 1
    %p140 = por %p138, %p139
    %p142 = scmp.ne.s32.totalorder %s127, %s141
    %p143 = scmp.eq.s32.totalorder %s23, 0
    %p144 = por %p142, %p143
    %s146 = sadd.s32 %s145, 1
    %p149 = scmp.eq.s32.totalorder %s17, 1
    %p150 = scmp.ne.s32.totalorder %s145, %s147
    %p151 = scmp.eq.s32.totalorder %s17, 0
    %p152 = por %p150, %p151
    %p153 = scmp.ne.s32.totalorder %s145, %s147
    %p154 = scmp.eq.s32.totalorder %s22, 1
    %p155 = por %p153, %p154
    %p156 = scmp.ne.s32.totalorder %s147, %s148
    %p157 = scmp.eq.s32.totalorder %s22, 0
    %p158 = por %p156, %p157
    %p159 = scmp.ne.s32.totalorder %s147, %s148
    %p160 = scmp.eq.s32.totalorder %s23, 1
    %p161 = por %p159, %p160
    %p163 = scmp.ne.s32.totalorder %s148, %s162
    %p164 = scmp.eq.s32.totalorder %s23, 0
    %p165 = por %p163, %p164
    %s167 = sadd.s32 %s166, 1
    %p170 = scmp.eq.s32.totalorder %s17, 1
    %p171 = scmp.ne.s32.totalorder %s166, %s168
    %p172 = scmp.eq.s32.totalorder %s17, 0
    %p173 = por %p171, %p172
    %p174 = scmp.ne.s32.totalorder %s166, %s168
    %p175 = scmp.eq.s32.totalorder %s22, 1
    %p176 = por %p174, %p175
    %p177 = scmp.ne.s32.totalorder %s168, %s169
    %p178 = scmp.eq.s32.totalorder %s22, 0
    %p179 = por %p177, %p178
    %p180 = scmp.ne.s32.totalorder %s168, %s169
    %p181 = scmp.eq.s32.totalorder %s23, 1
    %p182 = por %p180, %p181
    %p184 = scmp.ne.s32.totalorder %s169, %s183
    %p185 = scmp.eq.s32.totalorder %s23, 0
    %p186 = por %p184, %p185
    %s188 = sadd.s32 %s187, 1
    %p191 = scmp.eq.s32.totalorder %s17, 1
    %p192 = scmp.ne.s32.totalorder %s187, %s189
    %p193 = scmp.eq.s32.totalorder %s17, 0
    %p194 = por %p192, %p193
    %p195 = scmp.ne.s32.totalorder %s187, %s189
    %p196 = scmp.eq.s32.totalorder %s22, 1
    %p197 = por %p195, %p196
    %p198 = scmp.ne.s32.totalorder %s189, %s190
    %p199 = scmp.eq.s32.totalorder %s22, 0
    %p200 = por %p198, %p199
    %p201 = scmp.ne.s32.totalorder %s189, %s190
    %p202 = scmp.eq.s32.totalorder %s23, 1
    %p203 = por %p201, %p202
    %p205 = scmp.ne.s32.totalorder %s190, %s204
    %p206 = scmp.eq.s32.totalorder %s23, 0
    %p207 = por %p205, %p206
    %s209 = sadd.s32 %s208, 1
    %p212 = scmp.eq.s32.totalorder %s17, 1
    %p213 = scmp.ne.s32.totalorder %s208, %s210
    %p214 = scmp.eq.s32.totalorder %s17, 0
    %p215 = por %p213, %p214
    %p216 = scmp.ne.s32.totalorder %s208, %s210
    %p217 = scmp.eq.s32.totalorder %s22, 1
    %p218 = por %p216, %p217
    %p219 = scmp.ne.s32.totalorder %s210, %s211
    %p220 = scmp.eq.s32.totalorder %s22, 0
    %p221 = por %p219, %p220
    %p222 = scmp.ne.s32.totalorder %s210, %s211
    %p223 = scmp.eq.s32.totalorder %s23, 1
    %p224 = por %p222, %p223
    %p226 = scmp.ne.s32.totalorder %s211, %s225
    %p227 = scmp.eq.s32.totalorder %s23, 0
    %p228 = por %p226, %p227
    %s230 = sadd.s32 %s229, 1
    %p233 = scmp.eq.s32.totalorder %s17, 1
    %p234 = scmp.ne.s32.totalorder %s229, %s231
    %p235 = scmp.eq.s32.totalorder %s17, 0
    %p236 = por %p234, %p235
    %p237 = scmp.ne.s32.totalorder %s229, %s231
    %p238 = scmp.eq.s32.totalorder %s22, 1
    %p239 = por %p237, %p238
    %p240 = scmp.ne.s32.totalorder %s231, %s232
    %p241 = scmp.eq.s32.totalorder %s22, 0
    %p242 = por %p240, %p241
    %p243 = scmp.ne.s32.totalorder %s231, %s232
    %p244 = scmp.eq.s32.totalorder %s23, 1
    %p245 = por %p243, %p244
    %p247 = scmp.ne.s32.totalorder %s232, %s246
    %p248 = scmp.eq.s32.totalorder %s23, 0
    %p249 = por %p247, %p248
    %s251 = sadd.s32 %s250, 1
    %p254 = scmp.eq.s32.totalorder %s17, 1
    %p255 = scmp.ne.s32.totalorder %s250, %s252
    %p256 = scmp.eq.s32.totalorder %s17, 0
    %p257 = por %p255, %p256
    %p258 = scmp.ne.s32.totalorder %s250, %s252
    %p259 = scmp.eq.s32.totalorder %s22, 1
    %p260 = por %p258, %p259
    %p261 = scmp.ne.s32.totalorder %s252, %s253
    %p262 = scmp.eq.s32.totalorder %s22, 0
    %p263 = por %p261, %p262
    %p264 = scmp.ne.s32.totalorder %s252, %s253
    %p265 = scmp.eq.s32.totalorder %s23, 1
    %p266 = por %p264, %p265
    %p268 = scmp.ne.s32.totalorder %s253, %s267
    %p269 = scmp.eq.s32.totalorder %s23, 0
    %p270 = por %p268, %p269
    %s271 = ssub.s32 %s17, %s24
    %p272 = scmp.eq.s32.totalorder %s271, 0
    %s274 = sadd.s32 %s273, 1
    %s275 = scalar_select %p272, %s273, %s274
    %p278 = pneg %p272
    %p279 = scmp.eq.s32.totalorder %s17, 1
    %p280 = por %p278, %p279
    %p281 = scmp.ne.s32.totalorder %s273, %s276
    %p282 = scmp.eq.s32.totalorder %s17, 0
    %p283 = por %p281, %p282
    %p284 = scmp.ne.s32.totalorder %s273, %s276
    %p285 = scmp.eq.s32.totalorder %s22, 1
    %p286 = por %p284, %p285
    %p287 = scmp.ne.s32.totalorder %s276, %s277
    %p288 = scmp.eq.s32.totalorder %s22, 0
    %p289 = por %p287, %p288
    %p290 = scmp.ne.s32.totalorder %s276, %s277
    %p291 = scmp.eq.s32.totalorder %s23, 1
    %p292 = por %p290, %p291
    %p294 = scmp.ne.s32.totalorder %s277, %s293
    %p295 = scmp.eq.s32.totalorder %s23, 0
    %p296 = por %p294, %p295
    %p297 = scmp.le.s32.totalorder 1, %s17
    %p298 = scmp.lt.s32.totalorder %s17, 3
    %p299 = pnand %p297, %p298
    %p300 = pneg %p299
    // Predicated region
    $region9: #{q2v_decoder_layer.3} parent=5 // pred_check
      _
    $region10: #{q2v_decoder_layer.3} parent=5 // pred_check_branch
      %302 = sbr.rel (%p299) target = $region12
    $region11: #{q2v_decoder_layer.3} parent=5 // pred_region
      %s303 = ssub.s32 %s17, 1
      // Predicated region
      $region13: #{q2v_decoder_layer.3} parent=11 // pred_check
        %p304 = pneg %p116
      $region14: #{q2v_decoder_layer.3} parent=11 // pred_check_branch
        %306 = sbr.rel (%p304) target = $region16
      $region15: #{q2v_decoder_layer.3} parent=11 // pred_region
        _
      $region16: #{q2v_decoder_layer.3} parent=11 // pred_fallthru
        _
      // Predicated region
      $region17: #{q2v_decoder_layer.3} parent=11 // pred_check
        %p307 = pneg %p137
      $region18: #{q2v_decoder_layer.3} parent=11 // pred_check_branch
        %309 = sbr.rel (%p307) target = $region20
      $region19: #{q2v_decoder_layer.3} parent=11 // pred_region
        _
      $region20: #{q2v_decoder_layer.3} parent=11 // pred_fallthru
        _
      // Predicated region
      $region21: #{q2v_decoder_layer.3} parent=11 // pred_check
        %p310 = pneg %p158
      $region22: #{q2v_decoder_layer.3} parent=11 // pred_check_branch
        %312 = sbr.rel (%p310) target = $region24
      $region23: #{q2v_decoder_layer.3} parent=11 // pred_region
        _
      $region24: #{q2v_decoder_layer.3} parent=11 // pred_fallthru
        _
      // Predicated region
      $region25: #{q2v_decoder_layer.3} parent=11 // pred_check
        %p313 = pneg %p179
      $region26: #{q2v_decoder_layer.3} parent=11 // pred_check_branch
        %315 = sbr.rel (%p313) target = $region28
      $region27: #{q2v_decoder_layer.3} parent=11 // pred_region
        _
      $region28: #{q2v_decoder_layer.3} parent=11 // pred_fallthru
        _
      // Predicated region
      $region29: #{q2v_decoder_layer.3} parent=11 // pred_check
        %p316 = pneg %p200
      $region30: #{q2v_decoder_layer.3} parent=11 // pred_check_branch
        %318 = sbr.rel (%p316) target = $region32
      $region31: #{q2v_decoder_layer.3} parent=11 // pred_region
        _
      $region32: #{q2v_decoder_layer.3} parent=11 // pred_fallthru
        _
      // Predicated region
      $region33: #{q2v_decoder_layer.3} parent=11 // pred_check
        %p319 = pneg %p221
      $region34: #{q2v_decoder_layer.3} parent=11 // pred_check_branch
        %321 = sbr.rel (%p319) target = $region36
      $region35: #{q2v_decoder_layer.3} parent=11 // pred_region
        _
      $region36: #{q2v_decoder_layer.3} parent=11 // pred_fallthru
        _
      // Predicated region
      $region37: #{q2v_decoder_layer.3} parent=11 // pred_check
        %p322 = pneg %p242
      $region38: #{q2v_decoder_layer.3} parent=11 // pred_check_branch
        %324 = sbr.rel (%p322) target = $region40
      $region39: #{q2v_decoder_layer.3} parent=11 // pred_region
        _
      $region40: #{q2v_decoder_layer.3} parent=11 // pred_fallthru
        _
      // Predicated region
      $region41: #{q2v_decoder_layer.3} parent=11 // pred_check
        %p325 = pneg %p263
      $region42: #{q2v_decoder_layer.3} parent=11 // pred_check_branch
        %327 = sbr.rel (%p325) target = $region44
      $region43: #{q2v_decoder_layer.3} parent=11 // pred_region
        _
      $region44: #{q2v_decoder_layer.3} parent=11 // pred_fallthru
        _
    $region12: #{q2v_decoder_layer.3} parent=5 // pred_fallthru
      _
    %p328 = scmp.lt.s32.totalorder %s17, 2
    // Predicated region
    $region45: #{q2v_decoder_layer.3} parent=5 // pred_check
      %p329 = pneg %p328
    $region46: #{q2v_decoder_layer.3} parent=5 // pred_check_branch
      %331 = sbr.rel (%p329) target = $region48
    $region47: #{q2v_decoder_layer.3} parent=5 // pred_region
      // Predicated region
      $region49: #{q2v_decoder_layer.3} parent=47 // pred_check
        %p332 = pneg %p37
      $region50: #{q2v_decoder_layer.3} parent=47 // pred_check_branch
        %334 = sbr.rel (%p332) target = $region52
      $region51: #{q2v_decoder_layer.3} parent=47 // pred_region
        %p335 = scmp.lt.s32.totalorder %s17, 1
        %s336 = scalar_select %p335, %s17, 1
        %s337 = smul.addr %s336, 8
        %s338 = scalar_lea.vmem %s0, %s337
      $region52: #{q2v_decoder_layer.3} parent=47 // pred_fallthru
        _
      // Predicated region
      $region53: #{q2v_decoder_layer.3} parent=47 // pred_check
        %p339 = pneg %p63
      $region54: #{q2v_decoder_layer.3} parent=47 // pred_check_branch
        %341 = sbr.rel (%p339) target = $region56
      $region55: #{q2v_decoder_layer.3} parent=47 // pred_region
        %p342 = scmp.lt.s32.totalorder %s17, 1
        %s343 = scalar_select %p342, %s17, 1
        %s344 = smul.addr %s343, 8
        %s345 = scalar_lea.vmem %s1, %s344
      $region56: #{q2v_decoder_layer.3} parent=47 // pred_fallthru
        _
      // Predicated region
      $region57: #{q2v_decoder_layer.3} parent=47 // pred_check
        %p346 = pneg %p89
      $region58: #{q2v_decoder_layer.3} parent=47 // pred_check_branch
        %348 = sbr.rel (%p346) target = $region60
      $region59: #{q2v_decoder_layer.3} parent=47 // pred_region
        %p349 = scmp.lt.s32.totalorder %s17, 1
        %s350 = scalar_select %p349, %s17, 1
        %s351 = scalar_lea.vmem %s2, %s350
      $region60: #{q2v_decoder_layer.3} parent=47 // pred_fallthru
        _
    $region48: #{q2v_decoder_layer.3} parent=5 // pred_fallthru
      _
    %p352 = scmp.le.s32.totalorder 1, %s17
    %p353 = scmp.lt.s32.totalorder %s17, 3
    %p354 = pnand %p352, %p353
    %p355 = pneg %p354
    // Predicated region
    $region61: #{q2v_decoder_layer.3} parent=5 // pred_check
      _
    $region62: #{q2v_decoder_layer.3} parent=5 // pred_check_branch
      %357 = sbr.rel (%p354) target = $region64
    $region63: #{q2v_decoder_layer.3} parent=5 // pred_region
      %s358 = ssub.s32 %s17, 1
      %p359 = scmp.lt.s32.totalorder %s22, 1
      %s360 = scalar_select %p359, %s22, 1
      %s361 = smul.addr %s360, 8
      %s362 = scalar_lea.vmem %s0, %s361
      %p363 = pneg %p43
      %p364 = pneg %p40
      %p365 = scmp.lt.s32.totalorder %s22, 1
      %s366 = scalar_select %p365, %s22, 1
      %s367 = smul.addr %s366, 8
      %s368 = scalar_lea.vmem %s1, %s367
      %p369 = pneg %p69
      %p370 = pneg %p66
      %p371 = scmp.lt.s32.totalorder %s22, 1
      %s372 = scalar_select %p371, %s22, 1
      %s373 = scalar_lea.vmem %s2, %s372
      %p374 = pneg %p95
      %p375 = pneg %p92
      %p376 = pneg %p116
      %p377 = pneg %p113
      %p378 = pneg %p137
      %p379 = pneg %p134
      %p380 = pneg %p158
      %p381 = pneg %p155
      %p382 = pneg %p179
      %p383 = pneg %p176
      %p384 = pneg %p200
      %p385 = pneg %p197
      %p386 = pneg %p221
      %p387 = pneg %p218
      %p388 = pneg %p242
      %p389 = pneg %p239
      %p390 = pneg %p263
      %p391 = pneg %p260
      %p392 = pneg %p289
      %p393 = pneg %p286
      %p394 = scmp.lt.s32.totalorder %s22, 1
      %s395 = scalar_select %p394, %s22, 1
      %s396 = smul.addr %s395, 8
      %s397 = scalar_lea.vmem %s11, %s396
      %p398 = scmp.lt.s32.totalorder %s22, 1
      %s399 = scalar_select %p398, %s22, 1
      %s400 = smul.addr %s399, 8
      %s401 = scalar_lea.vmem %s0, %s400
      %p402 = scmp.lt.s32.totalorder %s22, 1
      %s403 = scalar_select %p402, %s22, 1
      %s404 = smul.addr %s403, 8
      %s405 = scalar_lea.vmem %s1, %s404
      %p406 = scmp.lt.s32.totalorder %s22, 1
      %s407 = scalar_select %p406, %s22, 1
      %s408 = scalar_lea.vmem %s2, %s407
      %p409 = scmp.lt.s32.totalorder %s22, 1
      %s410 = scalar_select %p409, %s22, 1
      %s411 = smul.addr %s410, 8
      %s412 = scalar_lea.vmem %s11, %s411
      %v414 = vld [vmem:[%s401] sm:$0xff]
      %v415 = vld [vmem:[%s405] sm:$0xff]
      %v416 = vadd.f32 %v414, %v415
      %v417 = vld [vmem:[%s3] sm:$0xf]
      %v418 = vld [vmem:[%s3 + $0x4] sm:$0xf]
      %v419 = vld [vmem:[%s3 + $0x8] sm:$0xf]
      %v420 = vld [vmem:[%s3 + $0xc] sm:$0xf]
      %v421 = vpack.c.bf16 %v416, %v416
      %v422 = vld [vmem:[%s4] sm:$0x1]
      %v424 = vperm.slane %v422, 0
      %v430 = vunpack.c.l.b16 %v417
      %v431 = vunpack.c.l.b16 %v418
      %v432 = vunpack.c.l.b16 %v419
      %v433 = vunpack.c.l.b16 %v420
      %v434 = vpack.c.b16 %v431, %v430
      %v435 = vpack.c.b16 %v433, %v432
      %vm438 = vcmask 261120
      %v440 = vsel %vm438, %v421, 0
      %442 = vmatpush.bf16.msra.mxu0 0
      %443 = vmatpush.bf16.msra.mxu0 0
      %444 = vmatpush.bf16.msra.mxu0 0
      %445 = vmatpush.bf16.msra.mxu0 0
      %446 = vmatpush.bf16.msra.mxu0 0
      %447 = vmatpush.bf16.msra.mxu0 0
      %448 = vmatpush.bf16.msra.mxu0 %v435
      %449 = vmatpush.bf16.msra.mxu0 %v434
      %450 = vmatmul.bf16.gmra.mxu0 %v440
      %v451 = vpop.f32.mrf.mxu0
      %v452 = vadd.f32 %v424, %v451
      %v453 = vpop.f32.mrf.mxu0
      %454 = vdwg.mxu0
      %v455 = vld [vmem:[%s5] sm:$0xf]
      %v456 = vld [vmem:[%s5 + $0x4] sm:$0xf]
      %v457 = vld [vmem:[%s5 + $0x8] sm:$0xf]
      %v458 = vld [vmem:[%s5 + $0xc] sm:$0xf]
      %v459 = vpack.c.bf16 %v414, %v414
      %v460 = vld [vmem:[%s6] sm:$0x1]
      %v462 = vperm.slane %v460, 0
      %v468 = vunpack.c.l.b16 %v455
      %v469 = vunpack.c.l.b16 %v456
      %v470 = vunpack.c.l.b16 %v457
      %v471 = vunpack.c.l.b16 %v458
      %v472 = vpack.c.b16 %v469, %v468
      %v473 = vpack.c.b16 %v471, %v470
      %v477 = vsel %vm438, %v459, 0
      %479 = vmatpush.bf16.msra.mxu0 0
      %480 = vmatpush.bf16.msra.mxu0 0
      %481 = vmatpush.bf16.msra.mxu0 0
      %482 = vmatpush.bf16.msra.mxu0 0
      %483 = vmatpush.bf16.msra.mxu0 0
      %484 = vmatpush.bf16.msra.mxu0 0
      %485 = vmatpush.bf16.msra.mxu0 %v473
      %486 = vmatpush.bf16.msra.mxu0 %v472
      %487 = vmatmul.bf16.gmra.mxu0 %v477
      %v488 = vpop.f32.mrf.mxu0
      %v489 = vadd.f32 %v462, %v488
      %v490 = vpop.f32.mrf.mxu0
      %491 = vdwg.mxu0
      %v492 = vld [vmem:[%s408] sm:$0x1]
      %vm493 = vcmp.gt.f32.partialorder %v492, 0.5
      %v494 = vld [vmem:[%s7] sm:$0xf]
      %v495 = vld [vmem:[%s7 + $0x4] sm:$0xf]
      %v496 = vld [vmem:[%s7 + $0x8] sm:$0xf]
      %v497 = vld [vmem:[%s7 + $0xc] sm:$0xf]
      %v498 = vmul.f32 %v452, 0.35355338
      %v499 = vpack.c.bf16 %v498, %v498
      %v500 = vpack.c.bf16 %v452, %v452
      %502 = vrot.lane.b32.xlu0 %v500, 96
      %v503 = vpop.permute.xlu0 %502
      %vm504 = vcmask 64512
      %v506 = vsel %vm504, %v499, 0
      %v509 = vsel %vm504, %v503, 0
      %511 = vmatpush.bf16.xpose.msra.mxu0 0
      %512 = vmatpush.bf16.xpose.msra.mxu0 0
      %513 = vmatpush.bf16.xpose.msra.mxu0 0
      %514 = vmatpush.bf16.xpose.msra.mxu0 0
      %515 = vmatpush.bf16.xpose.msra.mxu0 0
      %516 = vmatpush.bf16.xpose.msra.mxu0 0
      %517 = vmatpush.bf16.xpose.msra.mxu0 0
      %518 = vmatpush.bf16.xpose.msra.mxu0 %v509
      %519 = vmatmul.bf16.gmra.mxu0 %v506
      %v520 = vpop.f32.mrf.mxu0
      %v521 = vadd.f32 0.0, %v520
      %v522 = vpop.f32.mrf.mxu0
      %523 = vdwg.mxu0
      %v524 = vsel %vm493, 1, 0
      %v525 = vperm.slane %v524, 0
      %vm526 = vcmp.eq.s32.totalorder %v525, 1
      %v527 = vsel %vm526, %v521, -1e+30
      %v528 = vsel %vm504, %v527, -inf
      %529 = vmax.xlane.f32.xlu0 %v528
      %v530 = vpop.xlane.xlu0 %529
      %v531 = vsub.f32 %v527, %v530
      %v532 = vmul.f32 %v531, 1.442695
      %v533 = vpow.pop %v532
      %v534 = vsel %vm504, %v533, 0.0
      %535 = vadd.xlane.f32.xlu0 %v534
      %v536 = vpop.xlane.xlu0 %535
      %v537 = vrcp.pop %v536
      %v538 = vmul.f32 %v533, %v537
      %v539 = vpack.c.bf16 %v538, %v538
      %v540 = vpack.c.bf16 %v489, %v489
      %v542 = vsel %vm504, %v539, 0
      %vm544 = vcmask 1043456
      %v546 = vsel %vm544, %v540, 0
      %548 = vmatpush.bf16.msra.mxu0 0
      %549 = vmatpush.bf16.msra.mxu0 0
      %550 = vmatpush.bf16.msra.mxu0 0
      %551 = vmatpush.bf16.msra.mxu0 0
      %552 = vmatpush.bf16.msra.mxu0 0
      %553 = vmatpush.bf16.msra.mxu0 0
      %554 = vmatpush.bf16.msra.mxu0 0
      %555 = vmatpush.bf16.msra.mxu0 %v546
      %556 = vmatmul.bf16.gmra.mxu0 %v542
      %v557 = vpop.f32.mrf.mxu0
      %v558 = vadd.f32 0.0, %v557
      %v559 = vpop.f32.mrf.mxu0
      %560 = vdwg.mxu0
      %v561 = vpack.c.bf16 %v558, %v558
      %563 = vrot.lane.b32.xlu0 %v499, 120
      %v564 = vpop.permute.xlu0 %563
      %565 = vrot.lane.b32.xlu0 %v500, 88
      %v566 = vpop.permute.xlu0 %565
      %v568 = vsel %vm504, %v564, 0
      %v571 = vsel %vm504, %v566, 0
      %573 = vmatpush.bf16.xpose.msra.mxu0 0
      %574 = vmatpush.bf16.xpose.msra.mxu0 0
      %575 = vmatpush.bf16.xpose.msra.mxu0 0
      %576 = vmatpush.bf16.xpose.msra.mxu0 0
      %577 = vmatpush.bf16.xpose.msra.mxu0 0
      %578 = vmatpush.bf16.xpose.msra.mxu0 0
      %579 = vmatpush.bf16.xpose.msra.mxu0 0
      %580 = vmatpush.bf16.xpose.msra.mxu0 %v571
      %581 = vmatmul.bf16.gmra.mxu0 %v568
      %v582 = vpop.f32.mrf.mxu0
      %v583 = vadd.f32 0.0, %v582
      %v584 = vpop.f32.mrf.mxu0
      %585 = vdwg.mxu0
      %v586 = vsel %vm526, %v583, -1e+30
      %v587 = vsel %vm504, %v586, -inf
      %588 = vmax.xlane.f32.xlu0 %v587
      %v589 = vpop.xlane.xlu0 %588
      %v590 = vsub.f32 %v586, %v589
      %v591 = vmul.f32 %v590, 1.442695
      %v592 = vpow.pop %v591
      %v593 = vsel %vm504, %v592, 0.0
      %594 = vadd.xlane.f32.xlu0 %v593
      %v595 = vpop.xlane.xlu0 %594
      %v596 = vrcp.pop %v595
      %v597 = vmul.f32 %v592, %v596
      %v598 = vpack.c.bf16 %v597, %v597
      %600 = vrot.lane.b32.xlu0 %v540, 120
      %v601 = vpop.permute.xlu0 %600
      %v603 = vsel %vm504, %v598, 0
      %v606 = vsel %vm544, %v601, 0
      %608 = vmatpush.bf16.msra.mxu0 0
      %609 = vmatpush.bf16.msra.mxu0 0
      %610 = vmatpush.bf16.msra.mxu0 0
      %611 = vmatpush.bf16.msra.mxu0 0
      %612 = vmatpush.bf16.msra.mxu0 0
      %613 = vmatpush.bf16.msra.mxu0 0
      %614 = vmatpush.bf16.msra.mxu0 0
      %615 = vmatpush.bf16.msra.mxu0 %v606
      %616 = vmatmul.bf16.gmra.mxu0 %v603
      %v617 = vpop.f32.mrf.mxu0
      %v618 = vadd.f32 0.0, %v617
      %v619 = vpop.f32.mrf.mxu0
      %620 = vdwg.mxu0
      %v621 = vpack.c.bf16 %v618, %v618
      %v623 = vsel %vm504, %v621, 0
      %v626 = vsel %vm544, %v495, 0
      %628 = vmatpush.bf16.msra.mxu0 0
      %629 = vmatpush.bf16.msra.mxu0 0
      %630 = vmatpush.bf16.msra.mxu0 0
      %631 = vmatpush.bf16.msra.mxu0 0
      %632 = vmatpush.bf16.msra.mxu0 0
      %633 = vmatpush.bf16.msra.mxu0 0
      %634 = vmatpush.bf16.msra.mxu0 0
      %635 = vmatpush.bf16.msra.mxu0 %v626
      %636 = vmatmul.bf16.gmra.mxu0 %v623
      %v637 = vpop.f32.mrf.mxu0
      %v638 = vadd.f32 0.0, %v637
      %v639 = vpop.f32.mrf.mxu0
      %640 = vdwg.mxu0
      %v642 = vsel %vm504, %v561, 0
      %v645 = vsel %vm544, %v494, 0
      %647 = vmatpush.bf16.msra.mxu0 0
      %648 = vmatpush.bf16.msra.mxu0 0
      %649 = vmatpush.bf16.msra.mxu0 0
      %650 = vmatpush.bf16.msra.mxu0 0
      %651 = vmatpush.bf16.msra.mxu0 0
      %652 = vmatpush.bf16.msra.mxu0 0
      %653 = vmatpush.bf16.msra.mxu0 0
      %654 = vmatpush.bf16.msra.mxu0 %v645
      %655 = vmatmul.bf16.gmra.mxu0 %v642
      %v656 = vpop.f32.mrf.mxu0
      %v657 = vadd.f32 %v638, %v656
      %v658 = vpop.f32.mrf.mxu0
      %659 = vdwg.mxu0
      %660 = vrot.lane.b32.xlu0 %v499, 112
      %v661 = vpop.permute.xlu0 %660
      %662 = vrot.lane.b32.xlu0 %v500, 80
      %v663 = vpop.permute.xlu0 %662
      %v665 = vsel %vm504, %v661, 0
      %v668 = vsel %vm504, %v663, 0
      %670 = vmatpush.bf16.xpose.msra.mxu0 0
      %671 = vmatpush.bf16.xpose.msra.mxu0 0
      %672 = vmatpush.bf16.xpose.msra.mxu0 0
      %673 = vmatpush.bf16.xpose.msra.mxu0 0
      %674 = vmatpush.bf16.xpose.msra.mxu0 0
      %675 = vmatpush.bf16.xpose.msra.mxu0 0
      %676 = vmatpush.bf16.xpose.msra.mxu0 0
      %677 = vmatpush.bf16.xpose.msra.mxu0 %v668
      %678 = vmatmul.bf16.gmra.mxu0 %v665
      %v679 = vpop.f32.mrf.mxu0
      %v680 = vadd.f32 0.0, %v679
      %v681 = vpop.f32.mrf.mxu0
      %682 = vdwg.mxu0
      %v683 = vsel %vm526, %v680, -1e+30
      %v684 = vsel %vm504, %v683, -inf
      %685 = vmax.xlane.f32.xlu0 %v684
      %v686 = vpop.xlane.xlu0 %685
      %v687 = vsub.f32 %v683, %v686
      %v688 = vmul.f32 %v687, 1.442695
      %v689 = vpow.pop %v688
      %v690 = vsel %vm504, %v689, 0.0
      %691 = vadd.xlane.f32.xlu0 %v690
      %v692 = vpop.xlane.xlu0 %691
      %v693 = vrcp.pop %v692
      %v694 = vmul.f32 %v689, %v693
      %v695 = vpack.c.bf16 %v694, %v694
      %696 = vrot.lane.b32.xlu0 %v540, 112
      %v697 = vpop.permute.xlu0 %696
      %v699 = vsel %vm504, %v695, 0
      %v702 = vsel %vm544, %v697, 0
      %704 = vmatpush.bf16.msra.mxu0 0
      %705 = vmatpush.bf16.msra.mxu0 0
      %706 = vmatpush.bf16.msra.mxu0 0
      %707 = vmatpush.bf16.msra.mxu0 0
      %708 = vmatpush.bf16.msra.mxu0 0
      %709 = vmatpush.bf16.msra.mxu0 0
      %710 = vmatpush.bf16.msra.mxu0 0
      %711 = vmatpush.bf16.msra.mxu0 %v702
      %712 = vmatmul.bf16.gmra.mxu0 %v699
      %v713 = vpop.f32.mrf.mxu0
      %v714 = vadd.f32 0.0, %v713
      %v715 = vpop.f32.mrf.mxu0
      %716 = vdwg.mxu0
      %v717 = vpack.c.bf16 %v714, %v714
      %v719 = vsel %vm504, %v717, 0
      %v722 = vsel %vm544, %v496, 0
      %724 = vmatpush.bf16.msra.mxu0 0
      %725 = vmatpush.bf16.msra.mxu0 0
      %726 = vmatpush.bf16.msra.mxu0 0
      %727 = vmatpush.bf16.msra.mxu0 0
      %728 = vmatpush.bf16.msra.mxu0 0
      %729 = vmatpush.bf16.msra.mxu0 0
      %730 = vmatpush.bf16.msra.mxu0 0
      %731 = vmatpush.bf16.msra.mxu0 %v722
      %732 = vmatmul.bf16.gmra.mxu0 %v719
      %v733 = vpop.f32.mrf.mxu0
      %v734 = vadd.f32 0.0, %v733
      %v735 = vpop.f32.mrf.mxu0
      %736 = vdwg.mxu0
      %v737 = vadd.f32 %v657, %v734
      %738 = vrot.lane.b32.xlu0 %v499, 104
      %v739 = vpop.permute.xlu0 %738
      %740 = vrot.lane.b32.xlu0 %v500, 72
      %v741 = vpop.permute.xlu0 %740
      %v743 = vsel %vm504, %v739, 0
      %v746 = vsel %vm504, %v741, 0
      %748 = vmatpush.bf16.xpose.msra.mxu0 0
      %749 = vmatpush.bf16.xpose.msra.mxu0 0
      %750 = vmatpush.bf16.xpose.msra.mxu0 0
      %751 = vmatpush.bf16.xpose.msra.mxu0 0
      %752 = vmatpush.bf16.xpose.msra.mxu0 0
      %753 = vmatpush.bf16.xpose.msra.mxu0 0
      %754 = vmatpush.bf16.xpose.msra.mxu0 0
      %755 = vmatpush.bf16.xpose.msra.mxu0 %v746
      %756 = vmatmul.bf16.gmra.mxu0 %v743
      %v757 = vpop.f32.mrf.mxu0
      %v758 = vadd.f32 0.0, %v757
      %v759 = vpop.f32.mrf.mxu0
      %760 = vdwg.mxu0
      %v761 = vsel %vm526, %v758, -1e+30
      %v762 = vsel %vm504, %v761, -inf
      %763 = vmax.xlane.f32.xlu0 %v762
      %v764 = vpop.xlane.xlu0 %763
      %v765 = vsub.f32 %v761, %v764
      %v766 = vmul.f32 %v765, 1.442695
      %v767 = vpow.pop %v766
      %v768 = vsel %vm504, %v767, 0.0
      %769 = vadd.xlane.f32.xlu0 %v768
      %v770 = vpop.xlane.xlu0 %769
      %v771 = vrcp.pop %v770
      %v772 = vmul.f32 %v767, %v771
      %v773 = vpack.c.bf16 %v772, %v772
      %774 = vrot.lane.b32.xlu0 %v540, 104
      %v775 = vpop.permute.xlu0 %774
      %v777 = vsel %vm504, %v773, 0
      %v780 = vsel %vm544, %v775, 0
      %782 = vmatpush.bf16.msra.mxu0 0
      %783 = vmatpush.bf16.msra.mxu0 0
      %784 = vmatpush.bf16.msra.mxu0 0
      %785 = vmatpush.bf16.msra.mxu0 0
      %786 = vmatpush.bf16.msra.mxu0 0
      %787 = vmatpush.bf16.msra.mxu0 0
      %788 = vmatpush.bf16.msra.mxu0 0
      %789 = vmatpush.bf16.msra.mxu0 %v780
      %790 = vmatmul.bf16.gmra.mxu0 %v777
      %v791 = vpop.f32.mrf.mxu0
      %v792 = vadd.f32 0.0, %v791
      %v793 = vpop.f32.mrf.mxu0
      %794 = vdwg.mxu0
      %v795 = vpack.c.bf16 %v792, %v792
      %v797 = vsel %vm504, %v795, 0
      %v800 = vsel %vm544, %v497, 0
      %802 = vmatpush.bf16.msra.mxu0 0
      %803 = vmatpush.bf16.msra.mxu0 0
      %804 = vmatpush.bf16.msra.mxu0 0
      %805 = vmatpush.bf16.msra.mxu0 0
      %806 = vmatpush.bf16.msra.mxu0 0
      %807 = vmatpush.bf16.msra.mxu0 0
      %808 = vmatpush.bf16.msra.mxu0 0
      %809 = vmatpush.bf16.msra.mxu0 %v800
      %810 = vmatmul.bf16.gmra.mxu0 %v797
      %v811 = vpop.f32.mrf.mxu0
      %v812 = vadd.f32 0.0, %v811
      %v813 = vpop.f32.mrf.mxu0
      %814 = vdwg.mxu0
      %v815 = vadd.f32 %v737, %v812
      %v816 = vld [vmem:[%s8] sm:$0x1]
      %v818 = vperm.slane %v816, 0
      %v820 = vadd.f32 %v815, %v818
      %v821 = vadd.f32 %v414, %v820
      %v822 = vld [vmem:[%s9] sm:$0x1]
      %v823 = vld [vmem:[%s10] sm:$0x1]
      %v824 = vsel %vm438, %v821, 0.0
      %825 = vadd.xlane.f32.xlu0 %v824
      %v826 = vpop.xlane.xlu0 %825
      %v827 = vrcp.pop 32.0
      %v828 = vmul.f32 32.0, %v827
      %v829 = vsub.f32 1.0, %v828
      %v830 = vmul.f32 %v827, %v829
      %v831 = vadd.f32 %v827, %v830
      %vm832 = vweird.f32 %v827
      %v833 = vsel %vm832, %v827, %v831
      %v834 = vmul.f32 %v826, %v833
      %v835 = vsub.f32 %v821, %v834
      %v836 = vmul.f32 %v835, %v835
      %v837 = vsel %vm438, %v836, 0.0
      %838 = vadd.xlane.f32.xlu0 %v837
      %v839 = vpop.xlane.xlu0 %838
      %v840 = vmul.f32 %v839, %v833
      %v841 = vadd.f32 %v840, 1e-05
      %v842 = vrsqrt.pop %v841
      %v843 = vmul.f32 %v842, %v841
      %v844 = vmul.f32 %v843, %v842
      %v845 = vmul.f32 0.5, %v844
      %v846 = vsub.f32 1.5, %v845
      %v847 = vmul.f32 %v842, %v846
      %vm848 = vweird.f32 %v841
      %vm849 = vweird.f32 %v842
      %vm850 = vmor %vm848, %vm849
      %v851 = vsel %vm850, %v842, %v847
      %v852 = vmul.f32 %v835, %v851
      %v854 = vperm.slane %v822, 0
      %v856 = vmul.f32 %v852, %v854
      %v858 = vperm.slane %v823, 0
      %v860 = vadd.f32 %v856, %v858
      %861 = vst.msk [vmem:[%s412] sm:$0xff] %vm438, %v860
      %p862 = scmp.lt.s32.totalorder %s22, 1
      %s863 = scalar_select %p862, %s22, 1
      %s864 = smul.addr %s863, 8
      %s865 = scalar_lea.vmem %s11, %s864
      // Predicated region
      $region65: #{q2v_decoder_layer.3} parent=63 // pred_check
        %p866 = pneg %p286
      $region66: #{q2v_decoder_layer.3} parent=63 // pred_check_branch
        %868 = sbr.rel (%p866) target = $region68
      $region67: #{q2v_decoder_layer.3} parent=63 // pred_region
        _
      $region68: #{q2v_decoder_layer.3} parent=63 // pred_fallthru
        _
    $region64: #{q2v_decoder_layer.3} parent=5 // pred_fallthru
      _
    %p869 = scmp.le.s32.totalorder 2, %s17
    // Predicated region
    $region69: #{q2v_decoder_layer.3} parent=5 // pred_check
      %p870 = pneg %p869
    $region70: #{q2v_decoder_layer.3} parent=5 // pred_check_branch
      %872 = sbr.rel (%p870) target = $region72
    $region71: #{q2v_decoder_layer.3} parent=5 // pred_region
      %s873 = ssub.s32 %s17, 2
      // Predicated region
      $region73: #{q2v_decoder_layer.3} parent=71 // pred_check
        %p874 = pneg %p292
      $region74: #{q2v_decoder_layer.3} parent=71 // pred_check_branch
        %876 = sbr.rel (%p874) target = $region76
      $region75: #{q2v_decoder_layer.3} parent=71 // pred_region
        %p877 = scmp.lt.s32.totalorder %s23, 1
        %s878 = scalar_select %p877, %s23, 1
        %s879 = smul.addr %s878, 8
        %s880 = scalar_lea.vmem %s11, %s879
      $region76: #{q2v_decoder_layer.3} parent=71 // pred_fallthru
        _
    $region72: #{q2v_decoder_layer.3} parent=5 // pred_fallthru
      _
  $region6: #{q2v_decoder_layer.3} parent=0 // loop_footer
    %s21 = sadd.s32 1, %s17
  $region7: #{q2v_decoder_layer.3} parent=0 // loop_footer_branch
    %16 = sbr.rel target = $region3
  $region8: #{q2v_decoder_layer.3} parent=0 // loop_exit
    _

// kernel: q2v_decoder_layer.4
$region0: #{q2v_decoder_layer.4}
  #allocation0 [shape = 'u32[]', space=smem, size = 0x4, offset = 0x4, fixed_abs, tag = 'smem constant byte address 0x4 - core index']
  #allocation1 [shape = 'u32[72,128]{1,0:T(1,128)}', space=vmem, size = 0x9000, scoped, tag = 'internal scratch']
  %s0 = inlined_call_operand.vmem [shape: f32[2,8,32], index: 0, kind: input, shape index: {}]
  %s1 = inlined_call_operand.vmem [shape: f32[2,8,32], index: 1, kind: input, shape index: {}]
  %s2 = inlined_call_operand.vmem [shape: f32[2,16,32], index: 2, kind: input, shape index: {}]
  %s3 = inlined_call_operand.vmem [shape: f32[2,16,32], index: 3, kind: input, shape index: {}]
  %s4 = inlined_call_operand.vmem [shape: f32[2,1,16], index: 4, kind: input, shape index: {}]
  %s5 = inlined_call_operand.vmem [shape: bf16[32,32], index: 5, kind: input, shape index: {}]
  %s6 = inlined_call_operand.vmem [shape: f32[1,32], index: 6, kind: input, shape index: {}]
  %s7 = inlined_call_operand.vmem [shape: bf16[32,32], index: 7, kind: input, shape index: {}]
  %s8 = inlined_call_operand.vmem [shape: f32[1,32], index: 8, kind: input, shape index: {}]
  %s9 = inlined_call_operand.vmem [shape: bf16[32,32], index: 9, kind: input, shape index: {}]
  %s10 = inlined_call_operand.vmem [shape: f32[1,32], index: 10, kind: input, shape index: {}]
  %s11 = inlined_call_operand.vmem [shape: bf16[4,32], index: 11, kind: input, shape index: {}]
  %s12 = inlined_call_operand.vmem [shape: f32[4,1], index: 12, kind: input, shape index: {}]
  %s13 = inlined_call_operand.vmem [shape: bf16[2,8], index: 13, kind: input, shape index: {}]
  %s14 = inlined_call_operand.vmem [shape: f32[2,1], index: 14, kind: input, shape index: {}]
  %s15 = inlined_call_operand.vmem [shape: bf16[32,32], index: 15, kind: input, shape index: {}]
  %s16 = inlined_call_operand.vmem [shape: f32[1,32], index: 16, kind: input, shape index: {}]
  %s17 = inlined_call_operand.vmem [shape: f32[1,32], index: 17, kind: input, shape index: {}]
  %s18 = inlined_call_operand.vmem [shape: f32[1,32], index: 18, kind: input, shape index: {}]
  %s19 = inlined_call_operand.vmem [shape: f32[2,8,32], index: 19, kind: output, shape index: {0}]
  %s20 = inlined_call_operand.hbm [shape: f32[2,8,16], index: 20, kind: output, shape index: {1}]
  %s21 = inlined_call_operand.hbm [shape: f32[2,1,16], index: 21, kind: output, shape index: {2}]
  %22 = xla_tuple %s19, %s20, %s21
  %s23 = sld [smem:[#allocation0]]
  $region125: #{q2v_decoder_layer.4} parent=0
    _
  %s25 = ssub.s32 1, %s23
  %s26 = scalar_select 0, %s25, %s23
  $region1: #{q2v_decoder_layer.4} parent=0
    #allocation2 [shape = 'u8[8192]{0}', space=vmem, size = 0x2000, scoped, tag = 'output window, operand 1']
    #allocation3 [shape = 's32[2]{0}', space=sflag, size = 0x8, scoped, tag = 'scoped memory for q2v_decoder_layer.4']
    #allocation4 [shape = 'u8[1024]{0}', space=vmem, size = 0x400, scoped, tag = 'output window, operand 2']
    #allocation5 [shape = 's32[2]{0}', space=sflag, size = 0x8, scoped, tag = 'scoped memory for q2v_decoder_layer.4']
    %27 = vsyncpa [#allocation3], 0
    %s28 = scalar_lea.sflag [#allocation3], 1
    %29 = vsyncpa %s28, 0
    %30 = vsyncpa [#allocation5], 0
    %s31 = scalar_lea.sflag [#allocation5], 1
    %32 = vsyncpa %s31, 0
    loop: start=0, step=1, limit=4
    $region2: #{q2v_decoder_layer.4} parent=1 // loop_pre_header
      _
    $region3: #{q2v_decoder_layer.4} parent=1 // loop_header
      %s34 = sphi 0, %s38
      %p35 = scmp.ge.s32.totalorder %s34, 4
      %s44 = sphi 0, %s46
      %s47 = sphi 0, %s44
      %s48 = sphi 0, %s47
      %s64 = sphi 0, %s48
      %s70 = sphi 0, %s72
      %s73 = sphi 0, %s70
      %s74 = sphi 0, %s73
      %s90 = sphi 0, %s74
      %s96 = sphi 0, %s98
      %s99 = sphi 0, %s96
      %s100 = sphi 0, %s99
      %s116 = sphi 0, %s100
      %s122 = sphi 0, %s124
      %s125 = sphi 0, %s122
      %s126 = sphi 0, %s125
      %s142 = sphi 0, %s126
      %s148 = sphi 0, %s150
      %s151 = sphi 0, %s148
      %s152 = sphi 0, %s151
      %s168 = sphi 0, %s152
      %s172 = sphi 0, %s172
      %s174 = sphi 0, %s172
      %s175 = sphi 0, %s174
      %s189 = sphi 0, %s175
      %s193 = sphi 0, %s193
      %s195 = sphi 0, %s193
      %s196 = sphi 0, %s195
      %s210 = sphi 0, %s196
      %s214 = sphi 0, %s214
      %s216 = sphi 0, %s214
      %s217 = sphi 0, %s216
      %s231 = sphi 0, %s217
      %s235 = sphi 0, %s235
      %s237 = sphi 0, %s235
      %s238 = sphi 0, %s237
      %s252 = sphi 0, %s238
      %s256 = sphi 0, %s256
      %s258 = sphi 0, %s256
      %s259 = sphi 0, %s258
      %s273 = sphi 0, %s259
      %s277 = sphi 0, %s277
      %s279 = sphi 0, %s277
      %s280 = sphi 0, %s279
      %s294 = sphi 0, %s280
      %s298 = sphi 0, %s298
      %s300 = sphi 0, %s298
      %s301 = sphi 0, %s300
      %s315 = sphi 0, %s301
      %s319 = sphi 0, %s319
      %s321 = sphi 0, %s319
      %s322 = sphi 0, %s321
      %s336 = sphi 0, %s322
      %s340 = sphi 0, %s340
      %s342 = sphi 0, %s340
      %s343 = sphi 0, %s342
      %s357 = sphi 0, %s343
      %s361 = sphi 0, %s361
      %s363 = sphi 0, %s361
      %s364 = sphi 0, %s363
      %s378 = sphi 0, %s364
      %s382 = sphi 0, %s382
      %s384 = sphi 0, %s382
      %s385 = sphi 0, %s384
      %s399 = sphi 0, %s385
      %s403 = sphi 0, %s403
      %s405 = sphi 0, %s403
      %s406 = sphi 0, %s405
      %s420 = sphi 0, %s406
      %s424 = sphi 0, %s424
      %s426 = sphi 0, %s424
      %s427 = sphi 0, %s426
      %s441 = sphi 0, %s427
      %s445 = sphi 0, %s445
      %s447 = sphi 0, %s445
      %s448 = sphi 0, %s447
      %s462 = sphi 0, %s448
      %s468 = sphi 0, %s470
      %s471 = sphi 0, %s468
      %s472 = sphi 0, %s471
      %s488 = sphi 0, %s472
      %s494 = sphi 0, %s496
      %s497 = sphi 0, %s494
      %s498 = sphi 0, %s497
      %s514 = sphi 0, %s498
      %s520 = sphi 0, %s522
      %s523 = sphi 0, %s520
      %s524 = sphi 0, %s523
      %s540 = sphi 0, %s524
    $region4: #{q2v_decoder_layer.4} parent=1 // loop_header_branch
      %37 = sbr.rel (%p35) target = $region8
    $region5: #{q2v_decoder_layer.4} parent=1 // loop_body
      %s39 = ssub.s32 %s34, 1
      %s40 = ssub.s32 %s34, 2
      %s41 = sadd.s32 %s34, 1
      %s42 = ssub.s32 %s34, %s41
      %p43 = scmp.eq.s32.totalorder %s42, 0
      %s45 = sadd.s32 %s44, 1
      %s46 = scalar_select %p43, %s44, %s45
      %p49 = pneg %p43
      %p50 = scmp.eq.s32.totalorder %s34, 1
      %p51 = por %p49, %p50
      %p52 = scmp.ne.s32.totalorder %s44, %s47
      %p53 = scmp.eq.s32.totalorder %s34, 0
      %p54 = por %p52, %p53
      %p55 = scmp.ne.s32.totalorder %s44, %s47
      %p56 = scmp.eq.s32.totalorder %s39, 1
      %p57 = por %p55, %p56
      %p58 = scmp.ne.s32.totalorder %s47, %s48
      %p59 = scmp.eq.s32.totalorder %s39, 0
      %p60 = por %p58, %p59
      %p61 = scmp.ne.s32.totalorder %s47, %s48
      %p62 = scmp.eq.s32.totalorder %s40, 1
      %p63 = por %p61, %p62
      %p65 = scmp.ne.s32.totalorder %s48, %s64
      %p66 = scmp.eq.s32.totalorder %s40, 0
      %p67 = por %p65, %p66
      %s68 = ssub.s32 %s34, %s41
      %p69 = scmp.eq.s32.totalorder %s68, 0
      %s71 = sadd.s32 %s70, 1
      %s72 = scalar_select %p69, %s70, %s71
      %p75 = pneg %p69
      %p76 = scmp.eq.s32.totalorder %s34, 1
      %p77 = por %p75, %p76
      %p78 = scmp.ne.s32.totalorder %s70, %s73
      %p79 = scmp.eq.s32.totalorder %s34, 0
      %p80 = por %p78, %p79
      %p81 = scmp.ne.s32.totalorder %s70, %s73
      %p82 = scmp.eq.s32.totalorder %s39, 1
      %p83 = por %p81, %p82
      %p84 = scmp.ne.s32.totalorder %s73, %s74
      %p85 = scmp.eq.s32.totalorder %s39, 0
      %p86 = por %p84, %p85
      %p87 = scmp.ne.s32.totalorder %s73, %s74
      %p88 = scmp.eq.s32.totalorder %s40, 1
      %p89 = por %p87, %p88
      %p91 = scmp.ne.s32.totalorder %s74, %s90
      %p92 = scmp.eq.s32.totalorder %s40, 0
      %p93 = por %p91, %p92
      %s94 = ssub.s32 %s34, %s41
      %p95 = scmp.eq.s32.totalorder %s94, 0
      %s97 = sadd.s32 %s96, 1
      %s98 = scalar_select %p95, %s96, %s97
      %p101 = pneg %p95
      %p102 = scmp.eq.s32.totalorder %s34, 1
      %p103 = por %p101, %p102
      %p104 = scmp.ne.s32.totalorder %s96, %s99
      %p105 = scmp.eq.s32.totalorder %s34, 0
      %p106 = por %p104, %p105
      %p107 = scmp.ne.s32.totalorder %s96, %s99
      %p108 = scmp.eq.s32.totalorder %s39, 1
      %p109 = por %p107, %p108
      %p110 = scmp.ne.s32.totalorder %s99, %s100
      %p111 = scmp.eq.s32.totalorder %s39, 0
      %p112 = por %p110, %p111
      %p113 = scmp.ne.s32.totalorder %s99, %s100
      %p114 = scmp.eq.s32.totalorder %s40, 1
      %p115 = por %p113, %p114
      %p117 = scmp.ne.s32.totalorder %s100, %s116
      %p118 = scmp.eq.s32.totalorder %s40, 0
      %p119 = por %p117, %p118
      %s120 = ssub.s32 %s34, %s41
      %p121 = scmp.eq.s32.totalorder %s120, 0
      %s123 = sadd.s32 %s122, 1
      %s124 = scalar_select %p121, %s122, %s123
      %p127 = pneg %p121
      %p128 = scmp.eq.s32.totalorder %s34, 1
      %p129 = por %p127, %p128
      %p130 = scmp.ne.s32.totalorder %s122, %s125
      %p131 = scmp.eq.s32.totalorder %s34, 0
      %p132 = por %p130, %p131
      %p133 = scmp.ne.s32.totalorder %s122, %s125
      %p134 = scmp.eq.s32.totalorder %s39, 1
      %p135 = por %p133, %p134
      %p136 = scmp.ne.s32.totalorder %s125, %s126
      %p137 = scmp.eq.s32.totalorder %s39, 0
      %p138 = por %p136, %p137
      %p139 = scmp.ne.s32.totalorder %s125, %s126
      %p140 = scmp.eq.s32.totalorder %s40, 1
      %p141 = por %p139, %p140
      %p143 = scmp.ne.s32.totalorder %s126, %s142
      %p144 = scmp.eq.s32.totalorder %s40, 0
      %p145 = por %p143, %p144
      %s146 = ssub.s32 %s34, %s41
      %p147 = scmp.eq.s32.totalorder %s146, 0
      %s149 = sadd.s32 %s148, 1
      %s150 = scalar_select %p147, %s148, %s149
      %p153 = pneg %p147
      %p154 = scmp.eq.s32.totalorder %s34, 1
      %p155 = por %p153, %p154
      %p156 = scmp.ne.s32.totalorder %s148, %s151
      %p157 = scmp.eq.s32.totalorder %s34, 0
      %p158 = por %p156, %p157
      %p159 = scmp.ne.s32.totalorder %s148, %s151
      %p160 = scmp.eq.s32.totalorder %s39, 1
      %p161 = por %p159, %p160
      %p162 = scmp.ne.s32.totalorder %s151, %s152
      %p163 = scmp.eq.s32.totalorder %s39, 0
      %p164 = por %p162, %p163
      %p165 = scmp.ne.s32.totalorder %s151, %s152
      %p166 = scmp.eq.s32.totalorder %s40, 1
      %p167 = por %p165, %p166
      %p169 = scmp.ne.s32.totalorder %s152, %s168
      %p170 = scmp.eq.s32.totalorder %s40, 0
      %p171 = por %p169, %p170
      %s173 = sadd.s32 %s172, 1
      %p176 = scmp.eq.s32.totalorder %s34, 1
      %p177 = scmp.ne.s32.totalorder %s172, %s174
      %p178 = scmp.eq.s32.totalorder %s34, 0
      %p179 = por %p177, %p178
      %p180 = scmp.ne.s32.totalorder %s172, %s174
      %p181 = scmp.eq.s32.totalorder %s39, 1
      %p182 = por %p180, %p181
      %p183 = scmp.ne.s32.totalorder %s174, %s175
      %p184 = scmp.eq.s32.totalorder %s39, 0
      %p185 = por %p183, %p184
      %p186 = scmp.ne.s32.totalorder %s174, %s175
      %p187 = scmp.eq.s32.totalorder %s40, 1
      %p188 = por %p186, %p187
      %p190 = scmp.ne.s32.totalorder %s175, %s189
      %p191 = scmp.eq.s32.totalorder %s40, 0
      %p192 = por %p190, %p191
      %s194 = sadd.s32 %s193, 1
      %p197 = scmp.eq.s32.totalorder %s34, 1
      %p198 = scmp.ne.s32.totalorder %s193, %s195
      %p199 = scmp.eq.s32.totalorder %s34, 0
      %p200 = por %p198, %p199
      %p201 = scmp.ne.s32.totalorder %s193, %s195
      %p202 = scmp.eq.s32.totalorder %s39, 1
      %p203 = por %p201, %p202
      %p204 = scmp.ne.s32.totalorder %s195, %s196
      %p205 = scmp.eq.s32.totalorder %s39, 0
      %p206 = por %p204, %p205
      %p207 = scmp.ne.s32.totalorder %s195, %s196
      %p208 = scmp.eq.s32.totalorder %s40, 1
      %p209 = por %p207, %p208
      %p211 = scmp.ne.s32.totalorder %s196, %s210
      %p212 = scmp.eq.s32.totalorder %s40, 0
      %p213 = por %p211, %p212
      %s215 = sadd.s32 %s214, 1
      %p218 = scmp.eq.s32.totalorder %s34, 1
      %p219 = scmp.ne.s32.totalorder %s214, %s216
      %p220 = scmp.eq.s32.totalorder %s34, 0
      %p221 = por %p219, %p220
      %p222 = scmp.ne.s32.totalorder %s214, %s216
      %p223 = scmp.eq.s32.totalorder %s39, 1
      %p224 = por %p222, %p223
      %p225 = scmp.ne.s32.totalorder %s216, %s217
      %p226 = scmp.eq.s32.totalorder %s39, 0
      %p227 = por %p225, %p226
      %p228 = scmp.ne.s32.totalorder %s216, %s217
      %p229 = scmp.eq.s32.totalorder %s40, 1
      %p230 = por %p228, %p229
      %p232 = scmp.ne.s32.totalorder %s217, %s231
      %p233 = scmp.eq.s32.totalorder %s40, 0
      %p234 = por %p232, %p233
      %s236 = sadd.s32 %s235, 1
      %p239 = scmp.eq.s32.totalorder %s34, 1
      %p240 = scmp.ne.s32.totalorder %s235, %s237
      %p241 = scmp.eq.s32.totalorder %s34, 0
      %p242 = por %p240, %p241
      %p243 = scmp.ne.s32.totalorder %s235, %s237
      %p244 = scmp.eq.s32.totalorder %s39, 1
      %p245 = por %p243, %p244
      %p246 = scmp.ne.s32.totalorder %s237, %s238
      %p247 = scmp.eq.s32.totalorder %s39, 0
      %p248 = por %p246, %p247
      %p249 = scmp.ne.s32.totalorder %s237, %s238
      %p250 = scmp.eq.s32.totalorder %s40, 1
      %p251 = por %p249, %p250
      %p253 = scmp.ne.s32.totalorder %s238, %s252
      %p254 = scmp.eq.s32.totalorder %s40, 0
      %p255 = por %p253, %p254
      %s257 = sadd.s32 %s256, 1
      %p260 = scmp.eq.s32.totalorder %s34, 1
      %p261 = scmp.ne.s32.totalorder %s256, %s258
      %p262 = scmp.eq.s32.totalorder %s34, 0
      %p263 = por %p261, %p262
      %p264 = scmp.ne.s32.totalorder %s256, %s258
      %p265 = scmp.eq.s32.totalorder %s39, 1
      %p266 = por %p264, %p265
      %p267 = scmp.ne.s32.totalorder %s258, %s259
      %p268 = scmp.eq.s32.totalorder %s39, 0
      %p269 = por %p267, %p268
      %p270 = scmp.ne.s32.totalorder %s258, %s259
      %p271 = scmp.eq.s32.totalorder %s40, 1
      %p272 = por %p270, %p271
      %p274 = scmp.ne.s32.totalorder %s259, %s273
      %p275 = scmp.eq.s32.totalorder %s40, 0
      %p276 = por %p274, %p275
      %s278 = sadd.s32 %s277, 1
      %p281 = scmp.eq.s32.totalorder %s34, 1
      %p282 = scmp.ne.s32.totalorder %s277, %s279
      %p283 = scmp.eq.s32.totalorder %s34, 0
      %p284 = por %p282, %p283
      %p285 = scmp.ne.s32.totalorder %s277, %s279
      %p286 = scmp.eq.s32.totalorder %s39, 1
      %p287 = por %p285, %p286
      %p288 = scmp.ne.s32.totalorder %s279, %s280
      %p289 = scmp.eq.s32.totalorder %s39, 0
      %p290 = por %p288, %p289
      %p291 = scmp.ne.s32.totalorder %s279, %s280
      %p292 = scmp.eq.s32.totalorder %s40, 1
      %p293 = por %p291, %p292
      %p295 = scmp.ne.s32.totalorder %s280, %s294
      %p296 = scmp.eq.s32.totalorder %s40, 0
      %p297 = por %p295, %p296
      %s299 = sadd.s32 %s298, 1
      %p302 = scmp.eq.s32.totalorder %s34, 1
      %p303 = scmp.ne.s32.totalorder %s298, %s300
      %p304 = scmp.eq.s32.totalorder %s34, 0
      %p305 = por %p303, %p304
      %p306 = scmp.ne.s32.totalorder %s298, %s300
      %p307 = scmp.eq.s32.totalorder %s39, 1
      %p308 = por %p306, %p307
      %p309 = scmp.ne.s32.totalorder %s300, %s301
      %p310 = scmp.eq.s32.totalorder %s39, 0
      %p311 = por %p309, %p310
      %p312 = scmp.ne.s32.totalorder %s300, %s301
      %p313 = scmp.eq.s32.totalorder %s40, 1
      %p314 = por %p312, %p313
      %p316 = scmp.ne.s32.totalorder %s301, %s315
      %p317 = scmp.eq.s32.totalorder %s40, 0
      %p318 = por %p316, %p317
      %s320 = sadd.s32 %s319, 1
      %p323 = scmp.eq.s32.totalorder %s34, 1
      %p324 = scmp.ne.s32.totalorder %s319, %s321
      %p325 = scmp.eq.s32.totalorder %s34, 0
      %p326 = por %p324, %p325
      %p327 = scmp.ne.s32.totalorder %s319, %s321
      %p328 = scmp.eq.s32.totalorder %s39, 1
      %p329 = por %p327, %p328
      %p330 = scmp.ne.s32.totalorder %s321, %s322
      %p331 = scmp.eq.s32.totalorder %s39, 0
      %p332 = por %p330, %p331
      %p333 = scmp.ne.s32.totalorder %s321, %s322
      %p334 = scmp.eq.s32.totalorder %s40, 1
      %p335 = por %p333, %p334
      %p337 = scmp.ne.s32.totalorder %s322, %s336
      %p338 = scmp.eq.s32.totalorder %s40, 0
      %p339 = por %p337, %p338
      %s341 = sadd.s32 %s340, 1
      %p344 = scmp.eq.s32.totalorder %s34, 1
      %p345 = scmp.ne.s32.totalorder %s340, %s342
      %p346 = scmp.eq.s32.totalorder %s34, 0
      %p347 = por %p345, %p346
      %p348 = scmp.ne.s32.totalorder %s340, %s342
      %p349 = scmp.eq.s32.totalorder %s39, 1
      %p350 = por %p348, %p349
      %p351 = scmp.ne.s32.totalorder %s342, %s343
      %p352 = scmp.eq.s32.totalorder %s39, 0
      %p353 = por %p351, %p352
      %p354 = scmp.ne.s32.totalorder %s342, %s343
      %p355 = scmp.eq.s32.totalorder %s40, 1
      %p356 = por %p354, %p355
      %p358 = scmp.ne.s32.totalorder %s343, %s357
      %p359 = scmp.eq.s32.totalorder %s40, 0
      %p360 = por %p358, %p359
      %s362 = sadd.s32 %s361, 1
      %p365 = scmp.eq.s32.totalorder %s34, 1
      %p366 = scmp.ne.s32.totalorder %s361, %s363
      %p367 = scmp.eq.s32.totalorder %s34, 0
      %p368 = por %p366, %p367
      %p369 = scmp.ne.s32.totalorder %s361, %s363
      %p370 = scmp.eq.s32.totalorder %s39, 1
      %p371 = por %p369, %p370
      %p372 = scmp.ne.s32.totalorder %s363, %s364
      %p373 = scmp.eq.s32.totalorder %s39, 0
      %p374 = por %p372, %p373
      %p375 = scmp.ne.s32.totalorder %s363, %s364
      %p376 = scmp.eq.s32.totalorder %s40, 1
      %p377 = por %p375, %p376
      %p379 = scmp.ne.s32.totalorder %s364, %s378
      %p380 = scmp.eq.s32.totalorder %s40, 0
      %p381 = por %p379, %p380
      %s383 = sadd.s32 %s382, 1
      %p386 = scmp.eq.s32.totalorder %s34, 1
      %p387 = scmp.ne.s32.totalorder %s382, %s384
      %p388 = scmp.eq.s32.totalorder %s34, 0
      %p389 = por %p387, %p388
      %p390 = scmp.ne.s32.totalorder %s382, %s384
      %p391 = scmp.eq.s32.totalorder %s39, 1
      %p392 = por %p390, %p391
      %p393 = scmp.ne.s32.totalorder %s384, %s385
      %p394 = scmp.eq.s32.totalorder %s39, 0
      %p395 = por %p393, %p394
      %p396 = scmp.ne.s32.totalorder %s384, %s385
      %p397 = scmp.eq.s32.totalorder %s40, 1
      %p398 = por %p396, %p397
      %p400 = scmp.ne.s32.totalorder %s385, %s399
      %p401 = scmp.eq.s32.totalorder %s40, 0
      %p402 = por %p400, %p401
      %s404 = sadd.s32 %s403, 1
      %p407 = scmp.eq.s32.totalorder %s34, 1
      %p408 = scmp.ne.s32.totalorder %s403, %s405
      %p409 = scmp.eq.s32.totalorder %s34, 0
      %p410 = por %p408, %p409
      %p411 = scmp.ne.s32.totalorder %s403, %s405
      %p412 = scmp.eq.s32.totalorder %s39, 1
      %p413 = por %p411, %p412
      %p414 = scmp.ne.s32.totalorder %s405, %s406
      %p415 = scmp.eq.s32.totalorder %s39, 0
      %p416 = por %p414, %p415
      %p417 = scmp.ne.s32.totalorder %s405, %s406
      %p418 = scmp.eq.s32.totalorder %s40, 1
      %p419 = por %p417, %p418
      %p421 = scmp.ne.s32.totalorder %s406, %s420
      %p422 = scmp.eq.s32.totalorder %s40, 0
      %p423 = por %p421, %p422
      %s425 = sadd.s32 %s424, 1
      %p428 = scmp.eq.s32.totalorder %s34, 1
      %p429 = scmp.ne.s32.totalorder %s424, %s426
      %p430 = scmp.eq.s32.totalorder %s34, 0
      %p431 = por %p429, %p430
      %p432 = scmp.ne.s32.totalorder %s424, %s426
      %p433 = scmp.eq.s32.totalorder %s39, 1
      %p434 = por %p432, %p433
      %p435 = scmp.ne.s32.totalorder %s426, %s427
      %p436 = scmp.eq.s32.totalorder %s39, 0
      %p437 = por %p435, %p436
      %p438 = scmp.ne.s32.totalorder %s426, %s427
      %p439 = scmp.eq.s32.totalorder %s40, 1
      %p440 = por %p438, %p439
      %p442 = scmp.ne.s32.totalorder %s427, %s441
      %p443 = scmp.eq.s32.totalorder %s40, 0
      %p444 = por %p442, %p443
      %s446 = sadd.s32 %s445, 1
      %p449 = scmp.eq.s32.totalorder %s34, 1
      %p450 = scmp.ne.s32.totalorder %s445, %s447
      %p451 = scmp.eq.s32.totalorder %s34, 0
      %p452 = por %p450, %p451
      %p453 = scmp.ne.s32.totalorder %s445, %s447
      %p454 = scmp.eq.s32.totalorder %s39, 1
      %p455 = por %p453, %p454
      %p456 = scmp.ne.s32.totalorder %s447, %s448
      %p457 = scmp.eq.s32.totalorder %s39, 0
      %p458 = por %p456, %p457
      %p459 = scmp.ne.s32.totalorder %s447, %s448
      %p460 = scmp.eq.s32.totalorder %s40, 1
      %p461 = por %p459, %p460
      %p463 = scmp.ne.s32.totalorder %s448, %s462
      %p464 = scmp.eq.s32.totalorder %s40, 0
      %p465 = por %p463, %p464
      %s466 = ssub.s32 %s34, %s41
      %p467 = scmp.eq.s32.totalorder %s466, 0
      %s469 = sadd.s32 %s468, 1
      %s470 = scalar_select %p467, %s468, %s469
      %p473 = pneg %p467
      %p474 = scmp.eq.s32.totalorder %s34, 1
      %p475 = por %p473, %p474
      %p476 = scmp.ne.s32.totalorder %s468, %s471
      %p477 = scmp.eq.s32.totalorder %s34, 0
      %p478 = por %p476, %p477
      %p479 = scmp.ne.s32.totalorder %s468, %s471
      %p480 = scmp.eq.s32.totalorder %s39, 1
      %p481 = por %p479, %p480
      %p482 = scmp.ne.s32.totalorder %s471, %s472
      %p483 = scmp.eq.s32.totalorder %s39, 0
      %p484 = por %p482, %p483
      %p485 = scmp.ne.s32.totalorder %s471, %s472
      %p486 = scmp.eq.s32.totalorder %s40, 1
      %p487 = por %p485, %p486
      %p489 = scmp.ne.s32.totalorder %s472, %s488
      %p490 = scmp.eq.s32.totalorder %s40, 0
      %p491 = por %p489, %p490
      %s492 = ssub.s32 %s34, %s41
      %p493 = scmp.eq.s32.totalorder %s492, 0
      %s495 = sadd.s32 %s494, 1
      %s496 = scalar_select %p493, %s494, %s495
      %p499 = pneg %p493
      %p500 = scmp.eq.s32.totalorder %s34, 1
      %p501 = por %p499, %p500
      %p502 = scmp.ne.s32.totalorder %s494, %s497
      %p503 = scmp.eq.s32.totalorder %s34, 0
      %p504 = por %p502, %p503
      %p505 = scmp.ne.s32.totalorder %s494, %s497
      %p506 = scmp.eq.s32.totalorder %s39, 1
      %p507 = por %p505, %p506
      %p508 = scmp.ne.s32.totalorder %s497, %s498
      %p509 = scmp.eq.s32.totalorder %s39, 0
      %p510 = por %p508, %p509
      %p511 = scmp.ne.s32.totalorder %s497, %s498
      %p512 = scmp.eq.s32.totalorder %s40, 1
      %p513 = por %p511, %p512
      %p515 = scmp.ne.s32.totalorder %s498, %s514
      %p516 = scmp.eq.s32.totalorder %s40, 0
      %p517 = por %p515, %p516
      %s518 = ssub.s32 %s34, %s41
      %p519 = scmp.eq.s32.totalorder %s518, 0
      %s521 = sadd.s32 %s520, 1
      %s522 = scalar_select %p519, %s520, %s521
      %p525 = pneg %p519
      %p526 = scmp.eq.s32.totalorder %s34, 1
      %p527 = por %p525, %p526
      %p528 = scmp.ne.s32.totalorder %s520, %s523
      %p529 = scmp.eq.s32.totalorder %s34, 0
      %p530 = por %p528, %p529
      %p531 = scmp.ne.s32.totalorder %s520, %s523
      %p532 = scmp.eq.s32.totalorder %s39, 1
      %p533 = por %p531, %p532
      %p534 = scmp.ne.s32.totalorder %s523, %s524
      %p535 = scmp.eq.s32.totalorder %s39, 0
      %p536 = por %p534, %p535
      %p537 = scmp.ne.s32.totalorder %s523, %s524
      %p538 = scmp.eq.s32.totalorder %s40, 1
      %p539 = por %p537, %p538
      %p541 = scmp.ne.s32.totalorder %s524, %s540
      %p542 = scmp.eq.s32.totalorder %s40, 0
      %p543 = por %p541, %p542
      %p544 = scmp.le.s32.totalorder 1, %s34
      %p545 = scmp.lt.s32.totalorder %s34, 3
      %p546 = pnand %p544, %p545
      %p547 = pneg %p546
      // Predicated region
      $region9: #{q2v_decoder_layer.4} parent=5 // pred_check
        _
      $region10: #{q2v_decoder_layer.4} parent=5 // pred_check_branch
        %549 = sbr.rel (%p546) target = $region12
      $region11: #{q2v_decoder_layer.4} parent=5 // pred_region
        %s550 = ssub.s32 %s34, 1
        // Predicated region
        $region13: #{q2v_decoder_layer.4} parent=11 // pred_check
          %p551 = pneg %p185
        $region14: #{q2v_decoder_layer.4} parent=11 // pred_check_branch
          %553 = sbr.rel (%p551) target = $region16
        $region15: #{q2v_decoder_layer.4} parent=11 // pred_region
          _
        $region16: #{q2v_decoder_layer.4} parent=11 // pred_fallthru
          _
        // Predicated region
        $region17: #{q2v_decoder_layer.4} parent=11 // pred_check
          %p554 = pneg %p206
        $region18: #{q2v_decoder_layer.4} parent=11 // pred_check_branch
          %556 = sbr.rel (%p554) target = $region20
        $region19: #{q2v_decoder_layer.4} parent=11 // pred_region
          _
        $region20: #{q2v_decoder_layer.4} parent=11 // pred_fallthru
          _
        // Predicated region
        $region21: #{q2v_decoder_layer.4} parent=11 // pred_check
          %p557 = pneg %p227
        $region22: #{q2v_decoder_layer.4} parent=11 // pred_check_branch
          %559 = sbr.rel (%p557) target = $region24
        $region23: #{q2v_decoder_layer.4} parent=11 // pred_region
          _
        $region24: #{q2v_decoder_layer.4} parent=11 // pred_fallthru
          _
        // Predicated region
        $region25: #{q2v_decoder_layer.4} parent=11 // pred_check
          %p560 = pneg %p248
        $region26: #{q2v_decoder_layer.4} parent=11 // pred_check_branch
          %562 = sbr.rel (%p560) target = $region28
        $region27: #{q2v_decoder_layer.4} parent=11 // pred_region
          _
        $region28: #{q2v_decoder_layer.4} parent=11 // pred_fallthru
          _
        // Predicated region
        $region29: #{q2v_decoder_layer.4} parent=11 // pred_check
          %p563 = pneg %p269
        $region30: #{q2v_decoder_layer.4} parent=11 // pred_check_branch
          %565 = sbr.rel (%p563) target = $region32
        $region31: #{q2v_decoder_layer.4} parent=11 // pred_region
          _
        $region32: #{q2v_decoder_layer.4} parent=11 // pred_fallthru
          _
        // Predicated region
        $region33: #{q2v_decoder_layer.4} parent=11 // pred_check
          %p566 = pneg %p290
        $region34: #{q2v_decoder_layer.4} parent=11 // pred_check_branch
          %568 = sbr.rel (%p566) target = $region36
        $region35: #{q2v_decoder_layer.4} parent=11 // pred_region
          _
        $region36: #{q2v_decoder_layer.4} parent=11 // pred_fallthru
          _
        // Predicated region
        $region37: #{q2v_decoder_layer.4} parent=11 // pred_check
          %p569 = pneg %p311
        $region38: #{q2v_decoder_layer.4} parent=11 // pred_check_branch
          %571 = sbr.rel (%p569) target = $region40
        $region39: #{q2v_decoder_layer.4} parent=11 // pred_region
          _
        $region40: #{q2v_decoder_layer.4} parent=11 // pred_fallthru
          _
        // Predicated region
        $region41: #{q2v_decoder_layer.4} parent=11 // pred_check
          %p572 = pneg %p332
        $region42: #{q2v_decoder_layer.4} parent=11 // pred_check_branch
          %574 = sbr.rel (%p572) target = $region44
        $region43: #{q2v_decoder_layer.4} parent=11 // pred_region
          _
        $region44: #{q2v_decoder_layer.4} parent=11 // pred_fallthru
          _
        // Predicated region
        $region45: #{q2v_decoder_layer.4} parent=11 // pred_check
          %p575 = pneg %p353
        $region46: #{q2v_decoder_layer.4} parent=11 // pred_check_branch
          %577 = sbr.rel (%p575) target = $region48
        $region47: #{q2v_decoder_layer.4} parent=11 // pred_region
          _
        $region48: #{q2v_decoder_layer.4} parent=11 // pred_fallthru
          _
        // Predicated region
        $region49: #{q2v_decoder_layer.4} parent=11 // pred_check
          %p578 = pneg %p374
        $region50: #{q2v_decoder_layer.4} parent=11 // pred_check_branch
          %580 = sbr.rel (%p578) target = $region52
        $region51: #{q2v_decoder_layer.4} parent=11 // pred_region
          _
        $region52: #{q2v_decoder_layer.4} parent=11 // pred_fallthru
          _
        // Predicated region
        $region53: #{q2v_decoder_layer.4} parent=11 // pred_check
          %p581 = pneg %p395
        $region54: #{q2v_decoder_layer.4} parent=11 // pred_check_branch
          %583 = sbr.rel (%p581) target = $region56
        $region55: #{q2v_decoder_layer.4} parent=11 // pred_region
          _
        $region56: #{q2v_decoder_layer.4} parent=11 // pred_fallthru
          _
        // Predicated region
        $region57: #{q2v_decoder_layer.4} parent=11 // pred_check
          %p584 = pneg %p416
        $region58: #{q2v_decoder_layer.4} parent=11 // pred_check_branch
          %586 = sbr.rel (%p584) target = $region60
        $region59: #{q2v_decoder_layer.4} parent=11 // pred_region
          _
        $region60: #{q2v_decoder_layer.4} parent=11 // pred_fallthru
          _
        // Predicated region
        $region61: #{q2v_decoder_layer.4} parent=11 // pred_check
          %p587 = pneg %p437
        $region62: #{q2v_decoder_layer.4} parent=11 // pred_check_branch
          %589 = sbr.rel (%p587) target = $region64
        $region63: #{q2v_decoder_layer.4} parent=11 // pred_region
          _
        $region64: #{q2v_decoder_layer.4} parent=11 // pred_fallthru
          _
        // Predicated region
        $region65: #{q2v_decoder_layer.4} parent=11 // pred_check
          %p590 = pneg %p458
        $region66: #{q2v_decoder_layer.4} parent=11 // pred_check_branch
          %592 = sbr.rel (%p590) target = $region68
        $region67: #{q2v_decoder_layer.4} parent=11 // pred_region
          _
        $region68: #{q2v_decoder_layer.4} parent=11 // pred_fallthru
          _
      $region12: #{q2v_decoder_layer.4} parent=5 // pred_fallthru
        _
      %p593 = scmp.lt.s32.totalorder %s34, 2
      // Predicated region
      $region69: #{q2v_decoder_layer.4} parent=5 // pred_check
        %p594 = pneg %p593
      $region70: #{q2v_decoder_layer.4} parent=5 // pred_check_branch
        %596 = sbr.rel (%p594) target = $region72
      $region71: #{q2v_decoder_layer.4} parent=5 // pred_region
        // Predicated region
        $region73: #{q2v_decoder_layer.4} parent=71 // pred_check
          %p597 = pneg %p54
        $region74: #{q2v_decoder_layer.4} parent=71 // pred_check_branch
          %599 = sbr.rel (%p597) target = $region76
        $region75: #{q2v_decoder_layer.4} parent=71 // pred_region
          %p600 = scmp.lt.s32.totalorder %s34, 1
          %s601 = scalar_select %p600, %s34, 1
          %s602 = smul.addr %s601, 8
          %s603 = scalar_lea.vmem %s0, %s602
        $region76: #{q2v_decoder_layer.4} parent=71 // pred_fallthru
          _
        // Predicated region
        $region77: #{q2v_decoder_layer.4} parent=71 // pred_check
          %p604 = pneg %p80
        $region78: #{q2v_decoder_layer.4} parent=71 // pred_check_branch
          %606 = sbr.rel (%p604) target = $region80
        $region79: #{q2v_decoder_layer.4} parent=71 // pred_region
          %p607 = scmp.lt.s32.totalorder %s34, 1
          %s608 = scalar_select %p607, %s34, 1
          %s609 = smul.addr %s608, 8
          %s610 = scalar_lea.vmem %s1, %s609
        $region80: #{q2v_decoder_layer.4} parent=71 // pred_fallthru
          _
        // Predicated region
        $region81: #{q2v_decoder_layer.4} parent=71 // pred_check
          %p611 = pneg %p106
        $region82: #{q2v_decoder_layer.4} parent=71 // pred_check_branch
          %613 = sbr.rel (%p611) target = $region84
        $region83: #{q2v_decoder_layer.4} parent=71 // pred_region
          %p614 = scmp.lt.s32.totalorder %s34, 1
          %s615 = scalar_select %p614, %s34, 1
          %s616 = smul.addr %s615, 2
          %s617 = smul.addr %s616, 8
          %s618 = scalar_lea.vmem %s2, %s617
        $region84: #{q2v_decoder_layer.4} parent=71 // pred_fallthru
          _
        // Predicated region
        $region85: #{q2v_decoder_layer.4} parent=71 // pred_check
          %p619 = pneg %p132
        $region86: #{q2v_decoder_layer.4} parent=71 // pred_check_branch
          %621 = sbr.rel (%p619) target = $region88
        $region87: #{q2v_decoder_layer.4} parent=71 // pred_region
          %p622 = scmp.lt.s32.totalorder %s34, 1
          %s623 = scalar_select %p622, %s34, 1
          %s624 = smul.addr %s623, 2
          %s625 = smul.addr %s624, 8
          %s626 = scalar_lea.vmem %s3, %s625
        $region88: #{q2v_decoder_layer.4} parent=71 // pred_fallthru
          _
        // Predicated region
        $region89: #{q2v_decoder_layer.4} parent=71 // pred_check
          %p627 = pneg %p158
        $region90: #{q2v_decoder_layer.4} parent=71 // pred_check_branch
          %629 = sbr.rel (%p627) target = $region92
        $region91: #{q2v_decoder_layer.4} parent=71 // pred_region
          %p630 = scmp.lt.s32.totalorder %s34, 1
          %s631 = scalar_select %p630, %s34, 1
          %s632 = scalar_lea.vmem %s4, %s631
        $region92: #{q2v_decoder_layer.4} parent=71 // pred_fallthru
          _
      $region72: #{q2v_decoder_layer.4} parent=5 // pred_fallthru
        _
      %p633 = scmp.le.s32.totalorder 1, %s34
      %p634 = scmp.lt.s32.totalorder %s34, 3
      %p635 = pnand %p633, %p634
      %p636 = pneg %p635
      // Predicated region
      $region93: #{q2v_decoder_layer.4} parent=5 // pred_check
        _
      $region94: #{q2v_decoder_layer.4} parent=5 // pred_check_branch
        %638 = sbr.rel (%p635) target = $region96
      $region95: #{q2v_decoder_layer.4} parent=5 // pred_region
        %s639 = ssub.s32 %s34, 1
        %p640 = scmp.lt.s32.totalorder %s39, 1
        %s641 = scalar_select %p640, %s39, 1
        %s642 = smul.addr %s641, 8
        %s643 = scalar_lea.vmem %s0, %s642
        %p644 = pneg %p60
        %p645 = pneg %p57
        %p646 = scmp.lt.s32.totalorder %s39, 1
        %s647 = scalar_select %p646, %s39, 1
        %s648 = smul.addr %s647, 8
        %s649 = scalar_lea.vmem %s1, %s648
        %p650 = pneg %p86
        %p651 = pneg %p83
        %p652 = scmp.lt.s32.totalorder %s39, 1
        %s653 = scalar_select %p652, %s39, 1
        %s654 = smul.addr %s653, 2
        %s655 = smul.addr %s654, 8
        %s656 = scalar_lea.vmem %s2, %s655
        %p657 = pneg %p112
        %p658 = pneg %p109
        %p659 = scmp.lt.s32.totalorder %s39, 1
        %s660 = scalar_select %p659, %s39, 1
        %s661 = smul.addr %s660, 2
        %s662 = smul.addr %s661, 8
        %s663 = scalar_lea.vmem %s3, %s662
        %p664 = pneg %p138
        %p665 = pneg %p135
        %p666 = scmp.lt.s32.totalorder %s39, 1
        %s667 = scalar_select %p666, %s39, 1
        %s668 = scalar_lea.vmem %s4, %s667
        %p669 = pneg %p164
        %p670 = pneg %p161
        %p671 = pneg %p185
        %p672 = pneg %p182
        %p673 = pneg %p206
        %p674 = pneg %p203
        %p675 = pneg %p227
        %p676 = pneg %p224
        %p677 = pneg %p248
        %p678 = pneg %p245
        %p679 = pneg %p269
        %p680 = pneg %p266
        %p681 = pneg %p290
        %p682 = pneg %p287
        %p683 = pneg %p311
        %p684 = pneg %p308
        %p685 = pneg %p332
        %p686 = pneg %p329
        %p687 = pneg %p353
        %p688 = pneg %p350
        %p689 = pneg %p374
        %p690 = pneg %p371
        %p691 = pneg %p395
        %p692 = pneg %p392
        %p693 = pneg %p416
        %p694 = pneg %p413
        %p695 = pneg %p437
        %p696 = pneg %p434
        %p697 = pneg %p458
        %p698 = pneg %p455
        %p699 = pneg %p484
        %p700 = pneg %p481
        %p701 = scmp.lt.s32.totalorder %s39, 1
        %s702 = scalar_select %p701, %s39, 1
        %s703 = smul.addr %s702, 8
        %s704 = scalar_lea.vmem %s19, %s703
        %p705 = pneg %p510
        %p706 = pneg %p507
        %s707 = sand.u32 %s497, 1
        %s708 = scalar_lea.sflag [#allocation3], %s707
        %s709 = sand.u32 %s497, 1
        %s710 = smul.addr %s709, 8
        %s711 = scalar_lea.vmem [#allocation2], %s710
        %p712 = pneg %p536
        %p713 = pneg %p533
        %s714 = sand.u32 %s523, 1
        %s715 = scalar_lea.sflag [#allocation5], %s714
        %s716 = sand.u32 %s523, 1
        %s717 = scalar_lea.vmem [#allocation4], %s716
        %p718 = scmp.lt.s32.totalorder %s39, 1
        %s719 = scalar_select %p718, %s39, 1
        %s720 = smul.addr %s719, 8
        %s721 = scalar_lea.vmem %s0, %s720
        %p722 = scmp.lt.s32.totalorder %s39, 1
        %s723 = scalar_select %p722, %s39, 1
        %s724 = smul.addr %s723, 8
        %s725 = scalar_lea.vmem %s1, %s724
        %p726 = scmp.lt.s32.totalorder %s39, 1
        %s727 = scalar_select %p726, %s39, 1
        %s728 = smul.addr %s727, 2
        %s729 = smul.addr %s728, 8
        %s730 = scalar_lea.vmem %s2, %s729
        %p731 = scmp.lt.s32.totalorder %s39, 1
        %s732 = scalar_select %p731, %s39, 1
        %s733 = smul.addr %s732, 2
        %s734 = smul.addr %s733, 8
        %s735 = scalar_lea.vmem %s3, %s734
        %p736 = scmp.lt.s32.totalorder %s39, 1
        %s737 = scalar_select %p736, %s39, 1
        %s738 = scalar_lea.vmem %s4, %s737
        %p739 = scmp.lt.s32.totalorder %s39, 1
        %s740 = scalar_select %p739, %s39, 1
        %s741 = smul.addr %s740, 8
        %s742 = scalar_lea.vmem %s19, %s741
        %v744 = vld [vmem:[%s721] sm:$0xff]
        %v745 = vld [vmem:[%s725] sm:$0xff]
        %v746 = vadd.f32 %v744, %v745
        %v747 = vld [vmem:[%s730] sm:$0xff]
        %v748 = vld [vmem:[%s730 + $0x8] sm:$0xff]
        %v749 = vld [vmem:[%s735] sm:$0xff]
        %v750 = vld [vmem:[%s735 + $0x8] sm:$0xff]
        %v751 = vadd.f32 %v747, %v749
        %v752 = vadd.f32 %v748, %v750
        %v753 = vld [vmem:[%s5] sm:$0xf]
        %v754 = vld [vmem:[%s5 + $0x4] sm:$0xf]
        %v755 = vld [vmem:[%s5 + $0x8] sm:$0xf]
        %v756 = vld [vmem:[%s5 + $0xc] sm:$0xf]
        %v757 = vpack.c.bf16 %v746, %v746
        %v758 = vld [vmem:[%s6] sm:$0x1]
        %v760 = vperm.slane %v758, 0
        %v766 = vunpack.c.l.b16 %v753
        %v767 = vunpack.c.l.b16 %v754
        %v768 = vunpack.c.l.b16 %v755
        %v769 = vunpack.c.l.b16 %v756
        %v770 = vpack.c.b16 %v767, %v766
        %v771 = vpack.c.b16 %v769, %v768
        %vm774 = vcmask 261120
        %v776 = vsel %vm774, %v757, 0
        %778 = vmatpush.bf16.msra.mxu0 0
        %779 = vmatpush.bf16.msra.mxu0 0
        %780 = vmatpush.bf16.msra.mxu0 0
        %781 = vmatpush.bf16.msra.mxu0 0
        %782 = vmatpush.bf16.msra.mxu0 0
        %783 = vmatpush.bf16.msra.mxu0 0
        %784 = vmatpush.bf16.msra.mxu0 %v771
        %785 = vmatpush.bf16.msra.mxu0 %v770
        %786 = vmatmul.bf16.gmra.mxu0 %v776
        %v787 = vpop.f32.mrf.mxu0
        %v788 = vadd.f32 %v760, %v787
        %v789 = vpop.f32.mrf.mxu0
        %790 = vdwg.mxu0
        %v791 = vld [vmem:[%s7] sm:$0xf]
        %v792 = vld [vmem:[%s7 + $0x4] sm:$0xf]
        %v793 = vld [vmem:[%s7 + $0x8] sm:$0xf]
        %v794 = vld [vmem:[%s7 + $0xc] sm:$0xf]
        %v795 = vpack.c.bf16 %v752, %v751
        %v796 = vld [vmem:[%s8] sm:$0x1]
        %v798 = vperm.slane %v796, 0
        %v804 = vunpack.c.l.b16 %v791
        %v805 = vunpack.c.l.b16 %v792
        %v806 = vunpack.c.l.b16 %v793
        %v807 = vunpack.c.l.b16 %v794
        %v808 = vpack.c.b16 %v805, %v804
        %v809 = vpack.c.b16 %v807, %v806
        %v813 = vsel %vm774, %v795, 0
        %815 = vmatpush.bf16.msra.mxu0 0
        %816 = vmatpush.bf16.msra.mxu0 0
        %817 = vmatpush.bf16.msra.mxu0 0
        %818 = vmatpush.bf16.msra.mxu0 0
        %819 = vmatpush.bf16.msra.mxu0 0
        %820 = vmatpush.bf16.msra.mxu0 0
        %821 = vmatpush.bf16.msra.mxu0 %v809
        %822 = vmatpush.bf16.msra.mxu0 %v808
        %823 = vmatmul.bf16.gmra.mxu0 %v813
        %v824 = vpop.f32.mrf.mxu0
        %v825 = vadd.f32 %v798, %v824
        %v826 = vpop.f32.mrf.mxu0
        %v827 = vadd.f32 %v798, %v826
        %828 = vdwg.mxu0
        %v829 = vld [vmem:[%s9] sm:$0xf]
        %v830 = vld [vmem:[%s9 + $0x4] sm:$0xf]
        %v831 = vld [vmem:[%s9 + $0x8] sm:$0xf]
        %v832 = vld [vmem:[%s9 + $0xc] sm:$0xf]
        %v833 = vpack.c.bf16 %v748, %v747
        %v834 = vld [vmem:[%s10] sm:$0x1]
        %v836 = vperm.slane %v834, 0
        %v842 = vunpack.c.l.b16 %v829
        %v843 = vunpack.c.l.b16 %v830
        %v844 = vunpack.c.l.b16 %v831
        %v845 = vunpack.c.l.b16 %v832
        %v846 = vpack.c.b16 %v843, %v842
        %v847 = vpack.c.b16 %v845, %v844
        %v851 = vsel %vm774, %v833, 0
        %853 = vmatpush.bf16.msra.mxu0 0
        %854 = vmatpush.bf16.msra.mxu0 0
        %855 = vmatpush.bf16.msra.mxu0 0
        %856 = vmatpush.bf16.msra.mxu0 0
        %857 = vmatpush.bf16.msra.mxu0 0
        %858 = vmatpush.bf16.msra.mxu0 0
        %859 = vmatpush.bf16.msra.mxu0 %v847
        %860 = vmatpush.bf16.msra.mxu0 %v846
        %861 = vmatmul.bf16.gmra.mxu0 %v851
        %v862 = vpop.f32.mrf.mxu0
        %v863 = vadd.f32 %v836, %v862
        %v864 = vpop.f32.mrf.mxu0
        %v865 = vadd.f32 %v836, %v864
        %866 = vdwg.mxu0
        %v867 = vld [vmem:[%s738] sm:$0x1]
        %vm868 = vcmp.gt.f32.partialorder %v867, 0.5
        %v869 = vld [vmem:[%s11] sm:$0x3]
        %v870 = vld [vmem:[%s12] sm:$0xf]
        %872 = vset.pattern.permute.xlu0 0
        %873 = vperm.xlu0 %872, %v870
        %v874 = vpop.permute.xlu0 %873
        %v877 = vsel %vm774, %v869, 0
        %879 = vmatpush.bf16.xpose.msra.mxu0 0
        %880 = vmatpush.bf16.xpose.msra.mxu0 0
        %881 = vmatpush.bf16.xpose.msra.mxu0 0
        %882 = vmatpush.bf16.xpose.msra.mxu0 0
        %883 = vmatpush.bf16.xpose.msra.mxu0 0
        %884 = vmatpush.bf16.xpose.msra.mxu0 0
        %885 = vmatpush.bf16.xpose.msra.mxu0 0
        %886 = vmatpush.bf16.xpose.msra.mxu0 %v813
        %887 = vmatmul.bf16.gmra.mxu0 %v877
        %v888 = vpop.f32.mrf.mxu0
        %v889 = vadd.f32 %v874, %v888
        %v890 = vpop.f32.mrf.mxu0
        %891 = vdwg.mxu0
        %v892 = vsel %vm868, 1, 0
        %v893 = vperm.slane %v892, 0
        %vm894 = vcmp.eq.s32.totalorder %v893, 1
        %v895 = vsel %vm894, %v889, -1e+30
        %vm896 = vcmask 125952
        %v897 = vsel %vm896, %v895, -inf
        %898 = vmax.xlane.f32.xlu0 %v897
        %v899 = vpop.xlane.xlu0 %898
        %v900 = vlaneseq
        %v901 = vand.u32 %v900, 127
        %vm902 = vcmp.eq.f32.partialorder %v895, %v899
        %v903 = vsel %vm902, %v901, 16
        %v904 = vsel %vm896, %v903, 2147483647
        %v905 = vand.u32 %v904, 65535
        %v906 = vshra.s32 %v904, 16
        %v907 = vcvt.s32.f32 %v905
        %v908 = vcvt.s32.f32 %v906
        %909 = vmin.xlane.f32.xlu0 %v908
        %v910 = vpop.xlane.xlu0 %909
        %vm911 = vcmp.eq.f32.partialorder %v908, %v910
        %v912 = vsel %vm911, %v907, inf
        %913 = vmin.xlane.f32.xlu0 %v912
        %v914 = vpop.xlane.xlu0 %913
        %v915 = vcvt.f32.s32 %v914
        %v916 = vcvt.f32.s32 %v910
        %v917 = vshll.u32 %v916, 16
        %v918 = vadd.s32 %v917, %v915
        %vm919 = vcmp.eq.s32.totalorder %v901, %v918
        %v920 = vsel %vm919, 1, 0
        %v921 = vcvt.s32.f32 %v920
        %v922 = vsel %vm896, %v921, 0.0
        %v923 = vrot.slane %v922, 4
        %v924 = vadd.f32 %v922, %v923
        %v925 = vrot.slane %v924, 2
        %v926 = vadd.f32 %v924, %v925
        %v927 = vrot.slane %v926, 1
        %v928 = vadd.f32 %v926, %v927
        %vm929 = vcmask 130048
        %v930 = vsel %vm929, %v928, 0.0
        %931 = vadd.xlane.f32.xlu0 %v930
        %v932 = vpop.xlane.xlu0 %931
        %v933 = vadd.f32 %v932, 1e-06
        %v934 = vrcp.pop %v933
        %v935 = vmul.f32 %v928, %v934
        %vm936 = vcmask 122880
        %937 = vst.msk [vmem:[%s717] sm:$0x1] %vm936, %v935
        %v938 = vlaneseq
        %v939 = vshrl.u32 %v938, 7
        %v940 = vcvt.s32.f32 %v939
        %v941 = vmul.f32 %v940, 0.14285715
        %v942 = vld [vmem:[%s15] sm:$0xf]
        %v943 = vld [vmem:[%s15 + $0x4] sm:$0xf]
        %v944 = vld [vmem:[%s15 + $0x8] sm:$0xf]
        %v945 = vld [vmem:[%s15 + $0xc] sm:$0xf]
        %v946 = vld [vmem:[%s13] sm:$0x1]
        %v947 = vld [vmem:[%s14] sm:$0x3]
        %v948 = vmul.f32 %v788, 0.35355338
        %v949 = vpack.c.bf16 %v948, %v948
        %v950 = vpack.c.bf16 %v827, %v825
        %vm951 = vcmask 64512
        %v953 = vsel %vm951, %v949, 0
        %v956 = vsel %vm951, %v950, 0
        %958 = vmatpush.bf16.xpose.msra.mxu0 0
        %959 = vmatpush.bf16.xpose.msra.mxu0 0
        %960 = vmatpush.bf16.xpose.msra.mxu0 0
        %961 = vmatpush.bf16.xpose.msra.mxu0 0
        %962 = vmatpush.bf16.xpose.msra.mxu0 0
        %963 = vmatpush.bf16.xpose.msra.mxu0 0
        %964 = vmatpush.bf16.xpose.msra.mxu0 0
        %965 = vmatpush.bf16.xpose.msra.mxu0 %v956
        %966 = vmatmul.bf16.gmra.mxu0 %v953
        %v967 = vpop.f32.mrf.mxu0
        %v968 = vadd.f32 0.0, %v967
        %v969 = vpop.f32.mrf.mxu0
        %970 = vdwg.mxu0
        %v971 = vsel %vm894, %v968, -1e+30
        %v972 = vsel %vm929, %v971, -inf
        %973 = vmax.xlane.f32.xlu0 %v972
        %v974 = vpop.xlane.xlu0 %973
        %v975 = vsub.f32 %v971, %v974
        %v976 = vmul.f32 %v975, 1.442695
        %v977 = vpow.pop %v976
        %v978 = vsel %vm929, %v977, 0.0
        %979 = vadd.xlane.f32.xlu0 %v978
        %v980 = vpop.xlane.xlu0 %979
        %v981 = vrcp.pop %v980
        %v982 = vmul.f32 %v977, %v981
        %v983 = vmul.f32 %v982, %v935
        %v984 = vsel %vm929, %v983, 0.0
        %985 = vadd.xlane.f32.xlu0 %v984
        %v986 = vpop.xlane.xlu0 %985
        %v987 = vpack.c.bf16 %v986, %v986
        %v989 = vsel %vm951, %v946, 0
        %vm991 = vcmask 1043456
        %v993 = vsel %vm991, %v987, 0
        %995 = vmatpush.bf16.msra.mxu0 0
        %996 = vmatpush.bf16.msra.mxu0 0
        %997 = vmatpush.bf16.msra.mxu0 0
        %998 = vmatpush.bf16.msra.mxu0 0
        %999 = vmatpush.bf16.msra.mxu0 0
        %1000 = vmatpush.bf16.msra.mxu0 0
        %1001 = vmatpush.bf16.msra.mxu0 0
        %1002 = vmatpush.bf16.msra.mxu0 %v993
        %1003 = vmatmul.bf16.gmra.mxu0 %v989
        %v1004 = vpop.f32.mrf.mxu0
        %v1005 = vadd.f32 %v947, %v1004
        %v1006 = vpop.f32.mrf.mxu0
        %1007 = vdwg.mxu0
        %v1008 = vxor.u32 %v1005, 2147483648
        %v1009 = vmul.f32 %v1008, 1.442695
        %v1010 = vpow.pop %v1009
        %v1011 = vadd.f32 %v1010, 1.0
        %v1012 = vrcp.pop %v1011
        %v1013 = vmul.f32 %v1011, %v1012
        %v1014 = vsub.f32 1.0, %v1013
        %v1015 = vmul.f32 %v1012, %v1014
        %v1016 = vadd.f32 %v1012, %v1015
        %vm1017 = vweird.f32 %v1011
        %vm1018 = vweird.f32 %v1012
        %vm1019 = vmor %vm1017, %vm1018
        %v1020 = vsel %vm1019, %v1012, %v1016
        %v1021 = vand.u32 2147483647, %v1011
        %vm1022 = vcmp.eq.f32.partialorder %v1021, 8.507059e+37
        %v1023 = vand.u32 %v1011, 2147483648
        %v1024 = vor.u32 1.1754944e-38, %v1023
        %v1025 = vsel %vm1022, %v1024, %v1020
        %v1026 = vmul.f32 1.0, %v1025
        %v1027 = vmax.f32 %v1026, 0.01
        %v1028 = vmul.f32 %v1027, 0.11111111
        %v1029 = vrcp.pop %v1028
        %v1030 = vperm.slane %v1026, 0
        %v1031 = vsub.f32 %v941, %v1030
        %v1032 = vmul.f32 %v1029, 0.3989423
        %v1033 = vmul.f32 %v1031, %v1031
        %v1034 = vsub.f32 0.0, %v1033
        %v1035 = vmul.f32 %v1029, 0.5
        %v1036 = vmul.f32 %v1035, %v1029
        %v1037 = vperm.slane %v1036, 1
        %v1038 = vmul.f32 %v1034, %v1037
        %v1039 = vmul.f32 %v1038, 1.442695
        %v1040 = vpow.pop %v1039
        %v1041 = vperm.slane %v1032, 1
        %v1042 = vmul.f32 %v1041, %v1040
        %vm1043 = vcmask 7168
        %v1044 = vsel %vm1043, %v1042, -inf
        %v1045 = vrot.slane %v1044, 4
        %v1046 = vmax.f32 %v1044, %v1045
        %v1047 = vrot.slane %v1046, 2
        %v1048 = vmax.f32 %v1046, %v1047
        %v1049 = vrot.slane %v1048, 1
        %v1050 = vmax.f32 %v1048, %v1049
        %v1051 = vrcp.pop %v1050
        %v1052 = vmul.f32 %v1042, %v1051
        %v1053 = vsel %vm1043, %v1052, -inf
        %v1054 = vrot.slane %v1053, 4
        %v1055 = vmax.f32 %v1053, %v1054
        %v1056 = vrot.slane %v1055, 2
        %v1057 = vmax.f32 %v1055, %v1056
        %v1058 = vrot.slane %v1057, 1
        %v1059 = vmax.f32 %v1057, %v1058
        %v1060 = vsub.f32 %v1052, %v1059
        %v1061 = vmul.f32 %v1060, 1.442695
        %v1062 = vpow.pop %v1061
        %v1063 = vsel %vm1043, %v1062, 0.0
        %v1064 = vrot.slane %v1063, 4
        %v1065 = vadd.f32 %v1063, %v1064
        %v1066 = vrot.slane %v1065, 2
        %v1067 = vadd.f32 %v1065, %v1066
        %v1068 = vrot.slane %v1067, 1
        %v1069 = vadd.f32 %v1067, %v1068
        %v1070 = vrcp.pop %v1069
        %v1071 = vmul.f32 %v1062, %v1070
        %v1072 = vadd.f32 %v1071, 1e-10
        %1074 = vset.pattern.permute.xlu0 0
        %1075 = vperm.xlu0 %1074, %v1072
        %v1076 = vpop.permute.xlu0 %1075
        %v1078 = vmul.f32 %v982, %v1076
        %v1079 = vsel %vm929, %v1078, 0.0
        %1080 = vadd.xlane.f32.xlu0 %v1079
        %v1081 = vpop.xlane.xlu0 %1080
        %v1082 = vrcp.pop %v1081
        %v1083 = vmul.f32 %v1078, %v1082
        %v1084 = vadd.f32 %v1083, 0.0
        %v1085 = vpack.c.bf16 %v1083, %v1083
        %v1086 = vpack.c.bf16 %v865, %v863
        %v1088 = vsel %vm929, %v1085, 0
        %1090 = vmatpush.bf16.msra.mxu0 0
        %1091 = vmatpush.bf16.msra.mxu0 0
        %1092 = vmatpush.bf16.msra.mxu0 0
        %1093 = vmatpush.bf16.msra.mxu0 0
        %1094 = vmatpush.bf16.msra.mxu0 0
        %1095 = vmatpush.bf16.msra.mxu0 0
        %1096 = vmatpush.bf16.msra.mxu0 0
        %1097 = vmatpush.bf16.msra.mxu0 %v1086
        %1098 = vmatmul.bf16.gmra.mxu0 %v1088
        %v1099 = vpop.f32.mrf.mxu0
        %v1100 = vadd.f32 0.0, %v1099
        %v1101 = vpop.f32.mrf.mxu0
        %1102 = vdwg.mxu0
        %v1103 = vpack.c.bf16 %v1100, %v1100
        %1105 = vrot.lane.b32.xlu0 %v949, 120
        %v1106 = vpop.permute.xlu0 %1105
        %1108 = vrot.lane.b32.xlu0 %v950, 120
        %v1109 = vpop.permute.xlu0 %1108
        %v1111 = vsel %vm951, %v1106, 0
        %v1114 = vsel %vm951, %v1109, 0
        %1116 = vmatpush.bf16.xpose.msra.mxu0 0
        %1117 = vmatpush.bf16.xpose.msra.mxu0 0
        %1118 = vmatpush.bf16.xpose.msra.mxu0 0
        %1119 = vmatpush.bf16.xpose.msra.mxu0 0
        %1120 = vmatpush.bf16.xpose.msra.mxu0 0
        %1121 = vmatpush.bf16.xpose.msra.mxu0 0
        %1122 = vmatpush.bf16.xpose.msra.mxu0 0
        %1123 = vmatpush.bf16.xpose.msra.mxu0 %v1114
        %1124 = vmatmul.bf16.gmra.mxu0 %v1111
        %v1125 = vpop.f32.mrf.mxu0
        %v1126 = vadd.f32 0.0, %v1125
        %v1127 = vpop.f32.mrf.mxu0
        %1128 = vdwg.mxu0
        %v1129 = vsel %vm894, %v1126, -1e+30
        %v1130 = vsel %vm929, %v1129, -inf
        %1131 = vmax.xlane.f32.xlu0 %v1130
        %v1132 = vpop.xlane.xlu0 %1131
        %v1133 = vsub.f32 %v1129, %v1132
        %v1134 = vmul.f32 %v1133, 1.442695
        %v1135 = vpow.pop %v1134
        %v1136 = vsel %vm929, %v1135, 0.0
        %1137 = vadd.xlane.f32.xlu0 %v1136
        %v1138 = vpop.xlane.xlu0 %1137
        %v1139 = vrcp.pop %v1138
        %v1140 = vmul.f32 %v1135, %v1139
        %v1141 = vmul.f32 %v1140, %v935
        %v1142 = vsel %vm929, %v1141, 0.0
        %1143 = vadd.xlane.f32.xlu0 %v1142
        %v1144 = vpop.xlane.xlu0 %1143
        %v1145 = vpack.c.bf16 %v1144, %v1144
        %v1147 = vsel %vm991, %v1145, 0
        %1149 = vmatpush.bf16.msra.mxu0 0
        %1150 = vmatpush.bf16.msra.mxu0 0
        %1151 = vmatpush.bf16.msra.mxu0 0
        %1152 = vmatpush.bf16.msra.mxu0 0
        %1153 = vmatpush.bf16.msra.mxu0 0
        %1154 = vmatpush.bf16.msra.mxu0 0
        %1155 = vmatpush.bf16.msra.mxu0 0
        %1156 = vmatpush.bf16.msra.mxu0 %v1147
        %1157 = vmatmul.bf16.gmra.mxu0 %v989
        %v1158 = vpop.f32.mrf.mxu0
        %v1159 = vadd.f32 %v947, %v1158
        %v1160 = vpop.f32.mrf.mxu0
        %1161 = vdwg.mxu0
        %v1162 = vxor.u32 %v1159, 2147483648
        %v1163 = vmul.f32 %v1162, 1.442695
        %v1164 = vpow.pop %v1163
        %v1165 = vadd.f32 %v1164, 1.0
        %v1166 = vrcp.pop %v1165
        %v1167 = vmul.f32 %v1165, %v1166
        %v1168 = vsub.f32 1.0, %v1167
        %v1169 = vmul.f32 %v1166, %v1168
        %v1170 = vadd.f32 %v1166, %v1169
        %vm1171 = vweird.f32 %v1165
        %vm1172 = vweird.f32 %v1166
        %vm1173 = vmor %vm1171, %vm1172
        %v1174 = vsel %vm1173, %v1166, %v1170
        %v1175 = vand.u32 2147483647, %v1165
        %vm1176 = vcmp.eq.f32.partialorder %v1175, 8.507059e+37
        %v1177 = vand.u32 %v1165, 2147483648
        %v1178 = vor.u32 1.1754944e-38, %v1177
        %v1179 = vsel %vm1176, %v1178, %v1174
        %v1180 = vmul.f32 1.0, %v1179
        %v1181 = vmax.f32 %v1180, 0.01
        %v1182 = vmul.f32 %v1181, 0.11111111
        %v1183 = vrcp.pop %v1182
        %v1184 = vperm.slane %v1180, 0
        %v1185 = vsub.f32 %v941, %v1184
        %v1186 = vmul.f32 %v1183, 0.3989423
        %v1187 = vmul.f32 %v1185, %v1185
        %v1188 = vsub.f32 0.0, %v1187
        %v1189 = vmul.f32 %v1183, 0.5
        %v1190 = vmul.f32 %v1189, %v1183
        %v1191 = vperm.slane %v1190, 1
        %v1192 = vmul.f32 %v1188, %v1191
        %v1193 = vmul.f32 %v1192, 1.442695
        %v1194 = vpow.pop %v1193
        %v1195 = vperm.slane %v1186, 1
        %v1196 = vmul.f32 %v1195, %v1194
        %v1197 = vsel %vm1043, %v1196, -inf
        %v1198 = vrot.slane %v1197, 4
        %v1199 = vmax.f32 %v1197, %v1198
        %v1200 = vrot.slane %v1199, 2
        %v1201 = vmax.f32 %v1199, %v1200
        %v1202 = vrot.slane %v1201, 1
        %v1203 = vmax.f32 %v1201, %v1202
        %v1204 = vrcp.pop %v1203
        %v1205 = vmul.f32 %v1196, %v1204
        %v1206 = vsel %vm1043, %v1205, -inf
        %v1207 = vrot.slane %v1206, 4
        %v1208 = vmax.f32 %v1206, %v1207
        %v1209 = vrot.slane %v1208, 2
        %v1210 = vmax.f32 %v1208, %v1209
        %v1211 = vrot.slane %v1210, 1
        %v1212 = vmax.f32 %v1210, %v1211
        %v1213 = vsub.f32 %v1205, %v1212
        %v1214 = vmul.f32 %v1213, 1.442695
        %v1215 = vpow.pop %v1214
        %v1216 = vsel %vm1043, %v1215, 0.0
        %v1217 = vrot.slane %v1216, 4
        %v1218 = vadd.f32 %v1216, %v1217
        %v1219 = vrot.slane %v1218, 2
        %v1220 = vadd.f32 %v1218, %v1219
        %v1221 = vrot.slane %v1220, 1
        %v1222 = vadd.f32 %v1220, %v1221
        %v1223 = vrcp.pop %v1222
        %v1224 = vmul.f32 %v1215, %v1223
        %v1225 = vadd.f32 %v1224, 1e-10
        %1227 = vset.pattern.permute.xlu0 0
        %1228 = vperm.xlu0 %1227, %v1225
        %v1229 = vpop.permute.xlu0 %1228
        %v1231 = vmul.f32 %v1140, %v1229
        %v1232 = vsel %vm929, %v1231, 0.0
        %1233 = vadd.xlane.f32.xlu0 %v1232
        %v1234 = vpop.xlane.xlu0 %1233
        %v1235 = vrcp.pop %v1234
        %v1236 = vmul.f32 %v1231, %v1235
        %v1237 = vadd.f32 %v1084, %v1236
        %v1238 = vpack.c.bf16 %v1236, %v1236
        %1240 = vrot.lane.b32.xlu0 %v1086, 120
        %v1241 = vpop.permute.xlu0 %1240
        %v1244 = vsel %vm929, %v1238, 0
        %1246 = vmatpush.bf16.msra.mxu0 0
        %1247 = vmatpush.bf16.msra.mxu0 0
        %1248 = vmatpush.bf16.msra.mxu0 0
        %1249 = vmatpush.bf16.msra.mxu0 0
        %1250 = vmatpush.bf16.msra.mxu0 0
        %1251 = vmatpush.bf16.msra.mxu0 0
        %1252 = vmatpush.bf16.msra.mxu0 0
        %1253 = vmatpush.bf16.msra.mxu0 %v1241
        %1254 = vmatmul.bf16.gmra.mxu0 %v1244
        %v1255 = vpop.f32.mrf.mxu0
        %v1256 = vadd.f32 0.0, %v1255
        %v1257 = vpop.f32.mrf.mxu0
        %1258 = vdwg.mxu0
        %v1259 = vpack.c.bf16 %v1256, %v1256
        %v1261 = vsel %vm951, %v1259, 0
        %v1264 = vsel %vm991, %v943, 0
        %1266 = vmatpush.bf16.msra.mxu0 0
        %1267 = vmatpush.bf16.msra.mxu0 0
        %1268 = vmatpush.bf16.msra.mxu0 0
        %1269 = vmatpush.bf16.msra.mxu0 0
        %1270 = vmatpush.bf16.msra.mxu0 0
        %1271 = vmatpush.bf16.msra.mxu0 0
        %1272 = vmatpush.bf16.msra.mxu0 0
        %1273 = vmatpush.bf16.msra.mxu0 %v1264
        %1274 = vmatmul.bf16.gmra.mxu0 %v1261
        %v1275 = vpop.f32.mrf.mxu0
        %v1276 = vadd.f32 0.0, %v1275
        %v1277 = vpop.f32.mrf.mxu0
        %1278 = vdwg.mxu0
        %v1280 = vsel %vm951, %v1103, 0
        %v1283 = vsel %vm991, %v942, 0
        %1285 = vmatpush.bf16.msra.mxu0 0
        %1286 = vmatpush.bf16.msra.mxu0 0
        %1287 = vmatpush.bf16.msra.mxu0 0
        %1288 = vmatpush.bf16.msra.mxu0 0
        %1289 = vmatpush.bf16.msra.mxu0 0
        %1290 = vmatpush.bf16.msra.mxu0 0
        %1291 = vmatpush.bf16.msra.mxu0 0
        %1292 = vmatpush.bf16.msra.mxu0 %v1283
        %1293 = vmatmul.bf16.gmra.mxu0 %v1280
        %v1294 = vpop.f32.mrf.mxu0
        %v1295 = vadd.f32 %v1276, %v1294
        %v1296 = vpop.f32.mrf.mxu0
        %1297 = vdwg.mxu0
        %1298 = vrot.lane.b32.xlu0 %v949, 112
        %v1299 = vpop.permute.xlu0 %1298
        %1300 = vrot.lane.b32.xlu0 %v950, 112
        %v1301 = vpop.permute.xlu0 %1300
        %v1303 = vsel %vm951, %v1299, 0
        %v1306 = vsel %vm951, %v1301, 0
        %1308 = vmatpush.bf16.xpose.msra.mxu0 0
        %1309 = vmatpush.bf16.xpose.msra.mxu0 0
        %1310 = vmatpush.bf16.xpose.msra.mxu0 0
        %1311 = vmatpush.bf16.xpose.msra.mxu0 0
        %1312 = vmatpush.bf16.xpose.msra.mxu0 0
        %1313 = vmatpush.bf16.xpose.msra.mxu0 0
        %1314 = vmatpush.bf16.xpose.msra.mxu0 0
        %1315 = vmatpush.bf16.xpose.msra.mxu0 %v1306
        %1316 = vmatmul.bf16.gmra.mxu0 %v1303
        %v1317 = vpop.f32.mrf.mxu0
        %v1318 = vadd.f32 0.0, %v1317
        %v1319 = vpop.f32.mrf.mxu0
        %1320 = vdwg.mxu0
        %v1321 = vsel %vm894, %v1318, -1e+30
        %v1322 = vsel %vm929, %v1321, -inf
        %1323 = vmax.xlane.f32.xlu0 %v1322
        %v1324 = vpop.xlane.xlu0 %1323
        %v1325 = vsub.f32 %v1321, %v1324
        %v1326 = vmul.f32 %v1325, 1.442695
        %v1327 = vpow.pop %v1326
        %v1328 = vsel %vm929, %v1327, 0.0
        %1329 = vadd.xlane.f32.xlu0 %v1328
        %v1330 = vpop.xlane.xlu0 %1329
        %v1331 = vrcp.pop %v1330
        %v1332 = vmul.f32 %v1327, %v1331
        %v1333 = vmul.f32 %v1332, %v935
        %v1334 = vsel %vm929, %v1333, 0.0
        %1335 = vadd.xlane.f32.xlu0 %v1334
        %v1336 = vpop.xlane.xlu0 %1335
        %v1337 = vpack.c.bf16 %v1336, %v1336
        %v1339 = vsel %vm991, %v1337, 0
        %1341 = vmatpush.bf16.msra.mxu0 0
        %1342 = vmatpush.bf16.msra.mxu0 0
        %1343 = vmatpush.bf16.msra.mxu0 0
        %1344 = vmatpush.bf16.msra.mxu0 0
        %1345 = vmatpush.bf16.msra.mxu0 0
        %1346 = vmatpush.bf16.msra.mxu0 0
        %1347 = vmatpush.bf16.msra.mxu0 0
        %1348 = vmatpush.bf16.msra.mxu0 %v1339
        %1349 = vmatmul.bf16.gmra.mxu0 %v989
        %v1350 = vpop.f32.mrf.mxu0
        %v1351 = vadd.f32 %v947, %v1350
        %v1352 = vpop.f32.mrf.mxu0
        %1353 = vdwg.mxu0
        %v1354 = vxor.u32 %v1351, 2147483648
        %v1355 = vmul.f32 %v1354, 1.442695
        %v1356 = vpow.pop %v1355
        %v1357 = vadd.f32 %v1356, 1.0
        %v1358 = vrcp.pop %v1357
        %v1359 = vmul.f32 %v1357, %v1358
        %v1360 = vsub.f32 1.0, %v1359
        %v1361 = vmul.f32 %v1358, %v1360
        %v1362 = vadd.f32 %v1358, %v1361
        %vm1363 = vweird.f32 %v1357
        %vm1364 = vweird.f32 %v1358
        %vm1365 = vmor %vm1363, %vm1364
        %v1366 = vsel %vm1365, %v1358, %v1362
        %v1367 = vand.u32 2147483647, %v1357
        %vm1368 = vcmp.eq.f32.partialorder %v1367, 8.507059e+37
        %v1369 = vand.u32 %v1357, 2147483648
        %v1370 = vor.u32 1.1754944e-38, %v1369
        %v1371 = vsel %vm1368, %v1370, %v1366
        %v1372 = vmul.f32 1.0, %v1371
        %v1373 = vmax.f32 %v1372, 0.01
        %v1374 = vmul.f32 %v1373, 0.11111111
        %v1375 = vrcp.pop %v1374
        %v1376 = vperm.slane %v1372, 0
        %v1377 = vsub.f32 %v941, %v1376
        %v1378 = vmul.f32 %v1375, 0.3989423
        %v1379 = vmul.f32 %v1377, %v1377
        %v1380 = vsub.f32 0.0, %v1379
        %v1381 = vmul.f32 %v1375, 0.5
        %v1382 = vmul.f32 %v1381, %v1375
        %v1383 = vperm.slane %v1382, 1
        %v1384 = vmul.f32 %v1380, %v1383
        %v1385 = vmul.f32 %v1384, 1.442695
        %v1386 = vpow.pop %v1385
        %v1387 = vperm.slane %v1378, 1
        %v1388 = vmul.f32 %v1387, %v1386
        %v1389 = vsel %vm1043, %v1388, -inf
        %v1390 = vrot.slane %v1389, 4
        %v1391 = vmax.f32 %v1389, %v1390
        %v1392 = vrot.slane %v1391, 2
        %v1393 = vmax.f32 %v1391, %v1392
        %v1394 = vrot.slane %v1393, 1
        %v1395 = vmax.f32 %v1393, %v1394
        %v1396 = vrcp.pop %v1395
        %v1397 = vmul.f32 %v1388, %v1396
        %v1398 = vsel %vm1043, %v1397, -inf
        %v1399 = vrot.slane %v1398, 4
        %v1400 = vmax.f32 %v1398, %v1399
        %v1401 = vrot.slane %v1400, 2
        %v1402 = vmax.f32 %v1400, %v1401
        %v1403 = vrot.slane %v1402, 1
        %v1404 = vmax.f32 %v1402, %v1403
        %v1405 = vsub.f32 %v1397, %v1404
        %v1406 = vmul.f32 %v1405, 1.442695
        %v1407 = vpow.pop %v1406
        %v1408 = vsel %vm1043, %v1407, 0.0
        %v1409 = vrot.slane %v1408, 4
        %v1410 = vadd.f32 %v1408, %v1409
        %v1411 = vrot.slane %v1410, 2
        %v1412 = vadd.f32 %v1410, %v1411
        %v1413 = vrot.slane %v1412, 1
        %v1414 = vadd.f32 %v1412, %v1413
        %v1415 = vrcp.pop %v1414
        %v1416 = vmul.f32 %v1407, %v1415
        %v1417 = vadd.f32 %v1416, 1e-10
        %1419 = vset.pattern.permute.xlu0 0
        %1420 = vperm.xlu0 %1419, %v1417
        %v1421 = vpop.permute.xlu0 %1420
        %v1423 = vmul.f32 %v1332, %v1421
        %v1424 = vsel %vm929, %v1423, 0.0
        %1425 = vadd.xlane.f32.xlu0 %v1424
        %v1426 = vpop.xlane.xlu0 %1425
        %v1427 = vrcp.pop %v1426
        %v1428 = vmul.f32 %v1423, %v1427
        %v1429 = vadd.f32 %v1237, %v1428
        %v1430 = vpack.c.bf16 %v1428, %v1428
        %1431 = vrot.lane.b32.xlu0 %v1086, 112
        %v1432 = vpop.permute.xlu0 %1431
        %v1435 = vsel %vm929, %v1430, 0
        %1437 = vmatpush.bf16.msra.mxu0 0
        %1438 = vmatpush.bf16.msra.mxu0 0
        %1439 = vmatpush.bf16.msra.mxu0 0
        %1440 = vmatpush.bf16.msra.mxu0 0
        %1441 = vmatpush.bf16.msra.mxu0 0
        %1442 = vmatpush.bf16.msra.mxu0 0
        %1443 = vmatpush.bf16.msra.mxu0 0
        %1444 = vmatpush.bf16.msra.mxu0 %v1432
        %1445 = vmatmul.bf16.gmra.mxu0 %v1435
        %v1446 = vpop.f32.mrf.mxu0
        %v1447 = vadd.f32 0.0, %v1446
        %v1448 = vpop.f32.mrf.mxu0
        %1449 = vdwg.mxu0
        %v1450 = vpack.c.bf16 %v1447, %v1447
        %v1452 = vsel %vm951, %v1450, 0
        %v1455 = vsel %vm991, %v944, 0
        %1457 = vmatpush.bf16.msra.mxu0 0
        %1458 = vmatpush.bf16.msra.mxu0 0
        %1459 = vmatpush.bf16.msra.mxu0 0
        %1460 = vmatpush.bf16.msra.mxu0 0
        %1461 = vmatpush.bf16.msra.mxu0 0
        %1462 = vmatpush.bf16.msra.mxu0 0
        %1463 = vmatpush.bf16.msra.mxu0 0
        %1464 = vmatpush.bf16.msra.mxu0 %v1455
        %1465 = vmatmul.bf16.gmra.mxu0 %v1452
        %v1466 = vpop.f32.mrf.mxu0
        %v1467 = vadd.f32 0.0, %v1466
        %v1468 = vpop.f32.mrf.mxu0
        %1469 = vdwg.mxu0
        %v1470 = vadd.f32 %v1295, %v1467
        %1471 = vrot.lane.b32.xlu0 %v949, 104
        %v1472 = vpop.permute.xlu0 %1471
        %1473 = vrot.lane.b32.xlu0 %v950, 104
        %v1474 = vpop.permute.xlu0 %1473
        %v1476 = vsel %vm951, %v1472, 0
        %v1479 = vsel %vm951, %v1474, 0
        %1481 = vmatpush.bf16.xpose.msra.mxu0 0
        %1482 = vmatpush.bf16.xpose.msra.mxu0 0
        %1483 = vmatpush.bf16.xpose.msra.mxu0 0
        %1484 = vmatpush.bf16.xpose.msra.mxu0 0
        %1485 = vmatpush.bf16.xpose.msra.mxu0 0
        %1486 = vmatpush.bf16.xpose.msra.mxu0 0
        %1487 = vmatpush.bf16.xpose.msra.mxu0 0
        %1488 = vmatpush.bf16.xpose.msra.mxu0 %v1479
        %1489 = vmatmul.bf16.gmra.mxu0 %v1476
        %v1490 = vpop.f32.mrf.mxu0
        %v1491 = vadd.f32 0.0, %v1490
        %v1492 = vpop.f32.mrf.mxu0
        %1493 = vdwg.mxu0
        %v1494 = vsel %vm894, %v1491, -1e+30
        %v1495 = vsel %vm929, %v1494, -inf
        %1496 = vmax.xlane.f32.xlu0 %v1495
        %v1497 = vpop.xlane.xlu0 %1496
        %v1498 = vsub.f32 %v1494, %v1497
        %v1499 = vmul.f32 %v1498, 1.442695
        %v1500 = vpow.pop %v1499
        %v1501 = vsel %vm929, %v1500, 0.0
        %1502 = vadd.xlane.f32.xlu0 %v1501
        %v1503 = vpop.xlane.xlu0 %1502
        %v1504 = vrcp.pop %v1503
        %v1505 = vmul.f32 %v1500, %v1504
        %v1506 = vmul.f32 %v1505, %v935
        %v1507 = vsel %vm929, %v1506, 0.0
        %1508 = vadd.xlane.f32.xlu0 %v1507
        %v1509 = vpop.xlane.xlu0 %1508
        %v1510 = vpack.c.bf16 %v1509, %v1509
        %v1512 = vsel %vm991, %v1510, 0
        %1514 = vmatpush.bf16.msra.mxu0 0
        %1515 = vmatpush.bf16.msra.mxu0 0
        %1516 = vmatpush.bf16.msra.mxu0 0
        %1517 = vmatpush.bf16.msra.mxu0 0
        %1518 = vmatpush.bf16.msra.mxu0 0
        %1519 = vmatpush.bf16.msra.mxu0 0
        %1520 = vmatpush.bf16.msra.mxu0 0
        %1521 = vmatpush.bf16.msra.mxu0 %v1512
        %1522 = vmatmul.bf16.gmra.mxu0 %v989
        %v1523 = vpop.f32.mrf.mxu0
        %v1524 = vadd.f32 %v947, %v1523
        %v1525 = vpop.f32.mrf.mxu0
        %1526 = vdwg.mxu0
        %v1527 = vxor.u32 %v1524, 2147483648
        %v1528 = vmul.f32 %v1527, 1.442695
        %v1529 = vpow.pop %v1528
        %v1530 = vadd.f32 %v1529, 1.0
        %v1531 = vrcp.pop %v1530
        %v1532 = vmul.f32 %v1530, %v1531
        %v1533 = vsub.f32 1.0, %v1532
        %v1534 = vmul.f32 %v1531, %v1533
        %v1535 = vadd.f32 %v1531, %v1534
        %vm1536 = vweird.f32 %v1530
        %vm1537 = vweird.f32 %v1531
        %vm1538 = vmor %vm1536, %vm1537
        %v1539 = vsel %vm1538, %v1531, %v1535
        %v1540 = vand.u32 2147483647, %v1530
        %vm1541 = vcmp.eq.f32.partialorder %v1540, 8.507059e+37
        %v1542 = vand.u32 %v1530, 2147483648
        %v1543 = vor.u32 1.1754944e-38, %v1542
        %v1544 = vsel %vm1541, %v1543, %v1539
        %v1545 = vmul.f32 1.0, %v1544
        %v1546 = vmax.f32 %v1545, 0.01
        %v1547 = vmul.f32 %v1546, 0.11111111
        %v1548 = vrcp.pop %v1547
        %v1549 = vperm.slane %v1545, 0
        %v1550 = vsub.f32 %v941, %v1549
        %v1551 = vmul.f32 %v1548, 0.3989423
        %v1552 = vmul.f32 %v1550, %v1550
        %v1553 = vsub.f32 0.0, %v1552
        %v1554 = vmul.f32 %v1548, 0.5
        %v1555 = vmul.f32 %v1554, %v1548
        %v1556 = vperm.slane %v1555, 1
        %v1557 = vmul.f32 %v1553, %v1556
        %v1558 = vmul.f32 %v1557, 1.442695
        %v1559 = vpow.pop %v1558
        %v1560 = vperm.slane %v1551, 1
        %v1561 = vmul.f32 %v1560, %v1559
        %v1562 = vsel %vm1043, %v1561, -inf
        %v1563 = vrot.slane %v1562, 4
        %v1564 = vmax.f32 %v1562, %v1563
        %v1565 = vrot.slane %v1564, 2
        %v1566 = vmax.f32 %v1564, %v1565
        %v1567 = vrot.slane %v1566, 1
        %v1568 = vmax.f32 %v1566, %v1567
        %v1569 = vrcp.pop %v1568
        %v1570 = vmul.f32 %v1561, %v1569
        %v1571 = vsel %vm1043, %v1570, -inf
        %v1572 = vrot.slane %v1571, 4
        %v1573 = vmax.f32 %v1571, %v1572
        %v1574 = vrot.slane %v1573, 2
        %v1575 = vmax.f32 %v1573, %v1574
        %v1576 = vrot.slane %v1575, 1
        %v1577 = vmax.f32 %v1575, %v1576
        %v1578 = vsub.f32 %v1570, %v1577
        %v1579 = vmul.f32 %v1578, 1.442695
        %v1580 = vpow.pop %v1579
        %v1581 = vsel %vm1043, %v1580, 0.0
        %v1582 = vrot.slane %v1581, 4
        %v1583 = vadd.f32 %v1581, %v1582
        %v1584 = vrot.slane %v1583, 2
        %v1585 = vadd.f32 %v1583, %v1584
        %v1586 = vrot.slane %v1585, 1
        %v1587 = vadd.f32 %v1585, %v1586
        %v1588 = vrcp.pop %v1587
        %v1589 = vmul.f32 %v1580, %v1588
        %v1590 = vadd.f32 %v1589, 1e-10
        %1592 = vset.pattern.permute.xlu0 0
        %1593 = vperm.xlu0 %1592, %v1590
        %v1594 = vpop.permute.xlu0 %1593
        %v1596 = vmul.f32 %v1505, %v1594
        %v1597 = vsel %vm929, %v1596, 0.0
        %1598 = vadd.xlane.f32.xlu0 %v1597
        %v1599 = vpop.xlane.xlu0 %1598
        %v1600 = vrcp.pop %v1599
        %v1601 = vmul.f32 %v1596, %v1600
        %v1602 = vadd.f32 %v1429, %v1601
        %v1603 = vpack.c.bf16 %v1601, %v1601
        %1604 = vrot.lane.b32.xlu0 %v1086, 104
        %v1605 = vpop.permute.xlu0 %1604
        %v1608 = vsel %vm929, %v1603, 0
        %1610 = vmatpush.bf16.msra.mxu0 0
        %1611 = vmatpush.bf16.msra.mxu0 0
        %1612 = vmatpush.bf16.msra.mxu0 0
        %1613 = vmatpush.bf16.msra.mxu0 0
        %1614 = vmatpush.bf16.msra.mxu0 0
        %1615 = vmatpush.bf16.msra.mxu0 0
        %1616 = vmatpush.bf16.msra.mxu0 0
        %1617 = vmatpush.bf16.msra.mxu0 %v1605
        %1618 = vmatmul.bf16.gmra.mxu0 %v1608
        %v1619 = vpop.f32.mrf.mxu0
        %v1620 = vadd.f32 0.0, %v1619
        %v1621 = vpop.f32.mrf.mxu0
        %1622 = vdwg.mxu0
        %v1623 = vpack.c.bf16 %v1620, %v1620
        %v1625 = vsel %vm951, %v1623, 0
        %v1628 = vsel %vm991, %v945, 0
        %1630 = vmatpush.bf16.msra.mxu0 0
        %1631 = vmatpush.bf16.msra.mxu0 0
        %1632 = vmatpush.bf16.msra.mxu0 0
        %1633 = vmatpush.bf16.msra.mxu0 0
        %1634 = vmatpush.bf16.msra.mxu0 0
        %1635 = vmatpush.bf16.msra.mxu0 0
        %1636 = vmatpush.bf16.msra.mxu0 0
        %1637 = vmatpush.bf16.msra.mxu0 %v1628
        %1638 = vmatmul.bf16.gmra.mxu0 %v1625
        %v1639 = vpop.f32.mrf.mxu0
        %v1640 = vadd.f32 0.0, %v1639
        %v1641 = vpop.f32.mrf.mxu0
        %1642 = vdwg.mxu0
        %v1643 = vadd.f32 %v1470, %v1640
        %v1644 = vld [vmem:[%s16] sm:$0x1]
        %v1646 = vperm.slane %v1644, 0
        %v1648 = vadd.f32 %v1643, %v1646
        %v1649 = vmul.f32 %v1602, 0.25
        %1650 = vst.msk [vmem:[%s711] sm:$0xff] %vm929, %v1649
        %v1651 = vadd.f32 %v744, %v1648
        %v1652 = vld [vmem:[%s17] sm:$0x1]
        %v1653 = vld [vmem:[%s18] sm:$0x1]
        %v1654 = vsel %vm774, %v1651, 0.0
        %1655 = vadd.xlane.f32.xlu0 %v1654
        %v1656 = vpop.xlane.xlu0 %1655
        %v1657 = vrcp.pop 32.0
        %v1658 = vmul.f32 32.0, %v1657
        %v1659 = vsub.f32 1.0, %v1658
        %v1660 = vmul.f32 %v1657, %v1659
        %v1661 = vadd.f32 %v1657, %v1660
        %vm1662 = vweird.f32 %v1657
        %v1663 = vsel %vm1662, %v1657, %v1661
        %v1664 = vmul.f32 %v1656, %v1663
        %v1665 = vsub.f32 %v1651, %v1664
        %v1666 = vmul.f32 %v1665, %v1665
        %v1667 = vsel %vm774, %v1666, 0.0
        %1668 = vadd.xlane.f32.xlu0 %v1667
        %v1669 = vpop.xlane.xlu0 %1668
        %v1670 = vmul.f32 %v1669, %v1663
        %v1671 = vadd.f32 %v1670, 1e-05
        %v1672 = vrsqrt.pop %v1671
        %v1673 = vmul.f32 %v1672, %v1671
        %v1674 = vmul.f32 %v1673, %v1672
        %v1675 = vmul.f32 0.5, %v1674
        %v1676 = vsub.f32 1.5, %v1675
        %v1677 = vmul.f32 %v1672, %v1676
        %vm1678 = vweird.f32 %v1671
        %vm1679 = vweird.f32 %v1672
        %vm1680 = vmor %vm1678, %vm1679
        %v1681 = vsel %vm1680, %v1672, %v1677
        %v1682 = vmul.f32 %v1665, %v1681
        %v1684 = vperm.slane %v1652, 0
        %v1686 = vmul.f32 %v1682, %v1684
        %v1688 = vperm.slane %v1653, 0
        %v1690 = vadd.f32 %v1686, %v1688
        %1691 = vst.msk [vmem:[%s742] sm:$0xff] %vm774, %v1690
        %p1692 = scmp.lt.s32.totalorder %s39, 1
        %s1693 = scalar_select %p1692, %s39, 1
        %s1694 = smul.addr %s1693, 8
        %s1695 = scalar_lea.vmem %s19, %s1694
        %s1696 = sand.u32 %s497, 1
        %s1697 = scalar_lea.sflag [#allocation3], %s1696
        %s1698 = sand.u32 %s497, 1
        %s1699 = smul.addr %s1698, 8
        %s1700 = scalar_lea.vmem [#allocation2], %s1699
        %s1701 = sand.u32 %s523, 1
        %s1702 = scalar_lea.sflag [#allocation5], %s1701
        %s1703 = sand.u32 %s523, 1
        %s1704 = scalar_lea.vmem [#allocation4], %s1703
        // Predicated region
        $region97: #{q2v_decoder_layer.4} parent=95 // pred_check
          %p1705 = pneg %p481
        $region98: #{q2v_decoder_layer.4} parent=95 // pred_check_branch
          %1707 = sbr.rel (%p1705) target = $region100
        $region99: #{q2v_decoder_layer.4} parent=95 // pred_region
          _
        $region100: #{q2v_decoder_layer.4} parent=95 // pred_fallthru
          _
        // Predicated region
        $region101: #{q2v_decoder_layer.4} parent=95 // pred_check
          %p1708 = pneg %p507
        $region102: #{q2v_decoder_layer.4} parent=95 // pred_check_branch
          %1710 = sbr.rel (%p1708) target = $region104
        $region103: #{q2v_decoder_layer.4} parent=95 // pred_region
          %1712 = vsyncadd %s1697, 0
          %s1713 = smul.addr %s39, 8
          %s1714 = scalar_lea.hbm %s20, %s1713
          %s1716 = sshll.u32 %s1700, 4
          %s1717 = int_to_ptr.vmem [resolvable:$true] %s1716
          %s1718 = sshll.u32 %s1714, 4
          %s1719 = int_to_ptr.hbm [resolvable:$true] %s1718
          %1721 = dma.vmem_to_hbm [thread:$0]  %s1717, 128, %s1719, %s1697
        $region104: #{q2v_decoder_layer.4} parent=95 // pred_fallthru
          _
        // Predicated region
        $region105: #{q2v_decoder_layer.4} parent=95 // pred_check
          %p1722 = pneg %p533
        $region106: #{q2v_decoder_layer.4} parent=95 // pred_check_branch
          %1724 = sbr.rel (%p1722) target = $region108
        $region107: #{q2v_decoder_layer.4} parent=95 // pred_region
          %1726 = vsyncadd %s1702, 0
          %s1727 = scalar_lea.hbm %s21, %s39
          %s1729 = sshll.u32 %s1704, 4
          %s1730 = int_to_ptr.vmem [resolvable:$true] %s1729
          %s1731 = sshll.u32 %s1727, 4
          %s1732 = int_to_ptr.hbm [resolvable:$true] %s1731
          %1734 = dma.vmem_to_hbm [thread:$0]  %s1730, 16, %s1732, %s1702
        $region108: #{q2v_decoder_layer.4} parent=95 // pred_fallthru
          _
      $region96: #{q2v_decoder_layer.4} parent=5 // pred_fallthru
        _
      %p1735 = scmp.le.s32.totalorder 2, %s34
      // Predicated region
      $region109: #{q2v_decoder_layer.4} parent=5 // pred_check
        %p1736 = pneg %p1735
      $region110: #{q2v_decoder_layer.4} parent=5 // pred_check_branch
        %1738 = sbr.rel (%p1736) target = $region112
      $region111: #{q2v_decoder_layer.4} parent=5 // pred_region
        %s1739 = ssub.s32 %s34, 2
        // Predicated region
        $region113: #{q2v_decoder_layer.4} parent=111 // pred_check
          %p1740 = pneg %p487
        $region114: #{q2v_decoder_layer.4} parent=111 // pred_check_branch
          %1742 = sbr.rel (%p1740) target = $region116
        $region115: #{q2v_decoder_layer.4} parent=111 // pred_region
          %p1743 = scmp.lt.s32.totalorder %s40, 1
          %s1744 = scalar_select %p1743, %s40, 1
          %s1745 = smul.addr %s1744, 8
          %s1746 = scalar_lea.vmem %s19, %s1745
        $region116: #{q2v_decoder_layer.4} parent=111 // pred_fallthru
          _
        // Predicated region
        $region117: #{q2v_decoder_layer.4} parent=111 // pred_check
          %p1747 = pneg %p513
        $region118: #{q2v_decoder_layer.4} parent=111 // pred_check_branch
          %1749 = sbr.rel (%p1747) target = $region120
        $region119: #{q2v_decoder_layer.4} parent=111 // pred_region
          %s1750 = sand.u32 %s498, 1
          %s1751 = scalar_lea.sflag [#allocation3], %s1750
          %s1752 = sand.u32 %s498, 1
          %s1753 = smul.addr %s1752, 8
          %s1754 = scalar_lea.vmem [#allocation2], %s1753
          %1756 = dma.done %s1751, 128
        $region120: #{q2v_decoder_layer.4} parent=111 // pred_fallthru
          _
        // Predicated region
        $region121: #{q2v_decoder_layer.4} parent=111 // pred_check
          %p1757 = pneg %p539
        $region122: #{q2v_decoder_layer.4} parent=111 // pred_check_branch
          %1759 = sbr.rel (%p1757) target = $region124
        $region123: #{q2v_decoder_layer.4} parent=111 // pred_region
          %s1760 = sand.u32 %s524, 1
          %s1761 = scalar_lea.sflag [#allocation5], %s1760
          %s1762 = sand.u32 %s524, 1
          %s1763 = scalar_lea.vmem [#allocation4], %s1762
          %1765 = dma.done %s1761, 16
        $region124: #{q2v_decoder_layer.4} parent=111 // pred_fallthru
          _
      $region112: #{q2v_decoder_layer.4} parent=5 // pred_fallthru
        _
    $region6: #{q2v_decoder_layer.4} parent=1 // loop_footer
      %s38 = sadd.s32 1, %s34
    $region7: #{q2v_decoder_layer.4} parent=1 // loop_footer_branch
      %33 = sbr.rel target = $region3
    $region8: #{q2v_decoder_layer.4} parent=1 // loop_exit
      _
    %1766 = vsyncpa [#allocation3], 1
    %s1767 = scalar_lea.sflag [#allocation3], 1
    %1768 = vsyncpa %s1767, 1
    %1769 = vsyncpa [#allocation5], 1
    %s1770 = scalar_lea.sflag [#allocation5], 1
    %1771 = vsyncpa %s1770, 1

</llo_original>
